<compile_context>
chip_gen: v6e
topology: v6e:2x2x1
jax: 0.10.0
libtpu: 0.0.40
codegen_flags: <defaults>
</compile_context>

<pallas_src>
import functools

import jax
import jax.numpy as jnp
from jax.experimental import pallas as pl
from jax.experimental.pallas import tpu as pltpu


# ----------------------------- Pallas kernel --------------------------------

def npa_kernel(x_ref, m_ref, uemb_ref,
               wq_t_ref, bq_t_ref, wk_t_ref, bk_t_ref,
               w1_ref, b1_ref, w2_ref, b2_ref,
               wq_u_ref, bq_u_ref, wk_u_ref, bk_u_ref,
               r_ref, *, nh, nc, s):
    f32 = jnp.float32
    nt = nh + nc
    bblk = x_ref.shape[0]
    d = x_ref.shape[2]

    x = x_ref[...].astype(f32)               # (Bb, NT*S, D)   bf16 stream -> f32
    m = m_ref[...].reshape(bblk, nt, s)      # (Bb, NT, S)
    u_e = uemb_ref[...]                      # (Bb, Q)

    # ---- title pooler: personalized attention over the tokens of every title ----
    q_t = jnp.dot(u_e, wq_t_ref[...], preferred_element_type=f32) + bq_t_ref[...]   # (Bb, H)

    x2 = x.reshape(bblk * nt * s, d)                                                 # one big MXU matmul
    k2 = jnp.tanh(jnp.dot(x2, wk_t_ref[...], preferred_element_type=f32)
                  + bk_t_ref[...])                                                   # (Bb*NT*S, H)
    k4 = k2.reshape(bblk, nt, s, -1)                                                 # (Bb, NT, S, H)

    scores = jnp.sum(k4 * q_t[:, None, None, :], axis=-1)                            # (Bb, NT, S)
    scores = jnp.where(m > 0, scores, -1e30)
    scores = scores - jnp.max(scores, axis=-1, keepdims=True)
    w = jnp.exp(scores)
    w = w / jnp.sum(w, axis=-1, keepdims=True)                                       # masked softmax over S

    x4 = x.reshape(bblk, nt, s, d)
    pooled = jnp.sum(x4 * w[..., None], axis=2)                                      # (Bb, NT, D)

    # ---- news head: Linear -> ReLU -> Linear ----
    p2 = pooled.reshape(bblk * nt, d)
    t1 = jnp.maximum(
        jnp.dot(p2, w1_ref[...], preferred_element_type=f32) + b1_ref[...], 0.0)
    t2 = jnp.dot(t1, w2_ref[...], preferred_element_type=f32) + b2_ref[...]
    news = t2.reshape(bblk, nt, -1)                                                  # (Bb, NT, T)
    h_news = news[:, :nh, :]                                                         # (Bb, Nh, T)
    c_news = news[:, nh:, :]                                                         # (Bb, Nc, T)

    # ---- user encoder: personalized attention over the history news ----
    hvalid = jnp.sum(m[:, :nh, :], axis=-1) > 0                                      # (Bb, Nh) collaps_mask
    q_u = jnp.dot(u_e, wq_u_ref[...], preferred_element_type=f32) + bq_u_ref[...]    # (Bb, H)
    k_u = jnp.tanh(jnp.dot(h_news.reshape(bblk * nh, -1), wk_u_ref[...],
                           preferred_element_type=f32) + bk_u_ref[...])
    k_u = k_u.reshape(bblk, nh, -1)                                                  # (Bb, Nh, H)
    s_u = jnp.sum(k_u * q_u[:, None, :], axis=-1)                                    # (Bb, Nh)
    s_u = jnp.where(hvalid, s_u, -1e30)
    s_u = s_u - jnp.max(s_u, axis=-1, keepdims=True)
    w_u = jnp.exp(s_u)
    w_u = w_u / jnp.sum(w_u, axis=-1, keepdims=True)                                 # softmax over Nh
    u_vec = jnp.sum(h_news * w_u[..., None], axis=1)                                 # (Bb, T)

    # ---- rec_model: dot-product scorer ----
    # TODO(synk): rec_model is injected in the original module; the standard NPA
    # dot-product scorer is implemented here.
    r_ref[...] = jnp.sum(c_news * u_vec[:, None, :], axis=-1)                        # (Bb, Nc)


# ------------------------------ wrapper --------------------------------------

def npa_forward(h, hm, c, cm, uid, params, *, b_blk=128):
    B, Nh, S, D = h.shape
    Nc = c.shape[1]
    NT = Nh + Nc
    Q = params["user_table"].shape[1]
    H = params["wq_t"].shape[1]
    T = params["w1"].shape[1]

    # glue: embedding lookup (gather) stays in plain JAX
    user_emb = params["user_table"][uid[:, 0]].astype(jnp.float32)                   # (B, Q)

    # wrapper-side layout plumbing: concat history + candidates along the news
    # axis, flatten (news, seq) so the kernel sees a 2-D-friendly operand, and
    # stream the big feature tensor in bf16 (halves HBM traffic).
    x = jnp.concatenate([h, c], axis=1).reshape(B, NT * S, D).astype(jnp.bfloat16)
    m = jnp.concatenate([hm, cm], axis=1).reshape(B, NT * S).astype(jnp.float32)

    # batch blocking: b_blk must be a multiple of 8 (sublane constraint)
    b_blk = max(8, min(b_blk, ((B + 7) // 8) * 8))
    b_blk = (b_blk // 8) * 8
    Bp = ((B + b_blk - 1) // b_blk) * b_blk
    if Bp != B:
        pad = Bp - B
        x = jnp.pad(x, ((0, pad), (0, 0), (0, 0)))
        m = jnp.pad(m, ((0, pad), (0, 0)))
        user_emb = jnp.pad(user_emb, ((0, pad), (0, 0)))
    grid = (Bp // b_blk,)

    def w_spec(*shape):
        return pl.BlockSpec(shape, lambda b, _s=shape: tuple(0 for _ in _s))

    kernel = functools.partial(npa_kernel, nh=Nh, nc=Nc, s=S)

    out = pl.pallas_call(
        kernel,
        out_shape=jax.ShapeDtypeStruct((Bp, Nc), jnp.float32),
        grid_spec=pl.GridSpec(
            grid=grid,
            in_specs=[
                pl.BlockSpec((b_blk, NT * S, D), lambda b: (b, 0, 0)),
                pl.BlockSpec((b_blk, NT * S), lambda b: (b, 0)),
                pl.BlockSpec((b_blk, Q), lambda b: (b, 0)),
                # weights: full blocks, same for every grid step
                w_spec(Q, H), w_spec(1, H), w_spec(D, H), w_spec(1, H),
                w_spec(D, T), w_spec(1, T), w_spec(T, T), w_spec(1, T),
                w_spec(Q, H), w_spec(1, H), w_spec(T, H), w_spec(1, H),
            ],
            out_specs=pl.BlockSpec((b_blk, Nc), lambda b: (b, 0)),
        ),
        compiler_params=pltpu.CompilerParams(
            dimension_semantics=("parallel",),
            vmem_limit_bytes=48 * 1024 * 1024),
    )(x, m, user_emb,
      params["wq_t"], params["bq_t"], params["wk_t"], params["bk_t"],
      params["w1"], params["b1"], params["w2"], params["b2"],
      params["wq_u"], params["bq_u"], params["wk_u"], params["bk_u"])

    return out[:B]


# --------------------------- pure-JAX reference -------------------------------

def npa_reference(h, hm, c, cm, uid, params):
    user_emb = params["user_table"][uid[:, 0]]  # (B, Q)

    def per_batch(hb, hmb, cb, cmb, ue):
        q_t = ue @ params["wq_t"] + params["bq_t"][0]

        def pool(x, m):
            k = jnp.tanh(jnp.einsum("nsd,dh->nsh", x, params["wk_t"]) + params["bk_t"][0])
            s = jnp.einsum("nsh,h->ns", k, q_t)
            s = jnp.where(m > 0, s, -1e30)
            w = jax.nn.softmax(s, axis=-1)
            pooled = jnp.einsum("ns,nsd->nd", w, x)
            t1 = jax.nn.relu(pooled @ params["w1"] + params["b1"][0])
            return t1 @ params["w2"] + params["b2"][0]

        hn = pool(hb, hmb)
        cn = pool(cb, cmb)
        q_u = ue @ params["wq_u"] + params["bq_u"][0]
        k_u = jnp.tanh(hn @ params["wk_u"] + params["bk_u"][0])
        s_u = k_u @ q_u
        s_u = jnp.where(jnp.sum(hmb, axis=-1) > 0, s_u, -1e30)
        w_u = jax.nn.softmax(s_u)
        u = w_u @ hn
        return cn @ u

    return jax.vmap(per_batch)(h, hm, c, cm, user_emb)


# --------------------------------- main ---------------------------------------

if __name__ == "__main__":
    # small config consistent with the module
    B, Nh, Nc, S = 18, 4, 3, 8
    D = 32          # cfg.d_backbone
    Q = 16          # cfg.user_emb_dim
    H = 128         # hidden_features of PersonalizedAttention
    T = 32          # cfg.title_emb_dim
    n_users = 10

    key = jax.random.PRNGKey(0)
    ks = jax.random.split(key, 16)

    params = {
        "user_table": jax.random.normal(ks[0], (n_users + 1, Q), jnp.float32) * 0.1,
        "wq_t": jax.random.normal(ks[1], (Q, H), jnp.float32) * 0.1,
        "bq_t": jax.random.normal(ks[2], (1, H), jnp.float32) * 0.1,
        "wk_t": jax.random.normal(ks[3], (D, H), jnp.float32) * 0.1,
        "bk_t": jax.random.normal(ks[4], (1, H), jnp.float32) * 0.1,
        "w1":   jax.random.normal(ks[5], (D, T), jnp.float32) * 0.1,
        "b1":   jax.random.normal(ks[6], (1, T), jnp.float32) * 0.1,
        "w2":   jax.random.normal(ks[7], (T, T), jnp.float32) * 0.1,
        "b2":   jax.random.normal(ks[8], (1, T), jnp.float32) * 0.1,
        "wq_u": jax.random.normal(ks[9], (Q, H), jnp.float32) * 0.1,
        "bq_u": jax.random.normal(ks[10], (1, H), jnp.float32) * 0.1,
        "wk_u": jax.random.normal(ks[11], (T, H), jnp.float32) * 0.1,
        "bk_u": jax.random.normal(ks[12], (1, H), jnp.float32) * 0.1,
    }

    h = jax.random.normal(ks[13], (B, Nh, S, D), jnp.float32)
    c = jax.random.normal(ks[14], (B, Nc, S, D), jnp.float32)

    # masks: each title has a random valid length >= 1
    hlen = jax.random.randint(ks[15], (B, Nh), 1, S + 1)
    clen = jax.random.randint(jax.random.fold_in(key, 99), (B, Nc), 1, S + 1)
    pos = jnp.arange(S)
    hm = (pos[None, None, :] < hlen[:, :, None]).astype(jnp.float32)
    cm = (pos[None, None, :] < clen[:, :, None]).astype(jnp.float32)

    uid = jax.random.randint(jax.random.fold_in(key, 7), (B, 1), 0, n_users + 1)

    # b_blk=8 -> grid of 3 blocks (exercises both batch blocking and padding)
    out = npa_forward(h, hm, c, cm, uid, params, b_blk=8)
    out = jax.block_until_ready(out)

    ref = npa_reference(h, hm, c, cm, uid, params)
    assert out.shape == (B, Nc)
    assert not jnp.any(jnp.isnan(out))
    # inputs are streamed in bf16, so compare against the f32 reference at a
    # tolerance that covers bf16 input rounding.
    assert jnp.allclose(out, ref, atol=5e-2, rtol=5e-2), (out, ref)

    print("KERNEL_OK")
</pallas_src>

<mosaic_0001>
module attributes {stable_mosaic.version = 11 : i64} {
  func.func @npa_kernel(%arg0: i32, %arg1: memref<8x56x32xbf16, #tpu.memory_space<vmem>>, %arg2: memref<8x56xf32, #tpu.memory_space<vmem>>, %arg3: memref<8x16xf32, #tpu.memory_space<vmem>>, %arg4: memref<16x128xf32, #tpu.memory_space<vmem>>, %arg5: memref<1x128xf32, #tpu.memory_space<vmem>>, %arg6: memref<32x128xf32, #tpu.memory_space<vmem>>, %arg7: memref<1x128xf32, #tpu.memory_space<vmem>>, %arg8: memref<32x32xf32, #tpu.memory_space<vmem>>, %arg9: memref<1x32xf32, #tpu.memory_space<vmem>>, %arg10: memref<32x32xf32, #tpu.memory_space<vmem>>, %arg11: memref<1x32xf32, #tpu.memory_space<vmem>>, %arg12: memref<16x128xf32, #tpu.memory_space<vmem>>, %arg13: memref<1x128xf32, #tpu.memory_space<vmem>>, %arg14: memref<32x128xf32, #tpu.memory_space<vmem>>, %arg15: memref<1x128xf32, #tpu.memory_space<vmem>>, %arg16: memref<8x3xf32, #tpu.memory_space<vmem>>) attributes {dimension_semantics = [#tpu.dimension_semantics<parallel>], iteration_bounds = array<i64: 3>, scalar_prefetch = 0 : i64, scratch_operands = 0 : i64, tpu.core_type = #tpu.core_type<tc>, window_params = [{transform_indices = @transform_0, window_bounds = array<i64: 8, 56, 32>}, {transform_indices = @transform_1, window_bounds = array<i64: 8, 56>}, {transform_indices = @transform_2, window_bounds = array<i64: 8, 16>}, {pipeline_mode = #tpu.pipeline_mode<synchronous>, transform_indices = @transform_3, window_bounds = array<i64: 16, 128>}, {pipeline_mode = #tpu.pipeline_mode<synchronous>, transform_indices = @transform_4, window_bounds = array<i64: 1, 128>}, {pipeline_mode = #tpu.pipeline_mode<synchronous>, transform_indices = @transform_5, window_bounds = array<i64: 32, 128>}, {pipeline_mode = #tpu.pipeline_mode<synchronous>, transform_indices = @transform_6, window_bounds = array<i64: 1, 128>}, {pipeline_mode = #tpu.pipeline_mode<synchronous>, transform_indices = @transform_7, window_bounds = array<i64: 32, 32>}, {pipeline_mode = #tpu.pipeline_mode<synchronous>, transform_indices = @transform_8, window_bounds = array<i64: 1, 32>}, {pipeline_mode = #tpu.pipeline_mode<synchronous>, transform_indices = @transform_9, window_bounds = array<i64: 32, 32>}, {pipeline_mode = #tpu.pipeline_mode<synchronous>, transform_indices = @transform_10, window_bounds = array<i64: 1, 32>}, {pipeline_mode = #tpu.pipeline_mode<synchronous>, transform_indices = @transform_11, window_bounds = array<i64: 16, 128>}, {pipeline_mode = #tpu.pipeline_mode<synchronous>, transform_indices = @transform_12, window_bounds = array<i64: 1, 128>}, {pipeline_mode = #tpu.pipeline_mode<synchronous>, transform_indices = @transform_13, window_bounds = array<i64: 32, 128>}, {pipeline_mode = #tpu.pipeline_mode<synchronous>, transform_indices = @transform_14, window_bounds = array<i64: 1, 128>}, {transform_indices = @transform_15, window_bounds = array<i64: 8, 3>}]} {
    %c0 = arith.constant 0 : index
    %c0_0 = arith.constant 0 : index
    %c0_1 = arith.constant 0 : index
    %0 = vector.load %arg1[%c0, %c0_0, %c0_1] : memref<8x56x32xbf16, #tpu.memory_space<vmem>>, vector<8x56x32xbf16>
    %1 = arith.extf %0 : vector<8x56x32xbf16> to vector<8x56x32xf32>
    %c0_2 = arith.constant 0 : index
    %c0_3 = arith.constant 0 : index
    %2 = vector.load %arg2[%c0_2, %c0_3] : memref<8x56xf32, #tpu.memory_space<vmem>>, vector<8x56xf32>
    %3 = vector.shape_cast %2 : vector<8x56xf32> to vector<8x7x8xf32>
    %c0_4 = arith.constant 0 : index
    %c0_5 = arith.constant 0 : index
    %4 = vector.load %arg3[%c0_4, %c0_5] : memref<8x16xf32, #tpu.memory_space<vmem>>, vector<8x16xf32>
    %c0_6 = arith.constant 0 : index
    %c0_7 = arith.constant 0 : index
    %5 = vector.load %arg4[%c0_6, %c0_7] : memref<16x128xf32, #tpu.memory_space<vmem>>, vector<16x128xf32>
    %cst = arith.constant dense<0.000000e+00> : vector<8x128xf32>
    %6 = tpu.matmul %4, %5, %cst {dimension_numbers = #tpu.dot_dimension_numbers<[1], [0], [0], [1], [0, 0, 1, 1], [], []>} : vector<8x16xf32>, vector<16x128xf32>, vector<8x128xf32> -> vector<8x128xf32>
    %c0_8 = arith.constant 0 : index
    %c0_9 = arith.constant 0 : index
    %7 = vector.load %arg5[%c0_8, %c0_9] : memref<1x128xf32, #tpu.memory_space<vmem>>, vector<1x128xf32>
    %8 = vector.broadcast %7 : vector<1x128xf32> to vector<8x128xf32>
    %9 = arith.addf %6, %8 : vector<8x128xf32>
    %10 = vector.shape_cast %1 : vector<8x56x32xf32> to vector<448x32xf32>
    %c0_10 = arith.constant 0 : index
    %c0_11 = arith.constant 0 : index
    %11 = vector.load %arg6[%c0_10, %c0_11] : memref<32x128xf32, #tpu.memory_space<vmem>>, vector<32x128xf32>
    %cst_12 = arith.constant dense<0.000000e+00> : vector<448x128xf32>
    %12 = tpu.matmul %10, %11, %cst_12 {dimension_numbers = #tpu.dot_dimension_numbers<[1], [0], [0], [1], [0, 0, 1, 1], [], []>} : vector<448x32xf32>, vector<32x128xf32>, vector<448x128xf32> -> vector<448x128xf32>
    %c0_13 = arith.constant 0 : index
    %c0_14 = arith.constant 0 : index
    %13 = vector.load %arg7[%c0_13, %c0_14] : memref<1x128xf32, #tpu.memory_space<vmem>>, vector<1x128xf32>
    %14 = vector.broadcast %13 : vector<1x128xf32> to vector<448x128xf32>
    %15 = arith.addf %12, %14 : vector<448x128xf32>
    %16 = math.tanh %15 : vector<448x128xf32>
    %17 = vector.shape_cast %16 : vector<448x128xf32> to vector<8x7x8x128xf32>
    %18 = vector.shape_cast %9 : vector<8x128xf32> to vector<8x1x1x128xf32>
    %19 = vector.broadcast %18 : vector<8x1x1x128xf32> to vector<8x7x8x128xf32>
    %20 = arith.mulf %17, %19 : vector<8x7x8x128xf32>
    %cst_15 = arith.constant dense<0.000000e+00> : vector<8x7x8xf32>
    %21 = vector.multi_reduction <add>, %20, %cst_15 [3] : vector<8x7x8x128xf32> to vector<8x7x8xf32>
    %cst_16 = arith.constant 0.000000e+00 : f32
    %22 = vector.broadcast %cst_16 : f32 to vector<8x7x8xf32>
    %23 = arith.cmpf ogt, %3, %22 : vector<8x7x8xf32>
    %cst_17 = arith.constant -1.000000e+30 : f32
    %24 = vector.broadcast %cst_17 : f32 to vector<8x7x8xf32>
    %25 = arith.select %23, %21, %24 : vector<8x7x8xi1>, vector<8x7x8xf32>
    %cst_18 = arith.constant dense<0xFF800000> : vector<8x7xf32>
    %26 = vector.multi_reduction <maximumf>, %25, %cst_18 [2] : vector<8x7x8xf32> to vector<8x7xf32>
    %27 = vector.shape_cast %26 : vector<8x7xf32> to vector<8x7x1xf32>
    %28 = vector.broadcast %27 : vector<8x7x1xf32> to vector<8x7x8xf32>
    %29 = arith.subf %25, %28 : vector<8x7x8xf32>
    %30 = math.exp %29 : vector<8x7x8xf32>
    %cst_19 = arith.constant dense<0.000000e+00> : vector<8x7xf32>
    %31 = vector.multi_reduction <add>, %30, %cst_19 [2] : vector<8x7x8xf32> to vector<8x7xf32>
    %32 = vector.shape_cast %31 : vector<8x7xf32> to vector<8x7x1xf32>
    %33 = vector.broadcast %32 : vector<8x7x1xf32> to vector<8x7x8xf32>
    %34 = arith.divf %30, %33 : vector<8x7x8xf32>
    %35 = vector.shape_cast %1 : vector<8x56x32xf32> to vector<8x7x8x32xf32>
    %36 = vector.shape_cast %34 : vector<8x7x8xf32> to vector<8x7x8x1xf32>
    %37 = vector.broadcast %36 : vector<8x7x8x1xf32> to vector<8x7x8x32xf32>
    %38 = arith.mulf %35, %37 : vector<8x7x8x32xf32>
    %cst_20 = arith.constant dense<0.000000e+00> : vector<8x7x32xf32>
    %39 = vector.multi_reduction <add>, %38, %cst_20 [2] : vector<8x7x8x32xf32> to vector<8x7x32xf32>
    %40 = vector.shape_cast %39 : vector<8x7x32xf32> to vector<56x32xf32>
    %c0_21 = arith.constant 0 : index
    %c0_22 = arith.constant 0 : index
    %41 = vector.load %arg8[%c0_21, %c0_22] : memref<32x32xf32, #tpu.memory_space<vmem>>, vector<32x32xf32>
    %cst_23 = arith.constant dense<0.000000e+00> : vector<56x32xf32>
    %42 = tpu.matmul %40, %41, %cst_23 {dimension_numbers = #tpu.dot_dimension_numbers<[1], [0], [0], [1], [0, 0, 1, 1], [], []>} : vector<56x32xf32>, vector<32x32xf32>, vector<56x32xf32> -> vector<56x32xf32>
    %c0_24 = arith.constant 0 : index
    %c0_25 = arith.constant 0 : index
    %43 = vector.load %arg9[%c0_24, %c0_25] : memref<1x32xf32, #tpu.memory_space<vmem>>, vector<1x32xf32>
    %44 = vector.broadcast %43 : vector<1x32xf32> to vector<56x32xf32>
    %45 = arith.addf %42, %44 : vector<56x32xf32>
    %cst_26 = arith.constant 0.000000e+00 : f32
    %46 = vector.broadcast %cst_26 : f32 to vector<56x32xf32>
    %47 = arith.maximumf %45, %46 : vector<56x32xf32>
    %c0_27 = arith.constant 0 : index
    %c0_28 = arith.constant 0 : index
    %48 = vector.load %arg10[%c0_27, %c0_28] : memref<32x32xf32, #tpu.memory_space<vmem>>, vector<32x32xf32>
    %cst_29 = arith.constant dense<0.000000e+00> : vector<56x32xf32>
    %49 = tpu.matmul %47, %48, %cst_29 {dimension_numbers = #tpu.dot_dimension_numbers<[1], [0], [0], [1], [0, 0, 1, 1], [], []>} : vector<56x32xf32>, vector<32x32xf32>, vector<56x32xf32> -> vector<56x32xf32>
    %c0_30 = arith.constant 0 : index
    %c0_31 = arith.constant 0 : index
    %50 = vector.load %arg11[%c0_30, %c0_31] : memref<1x32xf32, #tpu.memory_space<vmem>>, vector<1x32xf32>
    %51 = vector.broadcast %50 : vector<1x32xf32> to vector<56x32xf32>
    %52 = arith.addf %49, %51 : vector<56x32xf32>
    %53 = vector.shape_cast %52 : vector<56x32xf32> to vector<8x7x32xf32>
    %54 = vector.extract_strided_slice %53 {offsets = [0, 0, 0], sizes = [8, 4, 32], strides = [1, 1, 1]} : vector<8x7x32xf32> to vector<8x4x32xf32>
    %55 = vector.extract_strided_slice %53 {offsets = [0, 4, 0], sizes = [8, 3, 32], strides = [1, 1, 1]} : vector<8x7x32xf32> to vector<8x3x32xf32>
    %56 = vector.extract_strided_slice %3 {offsets = [0, 0, 0], sizes = [8, 4, 8], strides = [1, 1, 1]} : vector<8x7x8xf32> to vector<8x4x8xf32>
    %cst_32 = arith.constant dense<0.000000e+00> : vector<8x4xf32>
    %57 = vector.multi_reduction <add>, %56, %cst_32 [2] : vector<8x4x8xf32> to vector<8x4xf32>
    %cst_33 = arith.constant 0.000000e+00 : f32
    %58 = vector.broadcast %cst_33 : f32 to vector<8x4xf32>
    %59 = arith.cmpf ogt, %57, %58 : vector<8x4xf32>
    %c0_34 = arith.constant 0 : index
    %c0_35 = arith.constant 0 : index
    %60 = vector.load %arg12[%c0_34, %c0_35] : memref<16x128xf32, #tpu.memory_space<vmem>>, vector<16x128xf32>
    %cst_36 = arith.constant dense<0.000000e+00> : vector<8x128xf32>
    %61 = tpu.matmul %4, %60, %cst_36 {dimension_numbers = #tpu.dot_dimension_numbers<[1], [0], [0], [1], [0, 0, 1, 1], [], []>} : vector<8x16xf32>, vector<16x128xf32>, vector<8x128xf32> -> vector<8x128xf32>
    %c0_37 = arith.constant 0 : index
    %c0_38 = arith.constant 0 : index
    %62 = vector.load %arg13[%c0_37, %c0_38] : memref<1x128xf32, #tpu.memory_space<vmem>>, vector<1x128xf32>
    %63 = vector.broadcast %62 : vector<1x128xf32> to vector<8x128xf32>
    %64 = arith.addf %61, %63 : vector<8x128xf32>
    %65 = vector.shape_cast %54 : vector<8x4x32xf32> to vector<32x32xf32>
    %c0_39 = arith.constant 0 : index
    %c0_40 = arith.constant 0 : index
    %66 = vector.load %arg14[%c0_39, %c0_40] : memref<32x128xf32, #tpu.memory_space<vmem>>, vector<32x128xf32>
    %cst_41 = arith.constant dense<0.000000e+00> : vector<32x128xf32>
    %67 = tpu.matmul %65, %66, %cst_41 {dimension_numbers = #tpu.dot_dimension_numbers<[1], [0], [0], [1], [0, 0, 1, 1], [], []>} : vector<32x32xf32>, vector<32x128xf32>, vector<32x128xf32> -> vector<32x128xf32>
    %c0_42 = arith.constant 0 : index
    %c0_43 = arith.constant 0 : index
    %68 = vector.load %arg15[%c0_42, %c0_43] : memref<1x128xf32, #tpu.memory_space<vmem>>, vector<1x128xf32>
    %69 = vector.broadcast %68 : vector<1x128xf32> to vector<32x128xf32>
    %70 = arith.addf %67, %69 : vector<32x128xf32>
    %71 = math.tanh %70 : vector<32x128xf32>
    %72 = vector.shape_cast %71 : vector<32x128xf32> to vector<8x4x128xf32>
    %73 = vector.shape_cast %64 : vector<8x128xf32> to vector<8x1x128xf32>
    %74 = vector.broadcast %73 : vector<8x1x128xf32> to vector<8x4x128xf32>
    %75 = arith.mulf %72, %74 : vector<8x4x128xf32>
    %cst_44 = arith.constant dense<0.000000e+00> : vector<8x4xf32>
    %76 = vector.multi_reduction <add>, %75, %cst_44 [2] : vector<8x4x128xf32> to vector<8x4xf32>
    %cst_45 = arith.constant -1.000000e+30 : f32
    %77 = vector.broadcast %cst_45 : f32 to vector<8x4xf32>
    %78 = arith.select %59, %76, %77 : vector<8x4xi1>, vector<8x4xf32>
    %cst_46 = arith.constant dense<0xFF800000> : vector<8xf32>
    %79 = vector.multi_reduction <maximumf>, %78, %cst_46 [1] : vector<8x4xf32> to vector<8xf32>
    %80 = vector.shape_cast %79 : vector<8xf32> to vector<8x1xf32>
    %81 = vector.broadcast %80 : vector<8x1xf32> to vector<8x4xf32>
    %82 = arith.subf %78, %81 : vector<8x4xf32>
    %83 = math.exp %82 : vector<8x4xf32>
    %cst_47 = arith.constant dense<0.000000e+00> : vector<8xf32>
    %84 = vector.multi_reduction <add>, %83, %cst_47 [1] : vector<8x4xf32> to vector<8xf32>
    %85 = vector.shape_cast %84 : vector<8xf32> to vector<8x1xf32>
    %86 = vector.broadcast %85 : vector<8x1xf32> to vector<8x4xf32>
    %87 = arith.divf %83, %86 : vector<8x4xf32>
    %88 = vector.shape_cast %87 : vector<8x4xf32> to vector<8x4x1xf32>
    %89 = vector.broadcast %88 : vector<8x4x1xf32> to vector<8x4x32xf32>
    %90 = arith.mulf %54, %89 : vector<8x4x32xf32>
    %cst_48 = arith.constant dense<0.000000e+00> : vector<8x32xf32>
    %91 = vector.multi_reduction <add>, %90, %cst_48 [1] : vector<8x4x32xf32> to vector<8x32xf32>
    %92 = vector.shape_cast %91 : vector<8x32xf32> to vector<8x1x32xf32>
    %93 = vector.broadcast %92 : vector<8x1x32xf32> to vector<8x3x32xf32>
    %94 = arith.mulf %55, %93 : vector<8x3x32xf32>
    %cst_49 = arith.constant dense<0.000000e+00> : vector<8x3xf32>
    %95 = vector.multi_reduction <add>, %94, %cst_49 [2] : vector<8x3x32xf32> to vector<8x3xf32>
    %c0_50 = arith.constant 0 : index
    %c0_51 = arith.constant 0 : index
    %96 = vector.load %arg16[%c0_50, %c0_51] : memref<8x3xf32, #tpu.memory_space<vmem>>, vector<8x3xf32>
    tpu.vector_store %arg16[%c0_50, %c0_51], %95 {strides = array<i32>} : memref<8x3xf32, #tpu.memory_space<vmem>>, vector<8x3xf32>,
    return
  }
  func.func @transform_0(%arg0: i32) -> (i32, i32, i32) {
    %c0_i32 = arith.constant 0 : i32
    %c0_i32_0 = arith.constant 0 : i32
    %c0_i32_1 = arith.constant 0 : i32
    return %arg0, %c0_i32, %c0_i32_0 : i32, i32, i32
  }
  func.func @transform_1(%arg0: i32) -> (i32, i32) {
    %c0_i32 = arith.constant 0 : i32
    %c0_i32_0 = arith.constant 0 : i32
    return %arg0, %c0_i32 : i32, i32
  }
  func.func @transform_2(%arg0: i32) -> (i32, i32) {
    %c0_i32 = arith.constant 0 : i32
    %c0_i32_0 = arith.constant 0 : i32
    return %arg0, %c0_i32 : i32, i32
  }
  func.func @transform_3(%arg0: i32) -> (i32, i32) {
    %c0_i32 = arith.constant 0 : i32
    %c0_i32_0 = arith.constant 0 : i32
    %c0_i32_1 = arith.constant 0 : i32
    return %c0_i32, %c0_i32_0 : i32, i32
  }
  func.func @transform_4(%arg0: i32) -> (i32, i32) {
    %c0_i32 = arith.constant 0 : i32
    %c0_i32_0 = arith.constant 0 : i32
    %c0_i32_1 = arith.constant 0 : i32
    return %c0_i32, %c0_i32_0 : i32, i32
  }
  func.func @transform_5(%arg0: i32) -> (i32, i32) {
    %c0_i32 = arith.constant 0 : i32
    %c0_i32_0 = arith.constant 0 : i32
    %c0_i32_1 = arith.constant 0 : i32
    return %c0_i32, %c0_i32_0 : i32, i32
  }
  func.func @transform_6(%arg0: i32) -> (i32, i32) {
    %c0_i32 = arith.constant 0 : i32
    %c0_i32_0 = arith.constant 0 : i32
    %c0_i32_1 = arith.constant 0 : i32
    return %c0_i32, %c0_i32_0 : i32, i32
  }
  func.func @transform_7(%arg0: i32) -> (i32, i32) {
    %c0_i32 = arith.constant 0 : i32
    %c0_i32_0 = arith.constant 0 : i32
    %c0_i32_1 = arith.constant 0 : i32
    return %c0_i32, %c0_i32_0 : i32, i32
  }
  func.func @transform_8(%arg0: i32) -> (i32, i32) {
    %c0_i32 = arith.constant 0 : i32
    %c0_i32_0 = arith.constant 0 : i32
    %c0_i32_1 = arith.constant 0 : i32
    return %c0_i32, %c0_i32_0 : i32, i32
  }
  func.func @transform_9(%arg0: i32) -> (i32, i32) {
    %c0_i32 = arith.constant 0 : i32
    %c0_i32_0 = arith.constant 0 : i32
    %c0_i32_1 = arith.constant 0 : i32
    return %c0_i32, %c0_i32_0 : i32, i32
  }
  func.func @transform_10(%arg0: i32) -> (i32, i32) {
    %c0_i32 = arith.constant 0 : i32
    %c0_i32_0 = arith.constant 0 : i32
    %c0_i32_1 = arith.constant 0 : i32
    return %c0_i32, %c0_i32_0 : i32, i32
  }
  func.func @transform_11(%arg0: i32) -> (i32, i32) {
    %c0_i32 = arith.constant 0 : i32
    %c0_i32_0 = arith.constant 0 : i32
    %c0_i32_1 = arith.constant 0 : i32
    return %c0_i32, %c0_i32_0 : i32, i32
  }
  func.func @transform_12(%arg0: i32) -> (i32, i32) {
    %c0_i32 = arith.constant 0 : i32
    %c0_i32_0 = arith.constant 0 : i32
    %c0_i32_1 = arith.constant 0 : i32
    return %c0_i32, %c0_i32_0 : i32, i32
  }
  func.func @transform_13(%arg0: i32) -> (i32, i32) {
    %c0_i32 = arith.constant 0 : i32
    %c0_i32_0 = arith.constant 0 : i32
    %c0_i32_1 = arith.constant 0 : i32
    return %c0_i32, %c0_i32_0 : i32, i32
  }
  func.func @transform_14(%arg0: i32) -> (i32, i32) {
    %c0_i32 = arith.constant 0 : i32
    %c0_i32_0 = arith.constant 0 : i32
    %c0_i32_1 = arith.constant 0 : i32
    return %c0_i32, %c0_i32_0 : i32, i32
  }
  func.func @transform_15(%arg0: i32) -> (i32, i32) {
    %c0_i32 = arith.constant 0 : i32
    %c0_i32_0 = arith.constant 0 : i32
    return %arg0, %c0_i32 : i32, i32
  }
}

</mosaic_0001>

<llo_original>
// kernel: tpu_custom_call.1
$region0: #{tpu_custom_call.1}
  #allocation0 [shape = 'u32[]', space=smem, size = 0x4, offset = 0x4, fixed_abs, tag = 'smem constant byte address 0x4 - core index']
  #allocation1 [shape = 'u32[144,128]{1,0:T(1,128)}', space=vmem, size = 0x12000, scoped, tag = 'internal scratch']
  %s0 = inlined_call_operand.vmem [shape: bf16[24,56,32], index: 0, kind: input, shape index: {}]
  %s1 = inlined_call_operand.vmem [shape: f32[24,56], index: 1, kind: input, shape index: {}]
  %s2 = inlined_call_operand.vmem [shape: f32[24,16], index: 2, kind: input, shape index: {}]
  %s3 = inlined_call_operand.vmem [shape: f32[16,128], index: 3, kind: input, shape index: {}]
  %s4 = inlined_call_operand.vmem [shape: f32[1,128], index: 4, kind: input, shape index: {}]
  %s5 = inlined_call_operand.vmem [shape: f32[32,128], index: 5, kind: input, shape index: {}]
  %s6 = inlined_call_operand.vmem [shape: f32[1,128], index: 6, kind: input, shape index: {}]
  %s7 = inlined_call_operand.vmem [shape: f32[32,32], index: 7, kind: input, shape index: {}]
  %s8 = inlined_call_operand.vmem [shape: f32[1,32], index: 8, kind: input, shape index: {}]
  %s9 = inlined_call_operand.vmem [shape: f32[32,32], index: 9, kind: input, shape index: {}]
  %s10 = inlined_call_operand.vmem [shape: f32[1,32], index: 10, kind: input, shape index: {}]
  %s11 = inlined_call_operand.vmem [shape: f32[16,128], index: 11, kind: input, shape index: {}]
  %s12 = inlined_call_operand.vmem [shape: f32[1,128], index: 12, kind: input, shape index: {}]
  %s13 = inlined_call_operand.vmem [shape: f32[32,128], index: 13, kind: input, shape index: {}]
  %s14 = inlined_call_operand.vmem [shape: f32[1,128], index: 14, kind: input, shape index: {}]
  %s15 = inlined_call_operand.vmem [shape: f32[24,3], index: 15, kind: output, shape index: {}]
  %s16 = sld [smem:[#allocation0]]
  $region93: #{tpu_custom_call.1} parent=0
    _
  %s18 = ssub.s32 1, %s16
  %s19 = scalar_select 0, %s18, %s16
  loop: start=0, step=1, limit=5
  $region2: #{tpu_custom_call.1} parent=0 // loop_pre_header
    _
  $region3: #{tpu_custom_call.1} parent=0 // loop_header
    %s21 = sphi 0, %s25
    %p22 = scmp.ge.s32.totalorder %s21, 5
    %s31 = sphi 0, %s33
    %s34 = sphi 0, %s31
    %s35 = sphi 0, %s34
    %s51 = sphi 0, %s35
    %s57 = sphi 0, %s59
    %s60 = sphi 0, %s57
    %s61 = sphi 0, %s60
    %s77 = sphi 0, %s61
    %s83 = sphi 0, %s85
    %s86 = sphi 0, %s83
    %s87 = sphi 0, %s86
    %s103 = sphi 0, %s87
    %s107 = sphi 0, %s107
    %s109 = sphi 0, %s107
    %s110 = sphi 0, %s109
    %s124 = sphi 0, %s110
    %s128 = sphi 0, %s128
    %s130 = sphi 0, %s128
    %s131 = sphi 0, %s130
    %s145 = sphi 0, %s131
    %s149 = sphi 0, %s149
    %s151 = sphi 0, %s149
    %s152 = sphi 0, %s151
    %s166 = sphi 0, %s152
    %s170 = sphi 0, %s170
    %s172 = sphi 0, %s170
    %s173 = sphi 0, %s172
    %s187 = sphi 0, %s173
    %s191 = sphi 0, %s191
    %s193 = sphi 0, %s191
    %s194 = sphi 0, %s193
    %s208 = sphi 0, %s194
    %s212 = sphi 0, %s212
    %s214 = sphi 0, %s212
    %s215 = sphi 0, %s214
    %s229 = sphi 0, %s215
    %s233 = sphi 0, %s233
    %s235 = sphi 0, %s233
    %s236 = sphi 0, %s235
    %s250 = sphi 0, %s236
    %s254 = sphi 0, %s254
    %s256 = sphi 0, %s254
    %s257 = sphi 0, %s256
    %s271 = sphi 0, %s257
    %s275 = sphi 0, %s275
    %s277 = sphi 0, %s275
    %s278 = sphi 0, %s277
    %s292 = sphi 0, %s278
    %s296 = sphi 0, %s296
    %s298 = sphi 0, %s296
    %s299 = sphi 0, %s298
    %s313 = sphi 0, %s299
    %s317 = sphi 0, %s317
    %s319 = sphi 0, %s317
    %s320 = sphi 0, %s319
    %s334 = sphi 0, %s320
    %s338 = sphi 0, %s338
    %s340 = sphi 0, %s338
    %s341 = sphi 0, %s340
    %s355 = sphi 0, %s341
    %s361 = sphi 0, %s363
    %s364 = sphi 0, %s361
    %s365 = sphi 0, %s364
    %s381 = sphi 0, %s365
  $region4: #{tpu_custom_call.1} parent=0 // loop_header_branch
    %24 = sbr.rel (%p22) target = $region8
  $region5: #{tpu_custom_call.1} parent=0 // loop_body
    %s26 = ssub.s32 %s21, 1
    %s27 = ssub.s32 %s21, 2
    %s28 = sadd.s32 %s21, 1
    %s29 = ssub.s32 %s21, %s28
    %p30 = scmp.eq.s32.totalorder %s29, 0
    %s32 = sadd.s32 %s31, 1
    %s33 = scalar_select %p30, %s31, %s32
    %p36 = pneg %p30
    %p37 = scmp.eq.s32.totalorder %s21, 2
    %p38 = por %p36, %p37
    %p39 = scmp.ne.s32.totalorder %s31, %s34
    %p40 = scmp.eq.s32.totalorder %s21, 0
    %p41 = por %p39, %p40
    %p42 = scmp.ne.s32.totalorder %s31, %s34
    %p43 = scmp.eq.s32.totalorder %s26, 2
    %p44 = por %p42, %p43
    %p45 = scmp.ne.s32.totalorder %s34, %s35
    %p46 = scmp.eq.s32.totalorder %s26, 0
    %p47 = por %p45, %p46
    %p48 = scmp.ne.s32.totalorder %s34, %s35
    %p49 = scmp.eq.s32.totalorder %s27, 2
    %p50 = por %p48, %p49
    %p52 = scmp.ne.s32.totalorder %s35, %s51
    %p53 = scmp.eq.s32.totalorder %s27, 0
    %p54 = por %p52, %p53
    %s55 = ssub.s32 %s21, %s28
    %p56 = scmp.eq.s32.totalorder %s55, 0
    %s58 = sadd.s32 %s57, 1
    %s59 = scalar_select %p56, %s57, %s58
    %p62 = pneg %p56
    %p63 = scmp.eq.s32.totalorder %s21, 2
    %p64 = por %p62, %p63
    %p65 = scmp.ne.s32.totalorder %s57, %s60
    %p66 = scmp.eq.s32.totalorder %s21, 0
    %p67 = por %p65, %p66
    %p68 = scmp.ne.s32.totalorder %s57, %s60
    %p69 = scmp.eq.s32.totalorder %s26, 2
    %p70 = por %p68, %p69
    %p71 = scmp.ne.s32.totalorder %s60, %s61
    %p72 = scmp.eq.s32.totalorder %s26, 0
    %p73 = por %p71, %p72
    %p74 = scmp.ne.s32.totalorder %s60, %s61
    %p75 = scmp.eq.s32.totalorder %s27, 2
    %p76 = por %p74, %p75
    %p78 = scmp.ne.s32.totalorder %s61, %s77
    %p79 = scmp.eq.s32.totalorder %s27, 0
    %p80 = por %p78, %p79
    %s81 = ssub.s32 %s21, %s28
    %p82 = scmp.eq.s32.totalorder %s81, 0
    %s84 = sadd.s32 %s83, 1
    %s85 = scalar_select %p82, %s83, %s84
    %p88 = pneg %p82
    %p89 = scmp.eq.s32.totalorder %s21, 2
    %p90 = por %p88, %p89
    %p91 = scmp.ne.s32.totalorder %s83, %s86
    %p92 = scmp.eq.s32.totalorder %s21, 0
    %p93 = por %p91, %p92
    %p94 = scmp.ne.s32.totalorder %s83, %s86
    %p95 = scmp.eq.s32.totalorder %s26, 2
    %p96 = por %p94, %p95
    %p97 = scmp.ne.s32.totalorder %s86, %s87
    %p98 = scmp.eq.s32.totalorder %s26, 0
    %p99 = por %p97, %p98
    %p100 = scmp.ne.s32.totalorder %s86, %s87
    %p101 = scmp.eq.s32.totalorder %s27, 2
    %p102 = por %p100, %p101
    %p104 = scmp.ne.s32.totalorder %s87, %s103
    %p105 = scmp.eq.s32.totalorder %s27, 0
    %p106 = por %p104, %p105
    %s108 = sadd.s32 %s107, 1
    %p111 = scmp.eq.s32.totalorder %s21, 2
    %p112 = scmp.ne.s32.totalorder %s107, %s109
    %p113 = scmp.eq.s32.totalorder %s21, 0
    %p114 = por %p112, %p113
    %p115 = scmp.ne.s32.totalorder %s107, %s109
    %p116 = scmp.eq.s32.totalorder %s26, 2
    %p117 = por %p115, %p116
    %p118 = scmp.ne.s32.totalorder %s109, %s110
    %p119 = scmp.eq.s32.totalorder %s26, 0
    %p120 = por %p118, %p119
    %p121 = scmp.ne.s32.totalorder %s109, %s110
    %p122 = scmp.eq.s32.totalorder %s27, 2
    %p123 = por %p121, %p122
    %p125 = scmp.ne.s32.totalorder %s110, %s124
    %p126 = scmp.eq.s32.totalorder %s27, 0
    %p127 = por %p125, %p126
    %s129 = sadd.s32 %s128, 1
    %p132 = scmp.eq.s32.totalorder %s21, 2
    %p133 = scmp.ne.s32.totalorder %s128, %s130
    %p134 = scmp.eq.s32.totalorder %s21, 0
    %p135 = por %p133, %p134
    %p136 = scmp.ne.s32.totalorder %s128, %s130
    %p137 = scmp.eq.s32.totalorder %s26, 2
    %p138 = por %p136, %p137
    %p139 = scmp.ne.s32.totalorder %s130, %s131
    %p140 = scmp.eq.s32.totalorder %s26, 0
    %p141 = por %p139, %p140
    %p142 = scmp.ne.s32.totalorder %s130, %s131
    %p143 = scmp.eq.s32.totalorder %s27, 2
    %p144 = por %p142, %p143
    %p146 = scmp.ne.s32.totalorder %s131, %s145
    %p147 = scmp.eq.s32.totalorder %s27, 0
    %p148 = por %p146, %p147
    %s150 = sadd.s32 %s149, 1
    %p153 = scmp.eq.s32.totalorder %s21, 2
    %p154 = scmp.ne.s32.totalorder %s149, %s151
    %p155 = scmp.eq.s32.totalorder %s21, 0
    %p156 = por %p154, %p155
    %p157 = scmp.ne.s32.totalorder %s149, %s151
    %p158 = scmp.eq.s32.totalorder %s26, 2
    %p159 = por %p157, %p158
    %p160 = scmp.ne.s32.totalorder %s151, %s152
    %p161 = scmp.eq.s32.totalorder %s26, 0
    %p162 = por %p160, %p161
    %p163 = scmp.ne.s32.totalorder %s151, %s152
    %p164 = scmp.eq.s32.totalorder %s27, 2
    %p165 = por %p163, %p164
    %p167 = scmp.ne.s32.totalorder %s152, %s166
    %p168 = scmp.eq.s32.totalorder %s27, 0
    %p169 = por %p167, %p168
    %s171 = sadd.s32 %s170, 1
    %p174 = scmp.eq.s32.totalorder %s21, 2
    %p175 = scmp.ne.s32.totalorder %s170, %s172
    %p176 = scmp.eq.s32.totalorder %s21, 0
    %p177 = por %p175, %p176
    %p178 = scmp.ne.s32.totalorder %s170, %s172
    %p179 = scmp.eq.s32.totalorder %s26, 2
    %p180 = por %p178, %p179
    %p181 = scmp.ne.s32.totalorder %s172, %s173
    %p182 = scmp.eq.s32.totalorder %s26, 0
    %p183 = por %p181, %p182
    %p184 = scmp.ne.s32.totalorder %s172, %s173
    %p185 = scmp.eq.s32.totalorder %s27, 2
    %p186 = por %p184, %p185
    %p188 = scmp.ne.s32.totalorder %s173, %s187
    %p189 = scmp.eq.s32.totalorder %s27, 0
    %p190 = por %p188, %p189
    %s192 = sadd.s32 %s191, 1
    %p195 = scmp.eq.s32.totalorder %s21, 2
    %p196 = scmp.ne.s32.totalorder %s191, %s193
    %p197 = scmp.eq.s32.totalorder %s21, 0
    %p198 = por %p196, %p197
    %p199 = scmp.ne.s32.totalorder %s191, %s193
    %p200 = scmp.eq.s32.totalorder %s26, 2
    %p201 = por %p199, %p200
    %p202 = scmp.ne.s32.totalorder %s193, %s194
    %p203 = scmp.eq.s32.totalorder %s26, 0
    %p204 = por %p202, %p203
    %p205 = scmp.ne.s32.totalorder %s193, %s194
    %p206 = scmp.eq.s32.totalorder %s27, 2
    %p207 = por %p205, %p206
    %p209 = scmp.ne.s32.totalorder %s194, %s208
    %p210 = scmp.eq.s32.totalorder %s27, 0
    %p211 = por %p209, %p210
    %s213 = sadd.s32 %s212, 1
    %p216 = scmp.eq.s32.totalorder %s21, 2
    %p217 = scmp.ne.s32.totalorder %s212, %s214
    %p218 = scmp.eq.s32.totalorder %s21, 0
    %p219 = por %p217, %p218
    %p220 = scmp.ne.s32.totalorder %s212, %s214
    %p221 = scmp.eq.s32.totalorder %s26, 2
    %p222 = por %p220, %p221
    %p223 = scmp.ne.s32.totalorder %s214, %s215
    %p224 = scmp.eq.s32.totalorder %s26, 0
    %p225 = por %p223, %p224
    %p226 = scmp.ne.s32.totalorder %s214, %s215
    %p227 = scmp.eq.s32.totalorder %s27, 2
    %p228 = por %p226, %p227
    %p230 = scmp.ne.s32.totalorder %s215, %s229
    %p231 = scmp.eq.s32.totalorder %s27, 0
    %p232 = por %p230, %p231
    %s234 = sadd.s32 %s233, 1
    %p237 = scmp.eq.s32.totalorder %s21, 2
    %p238 = scmp.ne.s32.totalorder %s233, %s235
    %p239 = scmp.eq.s32.totalorder %s21, 0
    %p240 = por %p238, %p239
    %p241 = scmp.ne.s32.totalorder %s233, %s235
    %p242 = scmp.eq.s32.totalorder %s26, 2
    %p243 = por %p241, %p242
    %p244 = scmp.ne.s32.totalorder %s235, %s236
    %p245 = scmp.eq.s32.totalorder %s26, 0
    %p246 = por %p244, %p245
    %p247 = scmp.ne.s32.totalorder %s235, %s236
    %p248 = scmp.eq.s32.totalorder %s27, 2
    %p249 = por %p247, %p248
    %p251 = scmp.ne.s32.totalorder %s236, %s250
    %p252 = scmp.eq.s32.totalorder %s27, 0
    %p253 = por %p251, %p252
    %s255 = sadd.s32 %s254, 1
    %p258 = scmp.eq.s32.totalorder %s21, 2
    %p259 = scmp.ne.s32.totalorder %s254, %s256
    %p260 = scmp.eq.s32.totalorder %s21, 0
    %p261 = por %p259, %p260
    %p262 = scmp.ne.s32.totalorder %s254, %s256
    %p263 = scmp.eq.s32.totalorder %s26, 2
    %p264 = por %p262, %p263
    %p265 = scmp.ne.s32.totalorder %s256, %s257
    %p266 = scmp.eq.s32.totalorder %s26, 0
    %p267 = por %p265, %p266
    %p268 = scmp.ne.s32.totalorder %s256, %s257
    %p269 = scmp.eq.s32.totalorder %s27, 2
    %p270 = por %p268, %p269
    %p272 = scmp.ne.s32.totalorder %s257, %s271
    %p273 = scmp.eq.s32.totalorder %s27, 0
    %p274 = por %p272, %p273
    %s276 = sadd.s32 %s275, 1
    %p279 = scmp.eq.s32.totalorder %s21, 2
    %p280 = scmp.ne.s32.totalorder %s275, %s277
    %p281 = scmp.eq.s32.totalorder %s21, 0
    %p282 = por %p280, %p281
    %p283 = scmp.ne.s32.totalorder %s275, %s277
    %p284 = scmp.eq.s32.totalorder %s26, 2
    %p285 = por %p283, %p284
    %p286 = scmp.ne.s32.totalorder %s277, %s278
    %p287 = scmp.eq.s32.totalorder %s26, 0
    %p288 = por %p286, %p287
    %p289 = scmp.ne.s32.totalorder %s277, %s278
    %p290 = scmp.eq.s32.totalorder %s27, 2
    %p291 = por %p289, %p290
    %p293 = scmp.ne.s32.totalorder %s278, %s292
    %p294 = scmp.eq.s32.totalorder %s27, 0
    %p295 = por %p293, %p294
    %s297 = sadd.s32 %s296, 1
    %p300 = scmp.eq.s32.totalorder %s21, 2
    %p301 = scmp.ne.s32.totalorder %s296, %s298
    %p302 = scmp.eq.s32.totalorder %s21, 0
    %p303 = por %p301, %p302
    %p304 = scmp.ne.s32.totalorder %s296, %s298
    %p305 = scmp.eq.s32.totalorder %s26, 2
    %p306 = por %p304, %p305
    %p307 = scmp.ne.s32.totalorder %s298, %s299
    %p308 = scmp.eq.s32.totalorder %s26, 0
    %p309 = por %p307, %p308
    %p310 = scmp.ne.s32.totalorder %s298, %s299
    %p311 = scmp.eq.s32.totalorder %s27, 2
    %p312 = por %p310, %p311
    %p314 = scmp.ne.s32.totalorder %s299, %s313
    %p315 = scmp.eq.s32.totalorder %s27, 0
    %p316 = por %p314, %p315
    %s318 = sadd.s32 %s317, 1
    %p321 = scmp.eq.s32.totalorder %s21, 2
    %p322 = scmp.ne.s32.totalorder %s317, %s319
    %p323 = scmp.eq.s32.totalorder %s21, 0
    %p324 = por %p322, %p323
    %p325 = scmp.ne.s32.totalorder %s317, %s319
    %p326 = scmp.eq.s32.totalorder %s26, 2
    %p327 = por %p325, %p326
    %p328 = scmp.ne.s32.totalorder %s319, %s320
    %p329 = scmp.eq.s32.totalorder %s26, 0
    %p330 = por %p328, %p329
    %p331 = scmp.ne.s32.totalorder %s319, %s320
    %p332 = scmp.eq.s32.totalorder %s27, 2
    %p333 = por %p331, %p332
    %p335 = scmp.ne.s32.totalorder %s320, %s334
    %p336 = scmp.eq.s32.totalorder %s27, 0
    %p337 = por %p335, %p336
    %s339 = sadd.s32 %s338, 1
    %p342 = scmp.eq.s32.totalorder %s21, 2
    %p343 = scmp.ne.s32.totalorder %s338, %s340
    %p344 = scmp.eq.s32.totalorder %s21, 0
    %p345 = por %p343, %p344
    %p346 = scmp.ne.s32.totalorder %s338, %s340
    %p347 = scmp.eq.s32.totalorder %s26, 2
    %p348 = por %p346, %p347
    %p349 = scmp.ne.s32.totalorder %s340, %s341
    %p350 = scmp.eq.s32.totalorder %s26, 0
    %p351 = por %p349, %p350
    %p352 = scmp.ne.s32.totalorder %s340, %s341
    %p353 = scmp.eq.s32.totalorder %s27, 2
    %p354 = por %p352, %p353
    %p356 = scmp.ne.s32.totalorder %s341, %s355
    %p357 = scmp.eq.s32.totalorder %s27, 0
    %p358 = por %p356, %p357
    %s359 = ssub.s32 %s21, %s28
    %p360 = scmp.eq.s32.totalorder %s359, 0
    %s362 = sadd.s32 %s361, 1
    %s363 = scalar_select %p360, %s361, %s362
    %p366 = pneg %p360
    %p367 = scmp.eq.s32.totalorder %s21, 2
    %p368 = por %p366, %p367
    %p369 = scmp.ne.s32.totalorder %s361, %s364
    %p370 = scmp.eq.s32.totalorder %s21, 0
    %p371 = por %p369, %p370
    %p372 = scmp.ne.s32.totalorder %s361, %s364
    %p373 = scmp.eq.s32.totalorder %s26, 2
    %p374 = por %p372, %p373
    %p375 = scmp.ne.s32.totalorder %s364, %s365
    %p376 = scmp.eq.s32.totalorder %s26, 0
    %p377 = por %p375, %p376
    %p378 = scmp.ne.s32.totalorder %s364, %s365
    %p379 = scmp.eq.s32.totalorder %s27, 2
    %p380 = por %p378, %p379
    %p382 = scmp.ne.s32.totalorder %s365, %s381
    %p383 = scmp.eq.s32.totalorder %s27, 0
    %p384 = por %p382, %p383
    %p385 = scmp.le.s32.totalorder 1, %s21
    %p386 = scmp.lt.s32.totalorder %s21, 4
    %p387 = pnand %p385, %p386
    %p388 = pneg %p387
    // Predicated region
    $region9: #{tpu_custom_call.1} parent=5 // pred_check
      _
    $region10: #{tpu_custom_call.1} parent=5 // pred_check_branch
      %390 = sbr.rel (%p387) target = $region12
    $region11: #{tpu_custom_call.1} parent=5 // pred_region
      %s391 = ssub.s32 %s21, 1
      // Predicated region
      $region13: #{tpu_custom_call.1} parent=11 // pred_check
        %p392 = pneg %p120
      $region14: #{tpu_custom_call.1} parent=11 // pred_check_branch
        %394 = sbr.rel (%p392) target = $region16
      $region15: #{tpu_custom_call.1} parent=11 // pred_region
        _
      $region16: #{tpu_custom_call.1} parent=11 // pred_fallthru
        _
      // Predicated region
      $region17: #{tpu_custom_call.1} parent=11 // pred_check
        %p395 = pneg %p141
      $region18: #{tpu_custom_call.1} parent=11 // pred_check_branch
        %397 = sbr.rel (%p395) target = $region20
      $region19: #{tpu_custom_call.1} parent=11 // pred_region
        _
      $region20: #{tpu_custom_call.1} parent=11 // pred_fallthru
        _
      // Predicated region
      $region21: #{tpu_custom_call.1} parent=11 // pred_check
        %p398 = pneg %p162
      $region22: #{tpu_custom_call.1} parent=11 // pred_check_branch
        %400 = sbr.rel (%p398) target = $region24
      $region23: #{tpu_custom_call.1} parent=11 // pred_region
        _
      $region24: #{tpu_custom_call.1} parent=11 // pred_fallthru
        _
      // Predicated region
      $region25: #{tpu_custom_call.1} parent=11 // pred_check
        %p401 = pneg %p183
      $region26: #{tpu_custom_call.1} parent=11 // pred_check_branch
        %403 = sbr.rel (%p401) target = $region28
      $region27: #{tpu_custom_call.1} parent=11 // pred_region
        _
      $region28: #{tpu_custom_call.1} parent=11 // pred_fallthru
        _
      // Predicated region
      $region29: #{tpu_custom_call.1} parent=11 // pred_check
        %p404 = pneg %p204
      $region30: #{tpu_custom_call.1} parent=11 // pred_check_branch
        %406 = sbr.rel (%p404) target = $region32
      $region31: #{tpu_custom_call.1} parent=11 // pred_region
        _
      $region32: #{tpu_custom_call.1} parent=11 // pred_fallthru
        _
      // Predicated region
      $region33: #{tpu_custom_call.1} parent=11 // pred_check
        %p407 = pneg %p225
      $region34: #{tpu_custom_call.1} parent=11 // pred_check_branch
        %409 = sbr.rel (%p407) target = $region36
      $region35: #{tpu_custom_call.1} parent=11 // pred_region
        _
      $region36: #{tpu_custom_call.1} parent=11 // pred_fallthru
        _
      // Predicated region
      $region37: #{tpu_custom_call.1} parent=11 // pred_check
        %p410 = pneg %p246
      $region38: #{tpu_custom_call.1} parent=11 // pred_check_branch
        %412 = sbr.rel (%p410) target = $region40
      $region39: #{tpu_custom_call.1} parent=11 // pred_region
        _
      $region40: #{tpu_custom_call.1} parent=11 // pred_fallthru
        _
      // Predicated region
      $region41: #{tpu_custom_call.1} parent=11 // pred_check
        %p413 = pneg %p267
      $region42: #{tpu_custom_call.1} parent=11 // pred_check_branch
        %415 = sbr.rel (%p413) target = $region44
      $region43: #{tpu_custom_call.1} parent=11 // pred_region
        _
      $region44: #{tpu_custom_call.1} parent=11 // pred_fallthru
        _
      // Predicated region
      $region45: #{tpu_custom_call.1} parent=11 // pred_check
        %p416 = pneg %p288
      $region46: #{tpu_custom_call.1} parent=11 // pred_check_branch
        %418 = sbr.rel (%p416) target = $region48
      $region47: #{tpu_custom_call.1} parent=11 // pred_region
        _
      $region48: #{tpu_custom_call.1} parent=11 // pred_fallthru
        _
      // Predicated region
      $region49: #{tpu_custom_call.1} parent=11 // pred_check
        %p419 = pneg %p309
      $region50: #{tpu_custom_call.1} parent=11 // pred_check_branch
        %421 = sbr.rel (%p419) target = $region52
      $region51: #{tpu_custom_call.1} parent=11 // pred_region
        _
      $region52: #{tpu_custom_call.1} parent=11 // pred_fallthru
        _
      // Predicated region
      $region53: #{tpu_custom_call.1} parent=11 // pred_check
        %p422 = pneg %p330
      $region54: #{tpu_custom_call.1} parent=11 // pred_check_branch
        %424 = sbr.rel (%p422) target = $region56
      $region55: #{tpu_custom_call.1} parent=11 // pred_region
        _
      $region56: #{tpu_custom_call.1} parent=11 // pred_fallthru
        _
      // Predicated region
      $region57: #{tpu_custom_call.1} parent=11 // pred_check
        %p425 = pneg %p351
      $region58: #{tpu_custom_call.1} parent=11 // pred_check_branch
        %427 = sbr.rel (%p425) target = $region60
      $region59: #{tpu_custom_call.1} parent=11 // pred_region
        _
      $region60: #{tpu_custom_call.1} parent=11 // pred_fallthru
        _
    $region12: #{tpu_custom_call.1} parent=5 // pred_fallthru
      _
    %p428 = scmp.lt.s32.totalorder %s21, 3
    // Predicated region
    $region61: #{tpu_custom_call.1} parent=5 // pred_check
      %p429 = pneg %p428
    $region62: #{tpu_custom_call.1} parent=5 // pred_check_branch
      %431 = sbr.rel (%p429) target = $region64
    $region63: #{tpu_custom_call.1} parent=5 // pred_region
      // Predicated region
      $region65: #{tpu_custom_call.1} parent=63 // pred_check
        %p432 = pneg %p41
      $region66: #{tpu_custom_call.1} parent=63 // pred_check_branch
        %434 = sbr.rel (%p432) target = $region68
      $region67: #{tpu_custom_call.1} parent=63 // pred_region
        %s435 = smul.u32 8, %s21
        %p436 = scmp.lt.s32.totalorder %s435, 23
        %s437 = scalar_select %p436, %s435, 23
        %s438 = smul.addr %s437, 7
        %s439 = smul.addr %s438, 4
        %s440 = scalar_lea.vmem %s0, %s439
        %s441 = smul.u32 8, %s21
      $region68: #{tpu_custom_call.1} parent=63 // pred_fallthru
        _
      // Predicated region
      $region69: #{tpu_custom_call.1} parent=63 // pred_check
        %p442 = pneg %p67
      $region70: #{tpu_custom_call.1} parent=63 // pred_check_branch
        %444 = sbr.rel (%p442) target = $region72
      $region71: #{tpu_custom_call.1} parent=63 // pred_region
        %p445 = scmp.lt.s32.totalorder %s21, 2
        %s446 = scalar_select %p445, %s21, 2
        %s447 = smul.addr %s446, 8
        %s448 = scalar_lea.vmem %s1, %s447
      $region72: #{tpu_custom_call.1} parent=63 // pred_fallthru
        _
      // Predicated region
      $region73: #{tpu_custom_call.1} parent=63 // pred_check
        %p449 = pneg %p93
      $region74: #{tpu_custom_call.1} parent=63 // pred_check_branch
        %451 = sbr.rel (%p449) target = $region76
      $region75: #{tpu_custom_call.1} parent=63 // pred_region
        %p452 = scmp.lt.s32.totalorder %s21, 2
        %s453 = scalar_select %p452, %s21, 2
        %s454 = smul.addr %s453, 8
        %s455 = scalar_lea.vmem %s2, %s454
      $region76: #{tpu_custom_call.1} parent=63 // pred_fallthru
        _
    $region64: #{tpu_custom_call.1} parent=5 // pred_fallthru
      _
    %p456 = scmp.le.s32.totalorder 1, %s21
    %p457 = scmp.lt.s32.totalorder %s21, 4
    %p458 = pnand %p456, %p457
    %p459 = pneg %p458
    // Predicated region
    $region77: #{tpu_custom_call.1} parent=5 // pred_check
      _
    $region78: #{tpu_custom_call.1} parent=5 // pred_check_branch
      %461 = sbr.rel (%p458) target = $region80
    $region79: #{tpu_custom_call.1} parent=5 // pred_region
      %s462 = ssub.s32 %s21, 1
      %s463 = smul.u32 8, %s26
      %p464 = scmp.lt.s32.totalorder %s463, 23
      %s465 = scalar_select %p464, %s463, 23
      %s466 = smul.addr %s465, 7
      %s467 = smul.addr %s466, 4
      %s468 = scalar_lea.vmem %s0, %s467
      %p469 = pneg %p47
      %p470 = pneg %p44
      %p471 = scmp.lt.s32.totalorder %s26, 2
      %s472 = scalar_select %p471, %s26, 2
      %s473 = smul.addr %s472, 8
      %s474 = scalar_lea.vmem %s1, %s473
      %p475 = pneg %p73
      %p476 = pneg %p70
      %p477 = scmp.lt.s32.totalorder %s26, 2
      %s478 = scalar_select %p477, %s26, 2
      %s479 = smul.addr %s478, 8
      %s480 = scalar_lea.vmem %s2, %s479
      %p481 = pneg %p99
      %p482 = pneg %p96
      %p483 = pneg %p120
      %p484 = pneg %p117
      %p485 = pneg %p141
      %p486 = pneg %p138
      %p487 = pneg %p162
      %p488 = pneg %p159
      %p489 = pneg %p183
      %p490 = pneg %p180
      %p491 = pneg %p204
      %p492 = pneg %p201
      %p493 = pneg %p225
      %p494 = pneg %p222
      %p495 = pneg %p246
      %p496 = pneg %p243
      %p497 = pneg %p267
      %p498 = pneg %p264
      %p499 = pneg %p288
      %p500 = pneg %p285
      %p501 = pneg %p309
      %p502 = pneg %p306
      %p503 = pneg %p330
      %p504 = pneg %p327
      %p505 = pneg %p351
      %p506 = pneg %p348
      %p507 = pneg %p377
      %p508 = pneg %p374
      %p509 = scmp.lt.s32.totalorder %s26, 2
      %s510 = scalar_select %p509, %s26, 2
      %s511 = smul.addr %s510, 8
      %s512 = scalar_lea.vmem %s15, %s511
      %s513 = smul.u32 8, %s26
      %p514 = scmp.lt.s32.totalorder %s513, 23
      %s515 = scalar_select %p514, %s513, 23
      %s516 = smul.addr %s515, 7
      %s517 = smul.addr %s516, 4
      %s518 = scalar_lea.vmem %s0, %s517
      %s519 = smul.u32 8, %s26
      %p520 = scmp.lt.s32.totalorder %s26, 2
      %s521 = scalar_select %p520, %s26, 2
      %s522 = smul.addr %s521, 8
      %s523 = scalar_lea.vmem %s1, %s522
      %p524 = scmp.lt.s32.totalorder %s26, 2
      %s525 = scalar_select %p524, %s26, 2
      %s526 = smul.addr %s525, 8
      %s527 = scalar_lea.vmem %s2, %s526
      %p528 = scmp.lt.s32.totalorder %s26, 2
      %s529 = scalar_select %p528, %s26, 2
      %s530 = smul.addr %s529, 8
      %s531 = scalar_lea.vmem %s15, %s530
      %v532 = vld [vmem:[%s518] sm:$0xf]
      %v533 = vld [vmem:[%s518 + $0x4] sm:$0xf]
      %v534 = vld [vmem:[%s518 + $0x8] sm:$0xf]
      %v535 = vld [vmem:[%s518 + $0xc] sm:$0xf]
      %v536 = vld [vmem:[%s518 + $0x10] sm:$0xf]
      %v537 = vld [vmem:[%s518 + $0x14] sm:$0xf]
      %v538 = vld [vmem:[%s518 + $0x18] sm:$0xf]
      %v539 = vld [vmem:[%s518 + $0x1c] sm:$0xf]
      %v540 = vld [vmem:[%s518 + $0x20] sm:$0xf]
      %v541 = vld [vmem:[%s518 + $0x24] sm:$0xf]
      %v542 = vld [vmem:[%s518 + $0x28] sm:$0xf]
      %v543 = vld [vmem:[%s518 + $0x2c] sm:$0xf]
      %v544 = vld [vmem:[%s518 + $0x30] sm:$0xf]
      %v545 = vld [vmem:[%s518 + $0x34] sm:$0xf]
      %v546 = vld [vmem:[%s518 + $0x38] sm:$0xf]
      %v547 = vld [vmem:[%s518 + $0x3c] sm:$0xf]
      %v548 = vld [vmem:[%s518 + $0x40] sm:$0xf]
      %v549 = vld [vmem:[%s518 + $0x44] sm:$0xf]
      %v550 = vld [vmem:[%s518 + $0x48] sm:$0xf]
      %v551 = vld [vmem:[%s518 + $0x4c] sm:$0xf]
      %v552 = vld [vmem:[%s518 + $0x50] sm:$0xf]
      %v553 = vld [vmem:[%s518 + $0x54] sm:$0xf]
      %v554 = vld [vmem:[%s518 + $0x58] sm:$0xf]
      %v555 = vld [vmem:[%s518 + $0x5c] sm:$0xf]
      %v556 = vld [vmem:[%s518 + $0x60] sm:$0xf]
      %v557 = vld [vmem:[%s518 + $0x64] sm:$0xf]
      %v558 = vld [vmem:[%s518 + $0x68] sm:$0xf]
      %v559 = vld [vmem:[%s518 + $0x6c] sm:$0xf]
      %v560 = vld [vmem:[%s518 + $0x70] sm:$0xf]
      %v561 = vld [vmem:[%s518 + $0x74] sm:$0xf]
      %v562 = vld [vmem:[%s518 + $0x78] sm:$0xf]
      %v563 = vld [vmem:[%s518 + $0x7c] sm:$0xf]
      %v564 = vld [vmem:[%s518 + $0x80] sm:$0xf]
      %v565 = vld [vmem:[%s518 + $0x84] sm:$0xf]
      %v566 = vld [vmem:[%s518 + $0x88] sm:$0xf]
      %v567 = vld [vmem:[%s518 + $0x8c] sm:$0xf]
      %v568 = vld [vmem:[%s518 + $0x90] sm:$0xf]
      %v569 = vld [vmem:[%s518 + $0x94] sm:$0xf]
      %v570 = vld [vmem:[%s518 + $0x98] sm:$0xf]
      %v571 = vld [vmem:[%s518 + $0x9c] sm:$0xf]
      %v572 = vld [vmem:[%s518 + $0xa0] sm:$0xf]
      %v573 = vld [vmem:[%s518 + $0xa4] sm:$0xf]
      %v574 = vld [vmem:[%s518 + $0xa8] sm:$0xf]
      %v575 = vld [vmem:[%s518 + $0xac] sm:$0xf]
      %v576 = vld [vmem:[%s518 + $0xb0] sm:$0xf]
      %v577 = vld [vmem:[%s518 + $0xb4] sm:$0xf]
      %v578 = vld [vmem:[%s518 + $0xb8] sm:$0xf]
      %v579 = vld [vmem:[%s518 + $0xbc] sm:$0xf]
      %v580 = vld [vmem:[%s518 + $0xc0] sm:$0xf]
      %v581 = vld [vmem:[%s518 + $0xc4] sm:$0xf]
      %v582 = vld [vmem:[%s518 + $0xc8] sm:$0xf]
      %v583 = vld [vmem:[%s518 + $0xcc] sm:$0xf]
      %v584 = vld [vmem:[%s518 + $0xd0] sm:$0xf]
      %v585 = vld [vmem:[%s518 + $0xd4] sm:$0xf]
      %v586 = vld [vmem:[%s518 + $0xd8] sm:$0xf]
      %v587 = vld [vmem:[%s518 + $0xdc] sm:$0xf]
      %v588 = vunpack.c.l.bf16 %v532
      %v589 = vunpack.c.l.bf16 %v533
      %v590 = vunpack.c.l.bf16 %v534
      %v591 = vunpack.c.l.bf16 %v535
      %v592 = vunpack.c.l.bf16 %v536
      %v593 = vunpack.c.l.bf16 %v537
      %v594 = vunpack.c.l.bf16 %v538
      %v595 = vunpack.c.l.bf16 %v539
      %v596 = vunpack.c.l.bf16 %v540
      %v597 = vunpack.c.l.bf16 %v541
      %v598 = vunpack.c.l.bf16 %v542
      %v599 = vunpack.c.l.bf16 %v543
      %v600 = vunpack.c.l.bf16 %v544
      %v601 = vunpack.c.l.bf16 %v545
      %v602 = vunpack.c.l.bf16 %v546
      %v603 = vunpack.c.l.bf16 %v547
      %v604 = vunpack.c.l.bf16 %v548
      %v605 = vunpack.c.l.bf16 %v549
      %v606 = vunpack.c.l.bf16 %v550
      %v607 = vunpack.c.l.bf16 %v551
      %v608 = vunpack.c.l.bf16 %v552
      %v609 = vunpack.c.l.bf16 %v553
      %v610 = vunpack.c.l.bf16 %v554
      %v611 = vunpack.c.l.bf16 %v555
      %v612 = vunpack.c.l.bf16 %v556
      %v613 = vunpack.c.l.bf16 %v557
      %v614 = vunpack.c.l.bf16 %v558
      %v615 = vunpack.c.l.bf16 %v559
      %v616 = vunpack.c.l.bf16 %v560
      %v617 = vunpack.c.l.bf16 %v561
      %v618 = vunpack.c.l.bf16 %v562
      %v619 = vunpack.c.l.bf16 %v563
      %v620 = vunpack.c.l.bf16 %v564
      %v621 = vunpack.c.l.bf16 %v565
      %v622 = vunpack.c.l.bf16 %v566
      %v623 = vunpack.c.l.bf16 %v567
      %v624 = vunpack.c.l.bf16 %v568
      %v625 = vunpack.c.l.bf16 %v569
      %v626 = vunpack.c.l.bf16 %v570
      %v627 = vunpack.c.l.bf16 %v571
      %v628 = vunpack.c.l.bf16 %v572
      %v629 = vunpack.c.l.bf16 %v573
      %v630 = vunpack.c.l.bf16 %v574
      %v631 = vunpack.c.l.bf16 %v575
      %v632 = vunpack.c.l.bf16 %v576
      %v633 = vunpack.c.l.bf16 %v577
      %v634 = vunpack.c.l.bf16 %v578
      %v635 = vunpack.c.l.bf16 %v579
      %v636 = vunpack.c.l.bf16 %v580
      %v637 = vunpack.c.l.bf16 %v581
      %v638 = vunpack.c.l.bf16 %v582
      %v639 = vunpack.c.l.bf16 %v583
      %v640 = vunpack.c.l.bf16 %v584
      %v641 = vunpack.c.l.bf16 %v585
      %v642 = vunpack.c.l.bf16 %v586
      %v643 = vunpack.c.l.bf16 %v587
      %v644 = vld [vmem:[%s523] sm:$0xff]
      %646 = vrot.lane.b32.xlu0 %v644, 120
      %v647 = vpop.permute.xlu0 %646
      %649 = vrot.lane.b32.xlu0 %v644, 112
      %v650 = vpop.permute.xlu0 %649
      %652 = vrot.lane.b32.xlu0 %v644, 104
      %v653 = vpop.permute.xlu0 %652
      %655 = vrot.lane.b32.xlu0 %v644, 96
      %v656 = vpop.permute.xlu0 %655
      %658 = vrot.lane.b32.xlu0 %v644, 88
      %v659 = vpop.permute.xlu0 %658
      %661 = vrot.lane.b32.xlu0 %v644, 80
      %v662 = vpop.permute.xlu0 %661
      %v664 = vcombine.low %v644, %v650
      %v665 = vcombine.high %v644, %v650
      %v667 = vunpack.c.l.s4 1983009808
      %v668 = vunpack.c.0.s8 %v667
      %v669 = vlaneseq
      %v670 = vshrl.u32 %v669, 7
      %v671 = vsub.s32 %v668, %v670
      %v672 = vrot.slane %v664, %v671
      %v674 = vunpack.c.l.s4 1983009808
      %v675 = vunpack.c.0.s8 %v674
      %v676 = vlaneseq
      %v677 = vshrl.u32 %v676, 7
      %v678 = vsub.s32 %v675, %v677
      %v679 = vrot.slane %v665, %v678
      %v680 = vcombine.low %v647, %v653
      %v681 = vcombine.high %v647, %v653
      %v683 = vunpack.c.l.s4 1983009808
      %v684 = vunpack.c.0.s8 %v683
      %v685 = vlaneseq
      %v686 = vshrl.u32 %v685, 7
      %v687 = vsub.s32 %v684, %v686
      %v688 = vrot.slane %v680, %v687
      %v690 = vunpack.c.l.s4 1983009808
      %v691 = vunpack.c.0.s8 %v690
      %v692 = vlaneseq
      %v693 = vshrl.u32 %v692, 7
      %v694 = vsub.s32 %v691, %v693
      %v695 = vrot.slane %v681, %v694
      %v696 = vcombine.low %v656, %v662
      %v697 = vcombine.high %v656, %v662
      %v699 = vunpack.c.l.s4 1983009808
      %v700 = vunpack.c.0.s8 %v699
      %v701 = vlaneseq
      %v702 = vshrl.u32 %v701, 7
      %v703 = vsub.s32 %v700, %v702
      %v704 = vrot.slane %v696, %v703
      %v706 = vunpack.c.l.s4 1983009808
      %v707 = vunpack.c.0.s8 %v706
      %v708 = vlaneseq
      %v709 = vshrl.u32 %v708, 7
      %v710 = vsub.s32 %v707, %v709
      %v711 = vrot.slane %v697, %v710
      %v712 = vcombine.high %v659, 0.0
      %v714 = vunpack.c.l.s4 1983009808
      %v715 = vunpack.c.0.s8 %v714
      %v716 = vlaneseq
      %v717 = vshrl.u32 %v716, 7
      %v718 = vsub.s32 %v715, %v717
      %v719 = vrot.slane %v659, %v718
      %v721 = vunpack.c.l.s4 1983009808
      %v722 = vunpack.c.0.s8 %v721
      %v723 = vlaneseq
      %v724 = vshrl.u32 %v723, 7
      %v725 = vsub.s32 %v722, %v724
      %v726 = vrot.slane %v712, %v725
      %v727 = vcombine.low %v672, %v688
      %v728 = vcombine.high %v672, %v688
      %v730 = vunpack.c.l.s4 1934713408
      %v731 = vunpack.c.0.s8 %v730
      %v732 = vlaneseq
      %v733 = vshrl.u32 %v732, 7
      %v734 = vsub.s32 %v731, %v733
      %v735 = vrot.slane %v727, %v734
      %v737 = vunpack.c.l.s4 1934713408
      %v738 = vunpack.c.0.s8 %v737
      %v739 = vlaneseq
      %v740 = vshrl.u32 %v739, 7
      %v741 = vsub.s32 %v738, %v740
      %v742 = vrot.slane %v728, %v741
      %v743 = vcombine.low %v679, %v695
      %v744 = vcombine.high %v679, %v695
      %v746 = vunpack.c.l.s4 1934713408
      %v747 = vunpack.c.0.s8 %v746
      %v748 = vlaneseq
      %v749 = vshrl.u32 %v748, 7
      %v750 = vsub.s32 %v747, %v749
      %v751 = vrot.slane %v743, %v750
      %v753 = vunpack.c.l.s4 1934713408
      %v754 = vunpack.c.0.s8 %v753
      %v755 = vlaneseq
      %v756 = vshrl.u32 %v755, 7
      %v757 = vsub.s32 %v754, %v756
      %v758 = vrot.slane %v744, %v757
      %v759 = vcombine.low %v704, %v719
      %v760 = vcombine.high %v704, %v719
      %v762 = vunpack.c.l.s4 1934713408
      %v763 = vunpack.c.0.s8 %v762
      %v764 = vlaneseq
      %v765 = vshrl.u32 %v764, 7
      %v766 = vsub.s32 %v763, %v765
      %v767 = vrot.slane %v759, %v766
      %v769 = vunpack.c.l.s4 1934713408
      %v770 = vunpack.c.0.s8 %v769
      %v771 = vlaneseq
      %v772 = vshrl.u32 %v771, 7
      %v773 = vsub.s32 %v770, %v772
      %v774 = vrot.slane %v760, %v773
      %v775 = vcombine.low %v711, %v726
      %v776 = vcombine.high %v711, %v726
      %v778 = vunpack.c.l.s4 1934713408
      %v779 = vunpack.c.0.s8 %v778
      %v780 = vlaneseq
      %v781 = vshrl.u32 %v780, 7
      %v782 = vsub.s32 %v779, %v781
      %v783 = vrot.slane %v775, %v782
      %v785 = vunpack.c.l.s4 1934713408
      %v786 = vunpack.c.0.s8 %v785
      %v787 = vlaneseq
      %v788 = vshrl.u32 %v787, 7
      %v789 = vsub.s32 %v786, %v788
      %v790 = vrot.slane %v776, %v789
      %v791 = vcombine.low %v735, %v767
      %v792 = vcombine.high %v735, %v767
      %v793 = vcombine.low %v742, %v774
      %v794 = vcombine.high %v742, %v774
      %v795 = vcombine.low %v751, %v783
      %v796 = vcombine.high %v751, %v783
      %v797 = vcombine.low %v758, %v790
      %v798 = vcombine.high %v758, %v790
      %v799 = vld [vmem:[%s527] sm:$0xff]
      %v800 = vld [vmem:[%s3] sm:$0xff]
      %v801 = vld [vmem:[%s3 + $0x8] sm:$0xff]
      %v802 = vld [vmem:[%s4] sm:$0x1]
      %v804 = vlaneseq
      %v805 = vshrl.u32 %v804, 7
      %v806 = vsub.s32 0, %v805
      %v807 = vrot.slane %v802, %v806
      %vm809 = vcmask 130048
      %v811 = vsel %vm809, %v799, 0
      %813 = vmatprep.subr.mxu0 0.0
      %814 = vmatpush1.msra.mxu0 0.0
      %815 = vmatprep.subr.mxu0 0.0
      %816 = vmatpush1.msra.mxu0 0.0
      %817 = vmatprep.subr.mxu0 0.0
      %818 = vmatpush1.msra.mxu0 0.0
      %819 = vmatprep.subr.mxu0 0.0
      %820 = vmatpush1.msra.mxu0 0.0
      %821 = vmatprep.subr.mxu0 0.0
      %822 = vmatpush1.msra.mxu0 0.0
      %823 = vmatprep.subr.mxu0 0.0
      %824 = vmatpush1.msra.mxu0 0.0
      %825 = vmatprep.subr.mxu0 0.0
      %826 = vmatpush1.msra.mxu0 0.0
      %827 = vmatprep.subr.mxu0 0.0
      %828 = vmatpush1.msra.mxu0 0.0
      %829 = vmatprep.subr.mxu0 0.0
      %830 = vmatpush1.msra.mxu0 0.0
      %831 = vmatprep.subr.mxu0 0.0
      %832 = vmatpush1.msra.mxu0 0.0
      %833 = vmatprep.subr.mxu0 0.0
      %834 = vmatpush1.msra.mxu0 0.0
      %835 = vmatprep.subr.mxu0 0.0
      %836 = vmatpush1.msra.mxu0 0.0
      %837 = vmatprep.subr.mxu0 0.0
      %838 = vmatpush1.msra.mxu0 0.0
      %839 = vmatprep.subr.mxu0 0.0
      %840 = vmatpush1.msra.mxu0 0.0
      %841 = vmatprep.subr.mxu0 0.0
      %842 = vmatpush1.msra.mxu0 %v801
      %843 = vmatprep.subr.mxu0 0.0
      %844 = vmatpush1.msra.mxu0 %v800
      %845 = vmatprep.subr.mxu0 0.0
      %846 = vmatpush2.msra.mxu0 0.0
      %847 = vmatprep.subr.mxu0 0.0
      %848 = vmatpush2.msra.mxu0 0.0
      %849 = vmatprep.subr.mxu0 0.0
      %850 = vmatpush2.msra.mxu0 0.0
      %851 = vmatprep.subr.mxu0 0.0
      %852 = vmatpush2.msra.mxu0 0.0
      %853 = vmatprep.subr.mxu0 0.0
      %854 = vmatpush2.msra.mxu0 0.0
      %855 = vmatprep.subr.mxu0 0.0
      %856 = vmatpush2.msra.mxu0 0.0
      %857 = vmatprep.subr.mxu0 0.0
      %858 = vmatpush2.msra.mxu0 0.0
      %859 = vmatprep.subr.mxu0 0.0
      %860 = vmatpush2.msra.mxu0 0.0
      %861 = vmatprep.subr.mxu0 0.0
      %862 = vmatpush2.msra.mxu0 0.0
      %863 = vmatprep.subr.mxu0 0.0
      %864 = vmatpush2.msra.mxu0 0.0
      %865 = vmatprep.subr.mxu0 0.0
      %866 = vmatpush2.msra.mxu0 0.0
      %867 = vmatprep.subr.mxu0 0.0
      %868 = vmatpush2.msra.mxu0 0.0
      %869 = vmatprep.subr.mxu0 0.0
      %870 = vmatpush2.msra.mxu0 0.0
      %871 = vmatprep.subr.mxu0 0.0
      %872 = vmatpush2.msra.mxu0 0.0
      %873 = vmatprep.subr.mxu0 0.0
      %874 = vmatpush2.msra.mxu0 0.0
      %875 = vmatprep.subr.mxu0 0.0
      %876 = vmatpush2.msra.mxu0 0.0
      %877 = vmatprep.mubr.f32.mxu0 0.0
      %878 = vmatmul.mubr.f32.gmra.mxu0 %v811
      %v879 = vpop.f32.mrf.mxu0
      %v880 = vadd.f32 %v807, %v879
      %v881 = vpop.f32.mrf.mxu0
      %882 = vdwg.mxu0
      %v883 = vld [vmem:[%s5] sm:$0xff]
      %v884 = vld [vmem:[%s5 + $0x8] sm:$0xff]
      %v885 = vld [vmem:[%s5 + $0x10] sm:$0xff]
      %v886 = vld [vmem:[%s5 + $0x18] sm:$0xff]
      %v887 = vld [vmem:[%s6] sm:$0x1]
      %v889 = vlaneseq
      %v890 = vshrl.u32 %v889, 7
      %v891 = vsub.s32 0, %v890
      %v892 = vrot.slane %v887, %v891
      %vm894 = vcmask 261120
      %v896 = vsel %vm894, %v588, 0
      %v899 = vsel %vm894, %v589, 0
      %v902 = vsel %vm894, %v590, 0
      %v905 = vsel %vm894, %v591, 0
      %v908 = vsel %vm894, %v592, 0
      %v911 = vsel %vm894, %v593, 0
      %v914 = vsel %vm894, %v594, 0
      %v917 = vsel %vm894, %v595, 0
      %v920 = vsel %vm894, %v596, 0
      %v923 = vsel %vm894, %v597, 0
      %v926 = vsel %vm894, %v598, 0
      %v929 = vsel %vm894, %v599, 0
      %v932 = vsel %vm894, %v600, 0
      %v935 = vsel %vm894, %v601, 0
      %v938 = vsel %vm894, %v602, 0
      %v941 = vsel %vm894, %v603, 0
      %v944 = vsel %vm894, %v604, 0
      %v947 = vsel %vm894, %v605, 0
      %v950 = vsel %vm894, %v606, 0
      %v953 = vsel %vm894, %v607, 0
      %v956 = vsel %vm894, %v608, 0
      %v959 = vsel %vm894, %v609, 0
      %v962 = vsel %vm894, %v610, 0
      %v965 = vsel %vm894, %v611, 0
      %v968 = vsel %vm894, %v612, 0
      %v971 = vsel %vm894, %v613, 0
      %v974 = vsel %vm894, %v614, 0
      %v977 = vsel %vm894, %v615, 0
      %v980 = vsel %vm894, %v616, 0
      %v983 = vsel %vm894, %v617, 0
      %v986 = vsel %vm894, %v618, 0
      %v989 = vsel %vm894, %v619, 0
      %v992 = vsel %vm894, %v620, 0
      %v995 = vsel %vm894, %v621, 0
      %v998 = vsel %vm894, %v622, 0
      %v1001 = vsel %vm894, %v623, 0
      %v1004 = vsel %vm894, %v624, 0
      %v1007 = vsel %vm894, %v625, 0
      %v1010 = vsel %vm894, %v626, 0
      %v1013 = vsel %vm894, %v627, 0
      %v1016 = vsel %vm894, %v628, 0
      %v1019 = vsel %vm894, %v629, 0
      %v1022 = vsel %vm894, %v630, 0
      %v1025 = vsel %vm894, %v631, 0
      %v1028 = vsel %vm894, %v632, 0
      %v1031 = vsel %vm894, %v633, 0
      %v1034 = vsel %vm894, %v634, 0
      %v1037 = vsel %vm894, %v635, 0
      %v1040 = vsel %vm894, %v636, 0
      %v1043 = vsel %vm894, %v637, 0
      %v1046 = vsel %vm894, %v638, 0
      %v1049 = vsel %vm894, %v639, 0
      %v1052 = vsel %vm894, %v640, 0
      %v1055 = vsel %vm894, %v641, 0
      %v1058 = vsel %vm894, %v642, 0
      %v1061 = vsel %vm894, %v643, 0
      %1063 = vmatprep.subr.mxu0 0.0
      %1064 = vmatpush1.msra.mxu0 0.0
      %1065 = vmatprep.subr.mxu0 0.0
      %1066 = vmatpush1.msra.mxu0 0.0
      %1067 = vmatprep.subr.mxu0 0.0
      %1068 = vmatpush1.msra.mxu0 0.0
      %1069 = vmatprep.subr.mxu0 0.0
      %1070 = vmatpush1.msra.mxu0 0.0
      %1071 = vmatprep.subr.mxu0 0.0
      %1072 = vmatpush1.msra.mxu0 0.0
      %1073 = vmatprep.subr.mxu0 0.0
      %1074 = vmatpush1.msra.mxu0 0.0
      %1075 = vmatprep.subr.mxu0 0.0
      %1076 = vmatpush1.msra.mxu0 0.0
      %1077 = vmatprep.subr.mxu0 0.0
      %1078 = vmatpush1.msra.mxu0 0.0
      %1079 = vmatprep.subr.mxu0 0.0
      %1080 = vmatpush1.msra.mxu0 0.0
      %1081 = vmatprep.subr.mxu0 0.0
      %1082 = vmatpush1.msra.mxu0 0.0
      %1083 = vmatprep.subr.mxu0 0.0
      %1084 = vmatpush1.msra.mxu0 0.0
      %1085 = vmatprep.subr.mxu0 0.0
      %1086 = vmatpush1.msra.mxu0 0.0
      %1087 = vmatprep.subr.mxu0 0.0
      %1088 = vmatpush1.msra.mxu0 %v886
      %1089 = vmatprep.subr.mxu0 0.0
      %1090 = vmatpush1.msra.mxu0 %v885
      %1091 = vmatprep.subr.mxu0 0.0
      %1092 = vmatpush1.msra.mxu0 %v884
      %1093 = vmatprep.subr.mxu0 0.0
      %1094 = vmatpush1.msra.mxu0 %v883
      %1095 = vmatprep.subr.mxu0 0.0
      %1096 = vmatpush2.msra.mxu0 0.0
      %1097 = vmatprep.subr.mxu0 0.0
      %1098 = vmatpush2.msra.mxu0 0.0
      %1099 = vmatprep.subr.mxu0 0.0
      %1100 = vmatpush2.msra.mxu0 0.0
      %1101 = vmatprep.subr.mxu0 0.0
      %1102 = vmatpush2.msra.mxu0 0.0
      %1103 = vmatprep.subr.mxu0 0.0
      %1104 = vmatpush2.msra.mxu0 0.0
      %1105 = vmatprep.subr.mxu0 0.0
      %1106 = vmatpush2.msra.mxu0 0.0
      %1107 = vmatprep.subr.mxu0 0.0
      %1108 = vmatpush2.msra.mxu0 0.0
      %1109 = vmatprep.subr.mxu0 0.0
      %1110 = vmatpush2.msra.mxu0 0.0
      %1111 = vmatprep.subr.mxu0 0.0
      %1112 = vmatpush2.msra.mxu0 0.0
      %1113 = vmatprep.subr.mxu0 0.0
      %1114 = vmatpush2.msra.mxu0 0.0
      %1115 = vmatprep.subr.mxu0 0.0
      %1116 = vmatpush2.msra.mxu0 0.0
      %1117 = vmatprep.subr.mxu0 0.0
      %1118 = vmatpush2.msra.mxu0 0.0
      %1119 = vmatprep.subr.mxu0 0.0
      %1120 = vmatpush2.msra.mxu0 0.0
      %1121 = vmatprep.subr.mxu0 0.0
      %1122 = vmatpush2.msra.mxu0 0.0
      %1123 = vmatprep.subr.mxu0 0.0
      %1124 = vmatpush2.msra.mxu0 0.0
      %1125 = vmatprep.subr.mxu0 0.0
      %1126 = vmatpush2.msra.mxu0 0.0
      %1127 = vmatprep.mubr.f32.mxu0 0.0
      %1128 = vmatmul.mubr.f32.gmra.mxu0 %v896
      %v1129 = vpop.f32.mrf.mxu0
      %v1130 = vadd.f32 %v892, %v1129
      %v1131 = vpop.f32.mrf.mxu0
      %1132 = vmatprep.mubr.f32.mxu0 0.0
      %1133 = vmatmul.mubr.f32.gmra.mxu0 %v899
      %v1134 = vpop.f32.mrf.mxu0
      %v1135 = vadd.f32 %v892, %v1134
      %v1136 = vpop.f32.mrf.mxu0
      %1137 = vmatprep.mubr.f32.mxu0 0.0
      %1138 = vmatmul.mubr.f32.gmra.mxu0 %v902
      %v1139 = vpop.f32.mrf.mxu0
      %v1140 = vadd.f32 %v892, %v1139
      %v1141 = vpop.f32.mrf.mxu0
      %1142 = vmatprep.mubr.f32.mxu0 0.0
      %1143 = vmatmul.mubr.f32.gmra.mxu0 %v905
      %v1144 = vpop.f32.mrf.mxu0
      %v1145 = vadd.f32 %v892, %v1144
      %v1146 = vpop.f32.mrf.mxu0
      %1147 = vmatprep.mubr.f32.mxu0 0.0
      %1148 = vmatmul.mubr.f32.gmra.mxu0 %v908
      %v1149 = vpop.f32.mrf.mxu0
      %v1150 = vadd.f32 %v892, %v1149
      %v1151 = vpop.f32.mrf.mxu0
      %1152 = vmatprep.mubr.f32.mxu0 0.0
      %1153 = vmatmul.mubr.f32.gmra.mxu0 %v911
      %v1154 = vpop.f32.mrf.mxu0
      %v1155 = vadd.f32 %v892, %v1154
      %v1156 = vpop.f32.mrf.mxu0
      %1157 = vmatprep.mubr.f32.mxu0 0.0
      %1158 = vmatmul.mubr.f32.gmra.mxu0 %v914
      %v1159 = vpop.f32.mrf.mxu0
      %v1160 = vadd.f32 %v892, %v1159
      %v1161 = vpop.f32.mrf.mxu0
      %1162 = vmatprep.mubr.f32.mxu0 0.0
      %1163 = vmatmul.mubr.f32.gmra.mxu0 %v917
      %v1164 = vpop.f32.mrf.mxu0
      %v1165 = vadd.f32 %v892, %v1164
      %v1166 = vpop.f32.mrf.mxu0
      %1167 = vmatprep.mubr.f32.mxu0 0.0
      %1168 = vmatmul.mubr.f32.gmra.mxu0 %v920
      %v1169 = vpop.f32.mrf.mxu0
      %v1170 = vadd.f32 %v892, %v1169
      %v1171 = vpop.f32.mrf.mxu0
      %1172 = vmatprep.mubr.f32.mxu0 0.0
      %1173 = vmatmul.mubr.f32.gmra.mxu0 %v923
      %v1174 = vpop.f32.mrf.mxu0
      %v1175 = vadd.f32 %v892, %v1174
      %v1176 = vpop.f32.mrf.mxu0
      %1177 = vmatprep.mubr.f32.mxu0 0.0
      %1178 = vmatmul.mubr.f32.gmra.mxu0 %v926
      %v1179 = vpop.f32.mrf.mxu0
      %v1180 = vadd.f32 %v892, %v1179
      %v1181 = vpop.f32.mrf.mxu0
      %1182 = vmatprep.mubr.f32.mxu0 0.0
      %1183 = vmatmul.mubr.f32.gmra.mxu0 %v929
      %v1184 = vpop.f32.mrf.mxu0
      %v1185 = vadd.f32 %v892, %v1184
      %v1186 = vpop.f32.mrf.mxu0
      %1187 = vmatprep.mubr.f32.mxu0 0.0
      %1188 = vmatmul.mubr.f32.gmra.mxu0 %v932
      %v1189 = vpop.f32.mrf.mxu0
      %v1190 = vadd.f32 %v892, %v1189
      %v1191 = vpop.f32.mrf.mxu0
      %1192 = vmatprep.mubr.f32.mxu0 0.0
      %1193 = vmatmul.mubr.f32.gmra.mxu0 %v935
      %v1194 = vpop.f32.mrf.mxu0
      %v1195 = vadd.f32 %v892, %v1194
      %v1196 = vpop.f32.mrf.mxu0
      %1197 = vmatprep.mubr.f32.mxu0 0.0
      %1198 = vmatmul.mubr.f32.gmra.mxu0 %v938
      %v1199 = vpop.f32.mrf.mxu0
      %v1200 = vadd.f32 %v892, %v1199
      %v1201 = vpop.f32.mrf.mxu0
      %1202 = vmatprep.mubr.f32.mxu0 0.0
      %1203 = vmatmul.mubr.f32.gmra.mxu0 %v941
      %v1204 = vpop.f32.mrf.mxu0
      %v1205 = vadd.f32 %v892, %v1204
      %v1206 = vpop.f32.mrf.mxu0
      %1207 = vmatprep.mubr.f32.mxu0 0.0
      %1208 = vmatmul.mubr.f32.gmra.mxu0 %v944
      %v1209 = vpop.f32.mrf.mxu0
      %v1210 = vadd.f32 %v892, %v1209
      %v1211 = vpop.f32.mrf.mxu0
      %1212 = vmatprep.mubr.f32.mxu0 0.0
      %1213 = vmatmul.mubr.f32.gmra.mxu0 %v947
      %v1214 = vpop.f32.mrf.mxu0
      %v1215 = vadd.f32 %v892, %v1214
      %v1216 = vpop.f32.mrf.mxu0
      %1217 = vmatprep.mubr.f32.mxu0 0.0
      %1218 = vmatmul.mubr.f32.gmra.mxu0 %v950
      %v1219 = vpop.f32.mrf.mxu0
      %v1220 = vadd.f32 %v892, %v1219
      %v1221 = vpop.f32.mrf.mxu0
      %1222 = vmatprep.mubr.f32.mxu0 0.0
      %1223 = vmatmul.mubr.f32.gmra.mxu0 %v953
      %v1224 = vpop.f32.mrf.mxu0
      %v1225 = vadd.f32 %v892, %v1224
      %v1226 = vpop.f32.mrf.mxu0
      %1227 = vmatprep.mubr.f32.mxu0 0.0
      %1228 = vmatmul.mubr.f32.gmra.mxu0 %v956
      %v1229 = vpop.f32.mrf.mxu0
      %v1230 = vadd.f32 %v892, %v1229
      %v1231 = vpop.f32.mrf.mxu0
      %1232 = vmatprep.mubr.f32.mxu0 0.0
      %1233 = vmatmul.mubr.f32.gmra.mxu0 %v959
      %v1234 = vpop.f32.mrf.mxu0
      %v1235 = vadd.f32 %v892, %v1234
      %v1236 = vpop.f32.mrf.mxu0
      %1237 = vmatprep.mubr.f32.mxu0 0.0
      %1238 = vmatmul.mubr.f32.gmra.mxu0 %v962
      %v1239 = vpop.f32.mrf.mxu0
      %v1240 = vadd.f32 %v892, %v1239
      %v1241 = vpop.f32.mrf.mxu0
      %1242 = vmatprep.mubr.f32.mxu0 0.0
      %1243 = vmatmul.mubr.f32.gmra.mxu0 %v965
      %v1244 = vpop.f32.mrf.mxu0
      %v1245 = vadd.f32 %v892, %v1244
      %v1246 = vpop.f32.mrf.mxu0
      %1247 = vmatprep.mubr.f32.mxu0 0.0
      %1248 = vmatmul.mubr.f32.gmra.mxu0 %v968
      %v1249 = vpop.f32.mrf.mxu0
      %v1250 = vadd.f32 %v892, %v1249
      %v1251 = vpop.f32.mrf.mxu0
      %1252 = vmatprep.mubr.f32.mxu0 0.0
      %1253 = vmatmul.mubr.f32.gmra.mxu0 %v971
      %v1254 = vpop.f32.mrf.mxu0
      %v1255 = vadd.f32 %v892, %v1254
      %v1256 = vpop.f32.mrf.mxu0
      %1257 = vmatprep.mubr.f32.mxu0 0.0
      %1258 = vmatmul.mubr.f32.gmra.mxu0 %v974
      %v1259 = vpop.f32.mrf.mxu0
      %v1260 = vadd.f32 %v892, %v1259
      %v1261 = vpop.f32.mrf.mxu0
      %1262 = vmatprep.mubr.f32.mxu0 0.0
      %1263 = vmatmul.mubr.f32.gmra.mxu0 %v977
      %v1264 = vpop.f32.mrf.mxu0
      %v1265 = vadd.f32 %v892, %v1264
      %v1266 = vpop.f32.mrf.mxu0
      %1267 = vmatprep.mubr.f32.mxu0 0.0
      %1268 = vmatmul.mubr.f32.gmra.mxu0 %v980
      %v1269 = vpop.f32.mrf.mxu0
      %v1270 = vadd.f32 %v892, %v1269
      %v1271 = vpop.f32.mrf.mxu0
      %1272 = vmatprep.mubr.f32.mxu0 0.0
      %1273 = vmatmul.mubr.f32.gmra.mxu0 %v983
      %v1274 = vpop.f32.mrf.mxu0
      %v1275 = vadd.f32 %v892, %v1274
      %v1276 = vpop.f32.mrf.mxu0
      %1277 = vmatprep.mubr.f32.mxu0 0.0
      %1278 = vmatmul.mubr.f32.gmra.mxu0 %v986
      %v1279 = vpop.f32.mrf.mxu0
      %v1280 = vadd.f32 %v892, %v1279
      %v1281 = vpop.f32.mrf.mxu0
      %1282 = vmatprep.mubr.f32.mxu0 0.0
      %1283 = vmatmul.mubr.f32.gmra.mxu0 %v989
      %v1284 = vpop.f32.mrf.mxu0
      %v1285 = vadd.f32 %v892, %v1284
      %v1286 = vpop.f32.mrf.mxu0
      %1287 = vmatprep.mubr.f32.mxu0 0.0
      %1288 = vmatmul.mubr.f32.gmra.mxu0 %v992
      %v1289 = vpop.f32.mrf.mxu0
      %v1290 = vadd.f32 %v892, %v1289
      %v1291 = vpop.f32.mrf.mxu0
      %1292 = vmatprep.mubr.f32.mxu0 0.0
      %1293 = vmatmul.mubr.f32.gmra.mxu0 %v995
      %v1294 = vpop.f32.mrf.mxu0
      %v1295 = vadd.f32 %v892, %v1294
      %v1296 = vpop.f32.mrf.mxu0
      %1297 = vmatprep.mubr.f32.mxu0 0.0
      %1298 = vmatmul.mubr.f32.gmra.mxu0 %v998
      %v1299 = vpop.f32.mrf.mxu0
      %v1300 = vadd.f32 %v892, %v1299
      %v1301 = vpop.f32.mrf.mxu0
      %1302 = vmatprep.mubr.f32.mxu0 0.0
      %1303 = vmatmul.mubr.f32.gmra.mxu0 %v1001
      %v1304 = vpop.f32.mrf.mxu0
      %v1305 = vadd.f32 %v892, %v1304
      %v1306 = vpop.f32.mrf.mxu0
      %1307 = vmatprep.mubr.f32.mxu0 0.0
      %1308 = vmatmul.mubr.f32.gmra.mxu0 %v1004
      %v1309 = vpop.f32.mrf.mxu0
      %v1310 = vadd.f32 %v892, %v1309
      %v1311 = vpop.f32.mrf.mxu0
      %1312 = vmatprep.mubr.f32.mxu0 0.0
      %1313 = vmatmul.mubr.f32.gmra.mxu0 %v1007
      %v1314 = vpop.f32.mrf.mxu0
      %v1315 = vadd.f32 %v892, %v1314
      %v1316 = vpop.f32.mrf.mxu0
      %1317 = vmatprep.mubr.f32.mxu0 0.0
      %1318 = vmatmul.mubr.f32.gmra.mxu0 %v1010
      %v1319 = vpop.f32.mrf.mxu0
      %v1320 = vadd.f32 %v892, %v1319
      %v1321 = vpop.f32.mrf.mxu0
      %1322 = vmatprep.mubr.f32.mxu0 0.0
      %1323 = vmatmul.mubr.f32.gmra.mxu0 %v1013
      %v1324 = vpop.f32.mrf.mxu0
      %v1325 = vadd.f32 %v892, %v1324
      %v1326 = vpop.f32.mrf.mxu0
      %1327 = vmatprep.mubr.f32.mxu0 0.0
      %1328 = vmatmul.mubr.f32.gmra.mxu0 %v1016
      %v1329 = vpop.f32.mrf.mxu0
      %v1330 = vadd.f32 %v892, %v1329
      %v1331 = vpop.f32.mrf.mxu0
      %1332 = vmatprep.mubr.f32.mxu0 0.0
      %1333 = vmatmul.mubr.f32.gmra.mxu0 %v1019
      %v1334 = vpop.f32.mrf.mxu0
      %v1335 = vadd.f32 %v892, %v1334
      %v1336 = vpop.f32.mrf.mxu0
      %1337 = vmatprep.mubr.f32.mxu0 0.0
      %1338 = vmatmul.mubr.f32.gmra.mxu0 %v1022
      %v1339 = vpop.f32.mrf.mxu0
      %v1340 = vadd.f32 %v892, %v1339
      %v1341 = vpop.f32.mrf.mxu0
      %1342 = vmatprep.mubr.f32.mxu0 0.0
      %1343 = vmatmul.mubr.f32.gmra.mxu0 %v1025
      %v1344 = vpop.f32.mrf.mxu0
      %v1345 = vadd.f32 %v892, %v1344
      %v1346 = vpop.f32.mrf.mxu0
      %1347 = vmatprep.mubr.f32.mxu0 0.0
      %1348 = vmatmul.mubr.f32.gmra.mxu0 %v1028
      %v1349 = vpop.f32.mrf.mxu0
      %v1350 = vadd.f32 %v892, %v1349
      %v1351 = vpop.f32.mrf.mxu0
      %1352 = vmatprep.mubr.f32.mxu0 0.0
      %1353 = vmatmul.mubr.f32.gmra.mxu0 %v1031
      %v1354 = vpop.f32.mrf.mxu0
      %v1355 = vadd.f32 %v892, %v1354
      %v1356 = vpop.f32.mrf.mxu0
      %1357 = vmatprep.mubr.f32.mxu0 0.0
      %1358 = vmatmul.mubr.f32.gmra.mxu0 %v1034
      %v1359 = vpop.f32.mrf.mxu0
      %v1360 = vadd.f32 %v892, %v1359
      %v1361 = vpop.f32.mrf.mxu0
      %1362 = vmatprep.mubr.f32.mxu0 0.0
      %1363 = vmatmul.mubr.f32.gmra.mxu0 %v1037
      %v1364 = vpop.f32.mrf.mxu0
      %v1365 = vadd.f32 %v892, %v1364
      %v1366 = vpop.f32.mrf.mxu0
      %1367 = vmatprep.mubr.f32.mxu0 0.0
      %1368 = vmatmul.mubr.f32.gmra.mxu0 %v1040
      %v1369 = vpop.f32.mrf.mxu0
      %v1370 = vadd.f32 %v892, %v1369
      %v1371 = vpop.f32.mrf.mxu0
      %1372 = vmatprep.mubr.f32.mxu0 0.0
      %1373 = vmatmul.mubr.f32.gmra.mxu0 %v1043
      %v1374 = vpop.f32.mrf.mxu0
      %v1375 = vadd.f32 %v892, %v1374
      %v1376 = vpop.f32.mrf.mxu0
      %1377 = vmatprep.mubr.f32.mxu0 0.0
      %1378 = vmatmul.mubr.f32.gmra.mxu0 %v1046
      %v1379 = vpop.f32.mrf.mxu0
      %v1380 = vadd.f32 %v892, %v1379
      %v1381 = vpop.f32.mrf.mxu0
      %1382 = vmatprep.mubr.f32.mxu0 0.0
      %1383 = vmatmul.mubr.f32.gmra.mxu0 %v1049
      %v1384 = vpop.f32.mrf.mxu0
      %v1385 = vadd.f32 %v892, %v1384
      %v1386 = vpop.f32.mrf.mxu0
      %1387 = vmatprep.mubr.f32.mxu0 0.0
      %1388 = vmatmul.mubr.f32.gmra.mxu0 %v1052
      %v1389 = vpop.f32.mrf.mxu0
      %v1390 = vadd.f32 %v892, %v1389
      %v1391 = vpop.f32.mrf.mxu0
      %1392 = vmatprep.mubr.f32.mxu0 0.0
      %1393 = vmatmul.mubr.f32.gmra.mxu0 %v1055
      %v1394 = vpop.f32.mrf.mxu0
      %v1395 = vadd.f32 %v892, %v1394
      %v1396 = vpop.f32.mrf.mxu0
      %1397 = vmatprep.mubr.f32.mxu0 0.0
      %1398 = vmatmul.mubr.f32.gmra.mxu0 %v1058
      %v1399 = vpop.f32.mrf.mxu0
      %v1400 = vadd.f32 %v892, %v1399
      %v1401 = vpop.f32.mrf.mxu0
      %1402 = vmatprep.mubr.f32.mxu0 0.0
      %1403 = vmatmul.mubr.f32.gmra.mxu0 %v1061
      %v1404 = vpop.f32.mrf.mxu0
      %v1405 = vadd.f32 %v892, %v1404
      %v1406 = vpop.f32.mrf.mxu0
      %1407 = vdwg.mxu0
      %v1408 = vtanh.pop %v1130
      %v1409 = vtanh.pop %v1135
      %v1410 = vtanh.pop %v1140
      %v1411 = vtanh.pop %v1145
      %v1412 = vtanh.pop %v1150
      %v1413 = vtanh.pop %v1155
      %v1414 = vtanh.pop %v1160
      %v1415 = vtanh.pop %v1165
      %v1416 = vtanh.pop %v1170
      %v1417 = vtanh.pop %v1175
      %v1418 = vtanh.pop %v1180
      %v1419 = vtanh.pop %v1185
      %v1420 = vtanh.pop %v1190
      %v1421 = vtanh.pop %v1195
      %v1422 = vtanh.pop %v1200
      %v1423 = vtanh.pop %v1205
      %v1424 = vtanh.pop %v1210
      %v1425 = vtanh.pop %v1215
      %v1426 = vtanh.pop %v1220
      %v1427 = vtanh.pop %v1225
      %v1428 = vtanh.pop %v1230
      %v1429 = vtanh.pop %v1235
      %v1430 = vtanh.pop %v1240
      %v1431 = vtanh.pop %v1245
      %v1432 = vtanh.pop %v1250
      %v1433 = vtanh.pop %v1255
      %v1434 = vtanh.pop %v1260
      %v1435 = vtanh.pop %v1265
      %v1436 = vtanh.pop %v1270
      %v1437 = vtanh.pop %v1275
      %v1438 = vtanh.pop %v1280
      %v1439 = vtanh.pop %v1285
      %v1440 = vtanh.pop %v1290
      %v1441 = vtanh.pop %v1295
      %v1442 = vtanh.pop %v1300
      %v1443 = vtanh.pop %v1305
      %v1444 = vtanh.pop %v1310
      %v1445 = vtanh.pop %v1315
      %v1446 = vtanh.pop %v1320
      %v1447 = vtanh.pop %v1325
      %v1448 = vtanh.pop %v1330
      %v1449 = vtanh.pop %v1335
      %v1450 = vtanh.pop %v1340
      %v1451 = vtanh.pop %v1345
      %v1452 = vtanh.pop %v1350
      %v1453 = vtanh.pop %v1355
      %v1454 = vtanh.pop %v1360
      %v1455 = vtanh.pop %v1365
      %v1456 = vtanh.pop %v1370
      %v1457 = vtanh.pop %v1375
      %v1458 = vtanh.pop %v1380
      %v1459 = vtanh.pop %v1385
      %v1460 = vtanh.pop %v1390
      %v1461 = vtanh.pop %v1395
      %v1462 = vtanh.pop %v1400
      %v1463 = vtanh.pop %v1405
      %v1465 = vcombine.high %v880, %v880
      %v1467 = vunpack.c.l.s4 1966171168
      %v1468 = vunpack.c.0.s8 %v1467
      %v1469 = vlaneseq
      %v1470 = vshrl.u32 %v1469, 7
      %v1471 = vsub.s32 %v1468, %v1470
      %v1472 = vrot.slane %v880, %v1471
      %v1474 = vunpack.c.l.s4 1966171168
      %v1475 = vunpack.c.0.s8 %v1474
      %v1476 = vlaneseq
      %v1477 = vshrl.u32 %v1476, 7
      %v1478 = vsub.s32 %v1475, %v1477
      %v1479 = vrot.slane %v1465, %v1478
      %v1480 = vcombine.high %v1472, %v1472
      %v1481 = vcombine.high %v1479, %v1479
      %v1483 = vunpack.c.l.s4 1966171168
      %v1484 = vunpack.c.0.s8 %v1483
      %v1485 = vlaneseq
      %v1486 = vshrl.u32 %v1485, 7
      %v1487 = vsub.s32 %v1484, %v1486
      %v1488 = vrot.slane %v1472, %v1487
      %v1490 = vunpack.c.l.s4 1966171168
      %v1491 = vunpack.c.0.s8 %v1490
      %v1492 = vlaneseq
      %v1493 = vshrl.u32 %v1492, 7
      %v1494 = vsub.s32 %v1491, %v1493
      %v1495 = vrot.slane %v1479, %v1494
      %v1497 = vunpack.c.l.s4 1966171168
      %v1498 = vunpack.c.0.s8 %v1497
      %v1499 = vlaneseq
      %v1500 = vshrl.u32 %v1499, 7
      %v1501 = vsub.s32 %v1498, %v1500
      %v1502 = vrot.slane %v1480, %v1501
      %v1504 = vunpack.c.l.s4 1966171168
      %v1505 = vunpack.c.0.s8 %v1504
      %v1506 = vlaneseq
      %v1507 = vshrl.u32 %v1506, 7
      %v1508 = vsub.s32 %v1505, %v1507
      %v1509 = vrot.slane %v1481, %v1508
      %v1510 = vcombine.high %v1488, %v1488
      %v1511 = vcombine.high %v1495, %v1495
      %v1512 = vcombine.high %v1502, %v1502
      %v1513 = vcombine.high %v1509, %v1509
      %v1514 = vlaneseq
      %v1515 = vshrl.u32 %v1514, 7
      %v1516 = vsub.s32 0, %v1515
      %v1517 = vrot.slane %v1488, %v1516
      %v1518 = vlaneseq
      %v1519 = vshrl.u32 %v1518, 7
      %v1520 = vsub.s32 0, %v1519
      %v1521 = vrot.slane %v1502, %v1520
      %v1522 = vlaneseq
      %v1523 = vshrl.u32 %v1522, 7
      %v1524 = vsub.s32 0, %v1523
      %v1525 = vrot.slane %v1510, %v1524
      %v1526 = vlaneseq
      %v1527 = vshrl.u32 %v1526, 7
      %v1528 = vsub.s32 0, %v1527
      %v1529 = vrot.slane %v1512, %v1528
      %v1530 = vlaneseq
      %v1531 = vshrl.u32 %v1530, 7
      %v1532 = vsub.s32 0, %v1531
      %v1533 = vrot.slane %v1495, %v1532
      %v1534 = vlaneseq
      %v1535 = vshrl.u32 %v1534, 7
      %v1536 = vsub.s32 0, %v1535
      %v1537 = vrot.slane %v1509, %v1536
      %v1538 = vlaneseq
      %v1539 = vshrl.u32 %v1538, 7
      %v1540 = vsub.s32 0, %v1539
      %v1541 = vrot.slane %v1511, %v1540
      %v1542 = vlaneseq
      %v1543 = vshrl.u32 %v1542, 7
      %v1544 = vsub.s32 0, %v1543
      %v1545 = vrot.slane %v1513, %v1544
      %v1554 = vmul.f32 %v1408, %v1517
      %v1555 = vmul.f32 %v1409, %v1517
      %v1556 = vmul.f32 %v1410, %v1517
      %v1557 = vmul.f32 %v1411, %v1517
      %v1558 = vmul.f32 %v1412, %v1517
      %v1559 = vmul.f32 %v1413, %v1517
      %v1560 = vmul.f32 %v1414, %v1517
      %v1561 = vmul.f32 %v1415, %v1521
      %v1562 = vmul.f32 %v1416, %v1521
      %v1563 = vmul.f32 %v1417, %v1521
      %v1564 = vmul.f32 %v1418, %v1521
      %v1565 = vmul.f32 %v1419, %v1521
      %v1566 = vmul.f32 %v1420, %v1521
      %v1567 = vmul.f32 %v1421, %v1521
      %v1568 = vmul.f32 %v1422, %v1525
      %v1569 = vmul.f32 %v1423, %v1525
      %v1570 = vmul.f32 %v1424, %v1525
      %v1571 = vmul.f32 %v1425, %v1525
      %v1572 = vmul.f32 %v1426, %v1525
      %v1573 = vmul.f32 %v1427, %v1525
      %v1574 = vmul.f32 %v1428, %v1525
      %v1575 = vmul.f32 %v1429, %v1529
      %v1576 = vmul.f32 %v1430, %v1529
      %v1577 = vmul.f32 %v1431, %v1529
      %v1578 = vmul.f32 %v1432, %v1529
      %v1579 = vmul.f32 %v1433, %v1529
      %v1580 = vmul.f32 %v1434, %v1529
      %v1581 = vmul.f32 %v1435, %v1529
      %v1582 = vmul.f32 %v1436, %v1533
      %v1583 = vmul.f32 %v1437, %v1533
      %v1584 = vmul.f32 %v1438, %v1533
      %v1585 = vmul.f32 %v1439, %v1533
      %v1586 = vmul.f32 %v1440, %v1533
      %v1587 = vmul.f32 %v1441, %v1533
      %v1588 = vmul.f32 %v1442, %v1533
      %v1589 = vmul.f32 %v1443, %v1537
      %v1590 = vmul.f32 %v1444, %v1537
      %v1591 = vmul.f32 %v1445, %v1537
      %v1592 = vmul.f32 %v1446, %v1537
      %v1593 = vmul.f32 %v1447, %v1537
      %v1594 = vmul.f32 %v1448, %v1537
      %v1595 = vmul.f32 %v1449, %v1537
      %v1596 = vmul.f32 %v1450, %v1541
      %v1597 = vmul.f32 %v1451, %v1541
      %v1598 = vmul.f32 %v1452, %v1541
      %v1599 = vmul.f32 %v1453, %v1541
      %v1600 = vmul.f32 %v1454, %v1541
      %v1601 = vmul.f32 %v1455, %v1541
      %v1602 = vmul.f32 %v1456, %v1541
      %v1603 = vmul.f32 %v1457, %v1545
      %v1604 = vmul.f32 %v1458, %v1545
      %v1605 = vmul.f32 %v1459, %v1545
      %v1606 = vmul.f32 %v1460, %v1545
      %v1607 = vmul.f32 %v1461, %v1545
      %v1608 = vmul.f32 %v1462, %v1545
      %v1609 = vmul.f32 %v1463, %v1545
      %1610 = vadd.xlane.f32.xlu0 %v1554
      %v1611 = vpop.xlane.xlu0 %1610
      %1612 = vadd.xlane.f32.xlu0 %v1555
      %v1613 = vpop.xlane.xlu0 %1612
      %1614 = vadd.xlane.f32.xlu0 %v1556
      %v1615 = vpop.xlane.xlu0 %1614
      %1616 = vadd.xlane.f32.xlu0 %v1557
      %v1617 = vpop.xlane.xlu0 %1616
      %1618 = vadd.xlane.f32.xlu0 %v1558
      %v1619 = vpop.xlane.xlu0 %1618
      %1620 = vadd.xlane.f32.xlu0 %v1559
      %v1621 = vpop.xlane.xlu0 %1620
      %1622 = vadd.xlane.f32.xlu0 %v1560
      %v1623 = vpop.xlane.xlu0 %1622
      %1624 = vadd.xlane.f32.xlu0 %v1561
      %v1625 = vpop.xlane.xlu0 %1624
      %1626 = vadd.xlane.f32.xlu0 %v1562
      %v1627 = vpop.xlane.xlu0 %1626
      %1628 = vadd.xlane.f32.xlu0 %v1563
      %v1629 = vpop.xlane.xlu0 %1628
      %1630 = vadd.xlane.f32.xlu0 %v1564
      %v1631 = vpop.xlane.xlu0 %1630
      %1632 = vadd.xlane.f32.xlu0 %v1565
      %v1633 = vpop.xlane.xlu0 %1632
      %1634 = vadd.xlane.f32.xlu0 %v1566
      %v1635 = vpop.xlane.xlu0 %1634
      %1636 = vadd.xlane.f32.xlu0 %v1567
      %v1637 = vpop.xlane.xlu0 %1636
      %1638 = vadd.xlane.f32.xlu0 %v1568
      %v1639 = vpop.xlane.xlu0 %1638
      %1640 = vadd.xlane.f32.xlu0 %v1569
      %v1641 = vpop.xlane.xlu0 %1640
      %1642 = vadd.xlane.f32.xlu0 %v1570
      %v1643 = vpop.xlane.xlu0 %1642
      %1644 = vadd.xlane.f32.xlu0 %v1571
      %v1645 = vpop.xlane.xlu0 %1644
      %1646 = vadd.xlane.f32.xlu0 %v1572
      %v1647 = vpop.xlane.xlu0 %1646
      %1648 = vadd.xlane.f32.xlu0 %v1573
      %v1649 = vpop.xlane.xlu0 %1648
      %1650 = vadd.xlane.f32.xlu0 %v1574
      %v1651 = vpop.xlane.xlu0 %1650
      %1652 = vadd.xlane.f32.xlu0 %v1575
      %v1653 = vpop.xlane.xlu0 %1652
      %1654 = vadd.xlane.f32.xlu0 %v1576
      %v1655 = vpop.xlane.xlu0 %1654
      %1656 = vadd.xlane.f32.xlu0 %v1577
      %v1657 = vpop.xlane.xlu0 %1656
      %1658 = vadd.xlane.f32.xlu0 %v1578
      %v1659 = vpop.xlane.xlu0 %1658
      %1660 = vadd.xlane.f32.xlu0 %v1579
      %v1661 = vpop.xlane.xlu0 %1660
      %1662 = vadd.xlane.f32.xlu0 %v1580
      %v1663 = vpop.xlane.xlu0 %1662
      %1664 = vadd.xlane.f32.xlu0 %v1581
      %v1665 = vpop.xlane.xlu0 %1664
      %1666 = vadd.xlane.f32.xlu0 %v1582
      %v1667 = vpop.xlane.xlu0 %1666
      %1668 = vadd.xlane.f32.xlu0 %v1583
      %v1669 = vpop.xlane.xlu0 %1668
      %1670 = vadd.xlane.f32.xlu0 %v1584
      %v1671 = vpop.xlane.xlu0 %1670
      %1672 = vadd.xlane.f32.xlu0 %v1585
      %v1673 = vpop.xlane.xlu0 %1672
      %1674 = vadd.xlane.f32.xlu0 %v1586
      %v1675 = vpop.xlane.xlu0 %1674
      %1676 = vadd.xlane.f32.xlu0 %v1587
      %v1677 = vpop.xlane.xlu0 %1676
      %1678 = vadd.xlane.f32.xlu0 %v1588
      %v1679 = vpop.xlane.xlu0 %1678
      %1680 = vadd.xlane.f32.xlu0 %v1589
      %v1681 = vpop.xlane.xlu0 %1680
      %1682 = vadd.xlane.f32.xlu0 %v1590
      %v1683 = vpop.xlane.xlu0 %1682
      %1684 = vadd.xlane.f32.xlu0 %v1591
      %v1685 = vpop.xlane.xlu0 %1684
      %1686 = vadd.xlane.f32.xlu0 %v1592
      %v1687 = vpop.xlane.xlu0 %1686
      %1688 = vadd.xlane.f32.xlu0 %v1593
      %v1689 = vpop.xlane.xlu0 %1688
      %1690 = vadd.xlane.f32.xlu0 %v1594
      %v1691 = vpop.xlane.xlu0 %1690
      %1692 = vadd.xlane.f32.xlu0 %v1595
      %v1693 = vpop.xlane.xlu0 %1692
      %1694 = vadd.xlane.f32.xlu0 %v1596
      %v1695 = vpop.xlane.xlu0 %1694
      %1696 = vadd.xlane.f32.xlu0 %v1597
      %v1697 = vpop.xlane.xlu0 %1696
      %1698 = vadd.xlane.f32.xlu0 %v1598
      %v1699 = vpop.xlane.xlu0 %1698
      %1700 = vadd.xlane.f32.xlu0 %v1599
      %v1701 = vpop.xlane.xlu0 %1700
      %1702 = vadd.xlane.f32.xlu0 %v1600
      %v1703 = vpop.xlane.xlu0 %1702
      %1704 = vadd.xlane.f32.xlu0 %v1601
      %v1705 = vpop.xlane.xlu0 %1704
      %1706 = vadd.xlane.f32.xlu0 %v1602
      %v1707 = vpop.xlane.xlu0 %1706
      %1708 = vadd.xlane.f32.xlu0 %v1603
      %v1709 = vpop.xlane.xlu0 %1708
      %1710 = vadd.xlane.f32.xlu0 %v1604
      %v1711 = vpop.xlane.xlu0 %1710
      %1712 = vadd.xlane.f32.xlu0 %v1605
      %v1713 = vpop.xlane.xlu0 %1712
      %1714 = vadd.xlane.f32.xlu0 %v1606
      %v1715 = vpop.xlane.xlu0 %1714
      %1716 = vadd.xlane.f32.xlu0 %v1607
      %v1717 = vpop.xlane.xlu0 %1716
      %1718 = vadd.xlane.f32.xlu0 %v1608
      %v1719 = vpop.xlane.xlu0 %1718
      %1720 = vadd.xlane.f32.xlu0 %v1609
      %v1721 = vpop.xlane.xlu0 %1720
      %vm1722 = vcmp.gt.f32.partialorder %v791, 0.0
      %vm1723 = vcmp.gt.f32.partialorder %v792, 0.0
      %vm1724 = vcmp.gt.f32.partialorder %v793, 0.0
      %vm1725 = vcmp.gt.f32.partialorder %v794, 0.0
      %vm1726 = vcmp.gt.f32.partialorder %v795, 0.0
      %vm1727 = vcmp.gt.f32.partialorder %v796, 0.0
      %vm1728 = vcmp.gt.f32.partialorder %v797, 0.0
      %vm1729 = vcmp.gt.f32.partialorder %v798, 0.0
      %v1786 = vlaneseq
      %v1787 = vand.u32 %v1786, 127
      %v1788 = vlaneseq
      %v1789 = vshrl.u32 %v1788, 7
      %v1790 = vsub.s32 %v1787, %v1789
      %v1791 = vrot.slane %v1611, %v1790
      %v1792 = vlaneseq
      %v1793 = vshrl.u32 %v1792, 7
      %v1794 = vsub.s32 %v1787, %v1793
      %v1795 = vrot.slane %v1613, %v1794
      %v1796 = vlaneseq
      %v1797 = vshrl.u32 %v1796, 7
      %v1798 = vsub.s32 %v1787, %v1797
      %v1799 = vrot.slane %v1615, %v1798
      %v1800 = vlaneseq
      %v1801 = vshrl.u32 %v1800, 7
      %v1802 = vsub.s32 %v1787, %v1801
      %v1803 = vrot.slane %v1617, %v1802
      %v1804 = vlaneseq
      %v1805 = vshrl.u32 %v1804, 7
      %v1806 = vsub.s32 %v1787, %v1805
      %v1807 = vrot.slane %v1619, %v1806
      %v1808 = vlaneseq
      %v1809 = vshrl.u32 %v1808, 7
      %v1810 = vsub.s32 %v1787, %v1809
      %v1811 = vrot.slane %v1621, %v1810
      %v1812 = vlaneseq
      %v1813 = vshrl.u32 %v1812, 7
      %v1814 = vsub.s32 %v1787, %v1813
      %v1815 = vrot.slane %v1623, %v1814
      %v1816 = vlaneseq
      %v1817 = vshrl.u32 %v1816, 7
      %v1818 = vsub.s32 %v1787, %v1817
      %v1819 = vrot.slane %v1625, %v1818
      %v1820 = vlaneseq
      %v1821 = vshrl.u32 %v1820, 7
      %v1822 = vsub.s32 %v1787, %v1821
      %v1823 = vrot.slane %v1627, %v1822
      %v1824 = vlaneseq
      %v1825 = vshrl.u32 %v1824, 7
      %v1826 = vsub.s32 %v1787, %v1825
      %v1827 = vrot.slane %v1629, %v1826
      %v1828 = vlaneseq
      %v1829 = vshrl.u32 %v1828, 7
      %v1830 = vsub.s32 %v1787, %v1829
      %v1831 = vrot.slane %v1631, %v1830
      %v1832 = vlaneseq
      %v1833 = vshrl.u32 %v1832, 7
      %v1834 = vsub.s32 %v1787, %v1833
      %v1835 = vrot.slane %v1633, %v1834
      %v1836 = vlaneseq
      %v1837 = vshrl.u32 %v1836, 7
      %v1838 = vsub.s32 %v1787, %v1837
      %v1839 = vrot.slane %v1635, %v1838
      %v1840 = vlaneseq
      %v1841 = vshrl.u32 %v1840, 7
      %v1842 = vsub.s32 %v1787, %v1841
      %v1843 = vrot.slane %v1637, %v1842
      %v1844 = vlaneseq
      %v1845 = vshrl.u32 %v1844, 7
      %v1846 = vsub.s32 %v1787, %v1845
      %v1847 = vrot.slane %v1639, %v1846
      %v1848 = vlaneseq
      %v1849 = vshrl.u32 %v1848, 7
      %v1850 = vsub.s32 %v1787, %v1849
      %v1851 = vrot.slane %v1641, %v1850
      %v1852 = vlaneseq
      %v1853 = vshrl.u32 %v1852, 7
      %v1854 = vsub.s32 %v1787, %v1853
      %v1855 = vrot.slane %v1643, %v1854
      %v1856 = vlaneseq
      %v1857 = vshrl.u32 %v1856, 7
      %v1858 = vsub.s32 %v1787, %v1857
      %v1859 = vrot.slane %v1645, %v1858
      %v1860 = vlaneseq
      %v1861 = vshrl.u32 %v1860, 7
      %v1862 = vsub.s32 %v1787, %v1861
      %v1863 = vrot.slane %v1647, %v1862
      %v1864 = vlaneseq
      %v1865 = vshrl.u32 %v1864, 7
      %v1866 = vsub.s32 %v1787, %v1865
      %v1867 = vrot.slane %v1649, %v1866
      %v1868 = vlaneseq
      %v1869 = vshrl.u32 %v1868, 7
      %v1870 = vsub.s32 %v1787, %v1869
      %v1871 = vrot.slane %v1651, %v1870
      %v1872 = vlaneseq
      %v1873 = vshrl.u32 %v1872, 7
      %v1874 = vsub.s32 %v1787, %v1873
      %v1875 = vrot.slane %v1653, %v1874
      %v1876 = vlaneseq
      %v1877 = vshrl.u32 %v1876, 7
      %v1878 = vsub.s32 %v1787, %v1877
      %v1879 = vrot.slane %v1655, %v1878
      %v1880 = vlaneseq
      %v1881 = vshrl.u32 %v1880, 7
      %v1882 = vsub.s32 %v1787, %v1881
      %v1883 = vrot.slane %v1657, %v1882
      %v1884 = vlaneseq
      %v1885 = vshrl.u32 %v1884, 7
      %v1886 = vsub.s32 %v1787, %v1885
      %v1887 = vrot.slane %v1659, %v1886
      %v1888 = vlaneseq
      %v1889 = vshrl.u32 %v1888, 7
      %v1890 = vsub.s32 %v1787, %v1889
      %v1891 = vrot.slane %v1661, %v1890
      %v1892 = vlaneseq
      %v1893 = vshrl.u32 %v1892, 7
      %v1894 = vsub.s32 %v1787, %v1893
      %v1895 = vrot.slane %v1663, %v1894
      %v1896 = vlaneseq
      %v1897 = vshrl.u32 %v1896, 7
      %v1898 = vsub.s32 %v1787, %v1897
      %v1899 = vrot.slane %v1665, %v1898
      %v1900 = vlaneseq
      %v1901 = vshrl.u32 %v1900, 7
      %v1902 = vsub.s32 %v1787, %v1901
      %v1903 = vrot.slane %v1667, %v1902
      %v1904 = vlaneseq
      %v1905 = vshrl.u32 %v1904, 7
      %v1906 = vsub.s32 %v1787, %v1905
      %v1907 = vrot.slane %v1669, %v1906
      %v1908 = vlaneseq
      %v1909 = vshrl.u32 %v1908, 7
      %v1910 = vsub.s32 %v1787, %v1909
      %v1911 = vrot.slane %v1671, %v1910
      %v1912 = vlaneseq
      %v1913 = vshrl.u32 %v1912, 7
      %v1914 = vsub.s32 %v1787, %v1913
      %v1915 = vrot.slane %v1673, %v1914
      %v1916 = vlaneseq
      %v1917 = vshrl.u32 %v1916, 7
      %v1918 = vsub.s32 %v1787, %v1917
      %v1919 = vrot.slane %v1675, %v1918
      %v1920 = vlaneseq
      %v1921 = vshrl.u32 %v1920, 7
      %v1922 = vsub.s32 %v1787, %v1921
      %v1923 = vrot.slane %v1677, %v1922
      %v1924 = vlaneseq
      %v1925 = vshrl.u32 %v1924, 7
      %v1926 = vsub.s32 %v1787, %v1925
      %v1927 = vrot.slane %v1679, %v1926
      %v1928 = vlaneseq
      %v1929 = vshrl.u32 %v1928, 7
      %v1930 = vsub.s32 %v1787, %v1929
      %v1931 = vrot.slane %v1681, %v1930
      %v1932 = vlaneseq
      %v1933 = vshrl.u32 %v1932, 7
      %v1934 = vsub.s32 %v1787, %v1933
      %v1935 = vrot.slane %v1683, %v1934
      %v1936 = vlaneseq
      %v1937 = vshrl.u32 %v1936, 7
      %v1938 = vsub.s32 %v1787, %v1937
      %v1939 = vrot.slane %v1685, %v1938
      %v1940 = vlaneseq
      %v1941 = vshrl.u32 %v1940, 7
      %v1942 = vsub.s32 %v1787, %v1941
      %v1943 = vrot.slane %v1687, %v1942
      %v1944 = vlaneseq
      %v1945 = vshrl.u32 %v1944, 7
      %v1946 = vsub.s32 %v1787, %v1945
      %v1947 = vrot.slane %v1689, %v1946
      %v1948 = vlaneseq
      %v1949 = vshrl.u32 %v1948, 7
      %v1950 = vsub.s32 %v1787, %v1949
      %v1951 = vrot.slane %v1691, %v1950
      %v1952 = vlaneseq
      %v1953 = vshrl.u32 %v1952, 7
      %v1954 = vsub.s32 %v1787, %v1953
      %v1955 = vrot.slane %v1693, %v1954
      %v1956 = vlaneseq
      %v1957 = vshrl.u32 %v1956, 7
      %v1958 = vsub.s32 %v1787, %v1957
      %v1959 = vrot.slane %v1695, %v1958
      %v1960 = vlaneseq
      %v1961 = vshrl.u32 %v1960, 7
      %v1962 = vsub.s32 %v1787, %v1961
      %v1963 = vrot.slane %v1697, %v1962
      %v1964 = vlaneseq
      %v1965 = vshrl.u32 %v1964, 7
      %v1966 = vsub.s32 %v1787, %v1965
      %v1967 = vrot.slane %v1699, %v1966
      %v1968 = vlaneseq
      %v1969 = vshrl.u32 %v1968, 7
      %v1970 = vsub.s32 %v1787, %v1969
      %v1971 = vrot.slane %v1701, %v1970
      %v1972 = vlaneseq
      %v1973 = vshrl.u32 %v1972, 7
      %v1974 = vsub.s32 %v1787, %v1973
      %v1975 = vrot.slane %v1703, %v1974
      %v1976 = vlaneseq
      %v1977 = vshrl.u32 %v1976, 7
      %v1978 = vsub.s32 %v1787, %v1977
      %v1979 = vrot.slane %v1705, %v1978
      %v1980 = vlaneseq
      %v1981 = vshrl.u32 %v1980, 7
      %v1982 = vsub.s32 %v1787, %v1981
      %v1983 = vrot.slane %v1707, %v1982
      %v1984 = vlaneseq
      %v1985 = vshrl.u32 %v1984, 7
      %v1986 = vsub.s32 %v1787, %v1985
      %v1987 = vrot.slane %v1709, %v1986
      %v1988 = vlaneseq
      %v1989 = vshrl.u32 %v1988, 7
      %v1990 = vsub.s32 %v1787, %v1989
      %v1991 = vrot.slane %v1711, %v1990
      %v1992 = vlaneseq
      %v1993 = vshrl.u32 %v1992, 7
      %v1994 = vsub.s32 %v1787, %v1993
      %v1995 = vrot.slane %v1713, %v1994
      %v1996 = vlaneseq
      %v1997 = vshrl.u32 %v1996, 7
      %v1998 = vsub.s32 %v1787, %v1997
      %v1999 = vrot.slane %v1715, %v1998
      %v2000 = vlaneseq
      %v2001 = vshrl.u32 %v2000, 7
      %v2002 = vsub.s32 %v1787, %v2001
      %v2003 = vrot.slane %v1717, %v2002
      %v2004 = vlaneseq
      %v2005 = vshrl.u32 %v2004, 7
      %v2006 = vsub.s32 %v1787, %v2005
      %v2007 = vrot.slane %v1719, %v2006
      %v2008 = vlaneseq
      %v2009 = vshrl.u32 %v2008, 7
      %v2010 = vsub.s32 %v1787, %v2009
      %v2011 = vrot.slane %v1721, %v2010
      %vm2012 = vcmask 1041409
      %v2013 = vsel %vm2012, %v1795, %v1791
      %vm2014 = vcmask 1042434
      %v2015 = vsel %vm2014, %v1799, %v2013
      %vm2016 = vcmask 1043459
      %v2017 = vsel %vm2016, %v1803, %v2015
      %vm2018 = vcmask 1044484
      %v2019 = vsel %vm2018, %v1807, %v2017
      %vm2020 = vcmask 1045509
      %v2021 = vsel %vm2020, %v1811, %v2019
      %vm2022 = vcmask 1046534
      %v2023 = vsel %vm2022, %v1815, %v2021
      %v2024 = vsel %vm2012, %v1823, %v1819
      %v2025 = vsel %vm2014, %v1827, %v2024
      %v2026 = vsel %vm2016, %v1831, %v2025
      %v2027 = vsel %vm2018, %v1835, %v2026
      %v2028 = vsel %vm2020, %v1839, %v2027
      %v2029 = vsel %vm2022, %v1843, %v2028
      %v2030 = vsel %vm2012, %v1851, %v1847
      %v2031 = vsel %vm2014, %v1855, %v2030
      %v2032 = vsel %vm2016, %v1859, %v2031
      %v2033 = vsel %vm2018, %v1863, %v2032
      %v2034 = vsel %vm2020, %v1867, %v2033
      %v2035 = vsel %vm2022, %v1871, %v2034
      %v2036 = vsel %vm2012, %v1879, %v1875
      %v2037 = vsel %vm2014, %v1883, %v2036
      %v2038 = vsel %vm2016, %v1887, %v2037
      %v2039 = vsel %vm2018, %v1891, %v2038
      %v2040 = vsel %vm2020, %v1895, %v2039
      %v2041 = vsel %vm2022, %v1899, %v2040
      %v2042 = vsel %vm2012, %v1907, %v1903
      %v2043 = vsel %vm2014, %v1911, %v2042
      %v2044 = vsel %vm2016, %v1915, %v2043
      %v2045 = vsel %vm2018, %v1919, %v2044
      %v2046 = vsel %vm2020, %v1923, %v2045
      %v2047 = vsel %vm2022, %v1927, %v2046
      %v2048 = vsel %vm2012, %v1935, %v1931
      %v2049 = vsel %vm2014, %v1939, %v2048
      %v2050 = vsel %vm2016, %v1943, %v2049
      %v2051 = vsel %vm2018, %v1947, %v2050
      %v2052 = vsel %vm2020, %v1951, %v2051
      %v2053 = vsel %vm2022, %v1955, %v2052
      %v2054 = vsel %vm2012, %v1963, %v1959
      %v2055 = vsel %vm2014, %v1967, %v2054
      %v2056 = vsel %vm2016, %v1971, %v2055
      %v2057 = vsel %vm2018, %v1975, %v2056
      %v2058 = vsel %vm2020, %v1979, %v2057
      %v2059 = vsel %vm2022, %v1983, %v2058
      %v2060 = vsel %vm2012, %v1991, %v1987
      %v2061 = vsel %vm2014, %v1995, %v2060
      %v2062 = vsel %vm2016, %v1999, %v2061
      %v2063 = vsel %vm2018, %v2003, %v2062
      %v2064 = vsel %vm2020, %v2007, %v2063
      %v2065 = vsel %vm2022, %v2011, %v2064
      %v2074 = vsel %vm1722, %v2023, -1e+30
      %v2075 = vsel %vm1723, %v2029, -1e+30
      %v2076 = vsel %vm1724, %v2035, -1e+30
      %v2077 = vsel %vm1725, %v2041, -1e+30
      %v2078 = vsel %vm1726, %v2047, -1e+30
      %v2079 = vsel %vm1727, %v2053, -1e+30
      %v2080 = vsel %vm1728, %v2059, -1e+30
      %v2081 = vsel %vm1729, %v2065, -1e+30
      %vm2082 = vcmask 63488
      %v2083 = vsel %vm2082, %v2074, -inf
      %2084 = vmax.xlane.f32.xlu0 %v2083
      %v2085 = vpop.xlane.xlu0 %2084
      %v2086 = vsel %vm2082, %v2075, -inf
      %2087 = vmax.xlane.f32.xlu0 %v2086
      %v2088 = vpop.xlane.xlu0 %2087
      %v2089 = vsel %vm2082, %v2076, -inf
      %2090 = vmax.xlane.f32.xlu0 %v2089
      %v2091 = vpop.xlane.xlu0 %2090
      %v2092 = vsel %vm2082, %v2077, -inf
      %2093 = vmax.xlane.f32.xlu0 %v2092
      %v2094 = vpop.xlane.xlu0 %2093
      %v2095 = vsel %vm2082, %v2078, -inf
      %2096 = vmax.xlane.f32.xlu0 %v2095
      %v2097 = vpop.xlane.xlu0 %2096
      %v2098 = vsel %vm2082, %v2079, -inf
      %2099 = vmax.xlane.f32.xlu0 %v2098
      %v2100 = vpop.xlane.xlu0 %2099
      %v2101 = vsel %vm2082, %v2080, -inf
      %2102 = vmax.xlane.f32.xlu0 %v2101
      %v2103 = vpop.xlane.xlu0 %2102
      %v2104 = vsel %vm2082, %v2081, -inf
      %2105 = vmax.xlane.f32.xlu0 %v2104
      %v2106 = vpop.xlane.xlu0 %2105
      %v2107 = vsub.f32 %v2074, %v2085
      %v2108 = vsub.f32 %v2075, %v2088
      %v2109 = vsub.f32 %v2076, %v2091
      %v2110 = vsub.f32 %v2077, %v2094
      %v2111 = vsub.f32 %v2078, %v2097
      %v2112 = vsub.f32 %v2079, %v2100
      %v2113 = vsub.f32 %v2080, %v2103
      %v2114 = vsub.f32 %v2081, %v2106
      %v2115 = vmul.f32 %v2107, 1.442695
      %v2116 = vpow.pop %v2115
      %v2117 = vmul.f32 %v2108, 1.442695
      %v2118 = vpow.pop %v2117
      %v2119 = vmul.f32 %v2109, 1.442695
      %v2120 = vpow.pop %v2119
      %v2121 = vmul.f32 %v2110, 1.442695
      %v2122 = vpow.pop %v2121
      %v2123 = vmul.f32 %v2111, 1.442695
      %v2124 = vpow.pop %v2123
      %v2125 = vmul.f32 %v2112, 1.442695
      %v2126 = vpow.pop %v2125
      %v2127 = vmul.f32 %v2113, 1.442695
      %v2128 = vpow.pop %v2127
      %v2129 = vmul.f32 %v2114, 1.442695
      %v2130 = vpow.pop %v2129
      %v2131 = vsel %vm2082, %v2116, 0.0
      %2132 = vadd.xlane.f32.xlu0 %v2131
      %v2133 = vpop.xlane.xlu0 %2132
      %v2134 = vsel %vm2082, %v2118, 0.0
      %2135 = vadd.xlane.f32.xlu0 %v2134
      %v2136 = vpop.xlane.xlu0 %2135
      %v2137 = vsel %vm2082, %v2120, 0.0
      %2138 = vadd.xlane.f32.xlu0 %v2137
      %v2139 = vpop.xlane.xlu0 %2138
      %v2140 = vsel %vm2082, %v2122, 0.0
      %2141 = vadd.xlane.f32.xlu0 %v2140
      %v2142 = vpop.xlane.xlu0 %2141
      %v2143 = vsel %vm2082, %v2124, 0.0
      %2144 = vadd.xlane.f32.xlu0 %v2143
      %v2145 = vpop.xlane.xlu0 %2144
      %v2146 = vsel %vm2082, %v2126, 0.0
      %2147 = vadd.xlane.f32.xlu0 %v2146
      %v2148 = vpop.xlane.xlu0 %2147
      %v2149 = vsel %vm2082, %v2128, 0.0
      %2150 = vadd.xlane.f32.xlu0 %v2149
      %v2151 = vpop.xlane.xlu0 %2150
      %v2152 = vsel %vm2082, %v2130, 0.0
      %2153 = vadd.xlane.f32.xlu0 %v2152
      %v2154 = vpop.xlane.xlu0 %2153
      %v2155 = vrcp.pop %v2133
      %v2156 = vmul.f32 %v2116, %v2155
      %v2157 = vrcp.pop %v2136
      %v2158 = vmul.f32 %v2118, %v2157
      %v2159 = vrcp.pop %v2139
      %v2160 = vmul.f32 %v2120, %v2159
      %v2161 = vrcp.pop %v2142
      %v2162 = vmul.f32 %v2122, %v2161
      %v2163 = vrcp.pop %v2145
      %v2164 = vmul.f32 %v2124, %v2163
      %v2165 = vrcp.pop %v2148
      %v2166 = vmul.f32 %v2126, %v2165
      %v2167 = vrcp.pop %v2151
      %v2168 = vmul.f32 %v2128, %v2167
      %v2169 = vrcp.pop %v2154
      %v2170 = vmul.f32 %v2130, %v2169
      %v2171 = vlaneseq
      %v2172 = vshrl.u32 %v2171, 7
      %v2173 = vsub.s32 0, %v2172
      %v2174 = vrot.slane %v2156, %v2173
      %2176 = vbcast.lane.b32.xlu0 %v2174, 256
      %v2177 = vpop.permute.xlu0 %2176
      %v2178 = vlaneseq
      %v2179 = vshrl.u32 %v2178, 7
      %v2180 = vsub.s32 1, %v2179
      %v2181 = vrot.slane %v2156, %v2180
      %2183 = vbcast.lane.b32.xlu0 %v2181, 256
      %v2184 = vpop.permute.xlu0 %2183
      %v2185 = vlaneseq
      %v2186 = vshrl.u32 %v2185, 7
      %v2187 = vsub.s32 2, %v2186
      %v2188 = vrot.slane %v2156, %v2187
      %2190 = vbcast.lane.b32.xlu0 %v2188, 256
      %v2191 = vpop.permute.xlu0 %2190
      %v2192 = vlaneseq
      %v2193 = vshrl.u32 %v2192, 7
      %v2194 = vsub.s32 3, %v2193
      %v2195 = vrot.slane %v2156, %v2194
      %2197 = vbcast.lane.b32.xlu0 %v2195, 256
      %v2198 = vpop.permute.xlu0 %2197
      %v2199 = vlaneseq
      %v2200 = vshrl.u32 %v2199, 7
      %v2201 = vsub.s32 4, %v2200
      %v2202 = vrot.slane %v2156, %v2201
      %2204 = vbcast.lane.b32.xlu0 %v2202, 256
      %v2205 = vpop.permute.xlu0 %2204
      %v2206 = vlaneseq
      %v2207 = vshrl.u32 %v2206, 7
      %v2208 = vsub.s32 5, %v2207
      %v2209 = vrot.slane %v2156, %v2208
      %2211 = vbcast.lane.b32.xlu0 %v2209, 256
      %v2212 = vpop.permute.xlu0 %2211
      %v2213 = vlaneseq
      %v2214 = vshrl.u32 %v2213, 7
      %v2215 = vsub.s32 6, %v2214
      %v2216 = vrot.slane %v2156, %v2215
      %2218 = vbcast.lane.b32.xlu0 %v2216, 256
      %v2219 = vpop.permute.xlu0 %2218
      %v2220 = vlaneseq
      %v2221 = vshrl.u32 %v2220, 7
      %v2222 = vsub.s32 0, %v2221
      %v2223 = vrot.slane %v2158, %v2222
      %2225 = vbcast.lane.b32.xlu0 %v2223, 256
      %v2226 = vpop.permute.xlu0 %2225
      %v2227 = vlaneseq
      %v2228 = vshrl.u32 %v2227, 7
      %v2229 = vsub.s32 1, %v2228
      %v2230 = vrot.slane %v2158, %v2229
      %2232 = vbcast.lane.b32.xlu0 %v2230, 256
      %v2233 = vpop.permute.xlu0 %2232
      %v2234 = vlaneseq
      %v2235 = vshrl.u32 %v2234, 7
      %v2236 = vsub.s32 2, %v2235
      %v2237 = vrot.slane %v2158, %v2236
      %2239 = vbcast.lane.b32.xlu0 %v2237, 256
      %v2240 = vpop.permute.xlu0 %2239
      %v2241 = vlaneseq
      %v2242 = vshrl.u32 %v2241, 7
      %v2243 = vsub.s32 3, %v2242
      %v2244 = vrot.slane %v2158, %v2243
      %2246 = vbcast.lane.b32.xlu0 %v2244, 256
      %v2247 = vpop.permute.xlu0 %2246
      %v2248 = vlaneseq
      %v2249 = vshrl.u32 %v2248, 7
      %v2250 = vsub.s32 4, %v2249
      %v2251 = vrot.slane %v2158, %v2250
      %2253 = vbcast.lane.b32.xlu0 %v2251, 256
      %v2254 = vpop.permute.xlu0 %2253
      %v2255 = vlaneseq
      %v2256 = vshrl.u32 %v2255, 7
      %v2257 = vsub.s32 5, %v2256
      %v2258 = vrot.slane %v2158, %v2257
      %2260 = vbcast.lane.b32.xlu0 %v2258, 256
      %v2261 = vpop.permute.xlu0 %2260
      %v2262 = vlaneseq
      %v2263 = vshrl.u32 %v2262, 7
      %v2264 = vsub.s32 6, %v2263
      %v2265 = vrot.slane %v2158, %v2264
      %2267 = vbcast.lane.b32.xlu0 %v2265, 256
      %v2268 = vpop.permute.xlu0 %2267
      %v2269 = vlaneseq
      %v2270 = vshrl.u32 %v2269, 7
      %v2271 = vsub.s32 0, %v2270
      %v2272 = vrot.slane %v2160, %v2271
      %2274 = vbcast.lane.b32.xlu0 %v2272, 256
      %v2275 = vpop.permute.xlu0 %2274
      %v2276 = vlaneseq
      %v2277 = vshrl.u32 %v2276, 7
      %v2278 = vsub.s32 1, %v2277
      %v2279 = vrot.slane %v2160, %v2278
      %2281 = vbcast.lane.b32.xlu0 %v2279, 256
      %v2282 = vpop.permute.xlu0 %2281
      %v2283 = vlaneseq
      %v2284 = vshrl.u32 %v2283, 7
      %v2285 = vsub.s32 2, %v2284
      %v2286 = vrot.slane %v2160, %v2285
      %2288 = vbcast.lane.b32.xlu0 %v2286, 256
      %v2289 = vpop.permute.xlu0 %2288
      %v2290 = vlaneseq
      %v2291 = vshrl.u32 %v2290, 7
      %v2292 = vsub.s32 3, %v2291
      %v2293 = vrot.slane %v2160, %v2292
      %2295 = vbcast.lane.b32.xlu0 %v2293, 256
      %v2296 = vpop.permute.xlu0 %2295
      %v2297 = vlaneseq
      %v2298 = vshrl.u32 %v2297, 7
      %v2299 = vsub.s32 4, %v2298
      %v2300 = vrot.slane %v2160, %v2299
      %2302 = vbcast.lane.b32.xlu0 %v2300, 256
      %v2303 = vpop.permute.xlu0 %2302
      %v2304 = vlaneseq
      %v2305 = vshrl.u32 %v2304, 7
      %v2306 = vsub.s32 5, %v2305
      %v2307 = vrot.slane %v2160, %v2306
      %2309 = vbcast.lane.b32.xlu0 %v2307, 256
      %v2310 = vpop.permute.xlu0 %2309
      %v2311 = vlaneseq
      %v2312 = vshrl.u32 %v2311, 7
      %v2313 = vsub.s32 6, %v2312
      %v2314 = vrot.slane %v2160, %v2313
      %2316 = vbcast.lane.b32.xlu0 %v2314, 256
      %v2317 = vpop.permute.xlu0 %2316
      %v2318 = vlaneseq
      %v2319 = vshrl.u32 %v2318, 7
      %v2320 = vsub.s32 0, %v2319
      %v2321 = vrot.slane %v2162, %v2320
      %2323 = vbcast.lane.b32.xlu0 %v2321, 256
      %v2324 = vpop.permute.xlu0 %2323
      %v2325 = vlaneseq
      %v2326 = vshrl.u32 %v2325, 7
      %v2327 = vsub.s32 1, %v2326
      %v2328 = vrot.slane %v2162, %v2327
      %2330 = vbcast.lane.b32.xlu0 %v2328, 256
      %v2331 = vpop.permute.xlu0 %2330
      %v2332 = vlaneseq
      %v2333 = vshrl.u32 %v2332, 7
      %v2334 = vsub.s32 2, %v2333
      %v2335 = vrot.slane %v2162, %v2334
      %2337 = vbcast.lane.b32.xlu0 %v2335, 256
      %v2338 = vpop.permute.xlu0 %2337
      %v2339 = vlaneseq
      %v2340 = vshrl.u32 %v2339, 7
      %v2341 = vsub.s32 3, %v2340
      %v2342 = vrot.slane %v2162, %v2341
      %2344 = vbcast.lane.b32.xlu0 %v2342, 256
      %v2345 = vpop.permute.xlu0 %2344
      %v2346 = vlaneseq
      %v2347 = vshrl.u32 %v2346, 7
      %v2348 = vsub.s32 4, %v2347
      %v2349 = vrot.slane %v2162, %v2348
      %2351 = vbcast.lane.b32.xlu0 %v2349, 256
      %v2352 = vpop.permute.xlu0 %2351
      %v2353 = vlaneseq
      %v2354 = vshrl.u32 %v2353, 7
      %v2355 = vsub.s32 5, %v2354
      %v2356 = vrot.slane %v2162, %v2355
      %2358 = vbcast.lane.b32.xlu0 %v2356, 256
      %v2359 = vpop.permute.xlu0 %2358
      %v2360 = vlaneseq
      %v2361 = vshrl.u32 %v2360, 7
      %v2362 = vsub.s32 6, %v2361
      %v2363 = vrot.slane %v2162, %v2362
      %2365 = vbcast.lane.b32.xlu0 %v2363, 256
      %v2366 = vpop.permute.xlu0 %2365
      %v2367 = vlaneseq
      %v2368 = vshrl.u32 %v2367, 7
      %v2369 = vsub.s32 0, %v2368
      %v2370 = vrot.slane %v2164, %v2369
      %2372 = vbcast.lane.b32.xlu0 %v2370, 256
      %v2373 = vpop.permute.xlu0 %2372
      %v2374 = vlaneseq
      %v2375 = vshrl.u32 %v2374, 7
      %v2376 = vsub.s32 1, %v2375
      %v2377 = vrot.slane %v2164, %v2376
      %2379 = vbcast.lane.b32.xlu0 %v2377, 256
      %v2380 = vpop.permute.xlu0 %2379
      %v2381 = vlaneseq
      %v2382 = vshrl.u32 %v2381, 7
      %v2383 = vsub.s32 2, %v2382
      %v2384 = vrot.slane %v2164, %v2383
      %2386 = vbcast.lane.b32.xlu0 %v2384, 256
      %v2387 = vpop.permute.xlu0 %2386
      %v2388 = vlaneseq
      %v2389 = vshrl.u32 %v2388, 7
      %v2390 = vsub.s32 3, %v2389
      %v2391 = vrot.slane %v2164, %v2390
      %2393 = vbcast.lane.b32.xlu0 %v2391, 256
      %v2394 = vpop.permute.xlu0 %2393
      %v2395 = vlaneseq
      %v2396 = vshrl.u32 %v2395, 7
      %v2397 = vsub.s32 4, %v2396
      %v2398 = vrot.slane %v2164, %v2397
      %2400 = vbcast.lane.b32.xlu0 %v2398, 256
      %v2401 = vpop.permute.xlu0 %2400
      %v2402 = vlaneseq
      %v2403 = vshrl.u32 %v2402, 7
      %v2404 = vsub.s32 5, %v2403
      %v2405 = vrot.slane %v2164, %v2404
      %2407 = vbcast.lane.b32.xlu0 %v2405, 256
      %v2408 = vpop.permute.xlu0 %2407
      %v2409 = vlaneseq
      %v2410 = vshrl.u32 %v2409, 7
      %v2411 = vsub.s32 6, %v2410
      %v2412 = vrot.slane %v2164, %v2411
      %2414 = vbcast.lane.b32.xlu0 %v2412, 256
      %v2415 = vpop.permute.xlu0 %2414
      %v2416 = vlaneseq
      %v2417 = vshrl.u32 %v2416, 7
      %v2418 = vsub.s32 0, %v2417
      %v2419 = vrot.slane %v2166, %v2418
      %2421 = vbcast.lane.b32.xlu0 %v2419, 256
      %v2422 = vpop.permute.xlu0 %2421
      %v2423 = vlaneseq
      %v2424 = vshrl.u32 %v2423, 7
      %v2425 = vsub.s32 1, %v2424
      %v2426 = vrot.slane %v2166, %v2425
      %2428 = vbcast.lane.b32.xlu0 %v2426, 256
      %v2429 = vpop.permute.xlu0 %2428
      %v2430 = vlaneseq
      %v2431 = vshrl.u32 %v2430, 7
      %v2432 = vsub.s32 2, %v2431
      %v2433 = vrot.slane %v2166, %v2432
      %2435 = vbcast.lane.b32.xlu0 %v2433, 256
      %v2436 = vpop.permute.xlu0 %2435
      %v2437 = vlaneseq
      %v2438 = vshrl.u32 %v2437, 7
      %v2439 = vsub.s32 3, %v2438
      %v2440 = vrot.slane %v2166, %v2439
      %2442 = vbcast.lane.b32.xlu0 %v2440, 256
      %v2443 = vpop.permute.xlu0 %2442
      %v2444 = vlaneseq
      %v2445 = vshrl.u32 %v2444, 7
      %v2446 = vsub.s32 4, %v2445
      %v2447 = vrot.slane %v2166, %v2446
      %2449 = vbcast.lane.b32.xlu0 %v2447, 256
      %v2450 = vpop.permute.xlu0 %2449
      %v2451 = vlaneseq
      %v2452 = vshrl.u32 %v2451, 7
      %v2453 = vsub.s32 5, %v2452
      %v2454 = vrot.slane %v2166, %v2453
      %2456 = vbcast.lane.b32.xlu0 %v2454, 256
      %v2457 = vpop.permute.xlu0 %2456
      %v2458 = vlaneseq
      %v2459 = vshrl.u32 %v2458, 7
      %v2460 = vsub.s32 6, %v2459
      %v2461 = vrot.slane %v2166, %v2460
      %2463 = vbcast.lane.b32.xlu0 %v2461, 256
      %v2464 = vpop.permute.xlu0 %2463
      %v2465 = vlaneseq
      %v2466 = vshrl.u32 %v2465, 7
      %v2467 = vsub.s32 0, %v2466
      %v2468 = vrot.slane %v2168, %v2467
      %2470 = vbcast.lane.b32.xlu0 %v2468, 256
      %v2471 = vpop.permute.xlu0 %2470
      %v2472 = vlaneseq
      %v2473 = vshrl.u32 %v2472, 7
      %v2474 = vsub.s32 1, %v2473
      %v2475 = vrot.slane %v2168, %v2474
      %2477 = vbcast.lane.b32.xlu0 %v2475, 256
      %v2478 = vpop.permute.xlu0 %2477
      %v2479 = vlaneseq
      %v2480 = vshrl.u32 %v2479, 7
      %v2481 = vsub.s32 2, %v2480
      %v2482 = vrot.slane %v2168, %v2481
      %2484 = vbcast.lane.b32.xlu0 %v2482, 256
      %v2485 = vpop.permute.xlu0 %2484
      %v2486 = vlaneseq
      %v2487 = vshrl.u32 %v2486, 7
      %v2488 = vsub.s32 3, %v2487
      %v2489 = vrot.slane %v2168, %v2488
      %2491 = vbcast.lane.b32.xlu0 %v2489, 256
      %v2492 = vpop.permute.xlu0 %2491
      %v2493 = vlaneseq
      %v2494 = vshrl.u32 %v2493, 7
      %v2495 = vsub.s32 4, %v2494
      %v2496 = vrot.slane %v2168, %v2495
      %2498 = vbcast.lane.b32.xlu0 %v2496, 256
      %v2499 = vpop.permute.xlu0 %2498
      %v2500 = vlaneseq
      %v2501 = vshrl.u32 %v2500, 7
      %v2502 = vsub.s32 5, %v2501
      %v2503 = vrot.slane %v2168, %v2502
      %2505 = vbcast.lane.b32.xlu0 %v2503, 256
      %v2506 = vpop.permute.xlu0 %2505
      %v2507 = vlaneseq
      %v2508 = vshrl.u32 %v2507, 7
      %v2509 = vsub.s32 6, %v2508
      %v2510 = vrot.slane %v2168, %v2509
      %2512 = vbcast.lane.b32.xlu0 %v2510, 256
      %v2513 = vpop.permute.xlu0 %2512
      %v2514 = vlaneseq
      %v2515 = vshrl.u32 %v2514, 7
      %v2516 = vsub.s32 0, %v2515
      %v2517 = vrot.slane %v2170, %v2516
      %2519 = vbcast.lane.b32.xlu0 %v2517, 256
      %v2520 = vpop.permute.xlu0 %2519
      %v2521 = vlaneseq
      %v2522 = vshrl.u32 %v2521, 7
      %v2523 = vsub.s32 1, %v2522
      %v2524 = vrot.slane %v2170, %v2523
      %2526 = vbcast.lane.b32.xlu0 %v2524, 256
      %v2527 = vpop.permute.xlu0 %2526
      %v2528 = vlaneseq
      %v2529 = vshrl.u32 %v2528, 7
      %v2530 = vsub.s32 2, %v2529
      %v2531 = vrot.slane %v2170, %v2530
      %2533 = vbcast.lane.b32.xlu0 %v2531, 256
      %v2534 = vpop.permute.xlu0 %2533
      %v2535 = vlaneseq
      %v2536 = vshrl.u32 %v2535, 7
      %v2537 = vsub.s32 3, %v2536
      %v2538 = vrot.slane %v2170, %v2537
      %2540 = vbcast.lane.b32.xlu0 %v2538, 256
      %v2541 = vpop.permute.xlu0 %2540
      %v2542 = vlaneseq
      %v2543 = vshrl.u32 %v2542, 7
      %v2544 = vsub.s32 4, %v2543
      %v2545 = vrot.slane %v2170, %v2544
      %2547 = vbcast.lane.b32.xlu0 %v2545, 256
      %v2548 = vpop.permute.xlu0 %2547
      %v2549 = vlaneseq
      %v2550 = vshrl.u32 %v2549, 7
      %v2551 = vsub.s32 5, %v2550
      %v2552 = vrot.slane %v2170, %v2551
      %2554 = vbcast.lane.b32.xlu0 %v2552, 256
      %v2555 = vpop.permute.xlu0 %2554
      %v2556 = vlaneseq
      %v2557 = vshrl.u32 %v2556, 7
      %v2558 = vsub.s32 6, %v2557
      %v2559 = vrot.slane %v2170, %v2558
      %2561 = vbcast.lane.b32.xlu0 %v2559, 256
      %v2562 = vpop.permute.xlu0 %2561
      %v2563 = vmul.f32 %v588, %v2177
      %v2564 = vmul.f32 %v589, %v2184
      %v2565 = vmul.f32 %v590, %v2191
      %v2566 = vmul.f32 %v591, %v2198
      %v2567 = vmul.f32 %v592, %v2205
      %v2568 = vmul.f32 %v593, %v2212
      %v2569 = vmul.f32 %v594, %v2219
      %v2570 = vmul.f32 %v595, %v2226
      %v2571 = vmul.f32 %v596, %v2233
      %v2572 = vmul.f32 %v597, %v2240
      %v2573 = vmul.f32 %v598, %v2247
      %v2574 = vmul.f32 %v599, %v2254
      %v2575 = vmul.f32 %v600, %v2261
      %v2576 = vmul.f32 %v601, %v2268
      %v2577 = vmul.f32 %v602, %v2275
      %v2578 = vmul.f32 %v603, %v2282
      %v2579 = vmul.f32 %v604, %v2289
      %v2580 = vmul.f32 %v605, %v2296
      %v2581 = vmul.f32 %v606, %v2303
      %v2582 = vmul.f32 %v607, %v2310
      %v2583 = vmul.f32 %v608, %v2317
      %v2584 = vmul.f32 %v609, %v2324
      %v2585 = vmul.f32 %v610, %v2331
      %v2586 = vmul.f32 %v611, %v2338
      %v2587 = vmul.f32 %v612, %v2345
      %v2588 = vmul.f32 %v613, %v2352
      %v2589 = vmul.f32 %v614, %v2359
      %v2590 = vmul.f32 %v615, %v2366
      %v2591 = vmul.f32 %v616, %v2373
      %v2592 = vmul.f32 %v617, %v2380
      %v2593 = vmul.f32 %v618, %v2387
      %v2594 = vmul.f32 %v619, %v2394
      %v2595 = vmul.f32 %v620, %v2401
      %v2596 = vmul.f32 %v621, %v2408
      %v2597 = vmul.f32 %v622, %v2415
      %v2598 = vmul.f32 %v623, %v2422
      %v2599 = vmul.f32 %v624, %v2429
      %v2600 = vmul.f32 %v625, %v2436
      %v2601 = vmul.f32 %v626, %v2443
      %v2602 = vmul.f32 %v627, %v2450
      %v2603 = vmul.f32 %v628, %v2457
      %v2604 = vmul.f32 %v629, %v2464
      %v2605 = vmul.f32 %v630, %v2471
      %v2606 = vmul.f32 %v631, %v2478
      %v2607 = vmul.f32 %v632, %v2485
      %v2608 = vmul.f32 %v633, %v2492
      %v2609 = vmul.f32 %v634, %v2499
      %v2610 = vmul.f32 %v635, %v2506
      %v2611 = vmul.f32 %v636, %v2513
      %v2612 = vmul.f32 %v637, %v2520
      %v2613 = vmul.f32 %v638, %v2527
      %v2614 = vmul.f32 %v639, %v2534
      %v2615 = vmul.f32 %v640, %v2541
      %v2616 = vmul.f32 %v641, %v2548
      %v2617 = vmul.f32 %v642, %v2555
      %v2618 = vmul.f32 %v643, %v2562
      %v2619 = vsel %vm894, %v2563, 0.0
      %v2620 = vrot.slane %v2619, 4
      %v2621 = vadd.f32 %v2619, %v2620
      %v2622 = vrot.slane %v2621, 2
      %v2623 = vadd.f32 %v2621, %v2622
      %v2624 = vrot.slane %v2623, 1
      %v2625 = vadd.f32 %v2623, %v2624
      %v2626 = vsel %vm894, %v2564, 0.0
      %v2627 = vrot.slane %v2626, 4
      %v2628 = vadd.f32 %v2626, %v2627
      %v2629 = vrot.slane %v2628, 2
      %v2630 = vadd.f32 %v2628, %v2629
      %v2631 = vrot.slane %v2630, 1
      %v2632 = vadd.f32 %v2630, %v2631
      %v2633 = vsel %vm894, %v2565, 0.0
      %v2634 = vrot.slane %v2633, 4
      %v2635 = vadd.f32 %v2633, %v2634
      %v2636 = vrot.slane %v2635, 2
      %v2637 = vadd.f32 %v2635, %v2636
      %v2638 = vrot.slane %v2637, 1
      %v2639 = vadd.f32 %v2637, %v2638
      %v2640 = vsel %vm894, %v2566, 0.0
      %v2641 = vrot.slane %v2640, 4
      %v2642 = vadd.f32 %v2640, %v2641
      %v2643 = vrot.slane %v2642, 2
      %v2644 = vadd.f32 %v2642, %v2643
      %v2645 = vrot.slane %v2644, 1
      %v2646 = vadd.f32 %v2644, %v2645
      %v2647 = vsel %vm894, %v2567, 0.0
      %v2648 = vrot.slane %v2647, 4
      %v2649 = vadd.f32 %v2647, %v2648
      %v2650 = vrot.slane %v2649, 2
      %v2651 = vadd.f32 %v2649, %v2650
      %v2652 = vrot.slane %v2651, 1
      %v2653 = vadd.f32 %v2651, %v2652
      %v2654 = vsel %vm894, %v2568, 0.0
      %v2655 = vrot.slane %v2654, 4
      %v2656 = vadd.f32 %v2654, %v2655
      %v2657 = vrot.slane %v2656, 2
      %v2658 = vadd.f32 %v2656, %v2657
      %v2659 = vrot.slane %v2658, 1
      %v2660 = vadd.f32 %v2658, %v2659
      %v2661 = vsel %vm894, %v2569, 0.0
      %v2662 = vrot.slane %v2661, 4
      %v2663 = vadd.f32 %v2661, %v2662
      %v2664 = vrot.slane %v2663, 2
      %v2665 = vadd.f32 %v2663, %v2664
      %v2666 = vrot.slane %v2665, 1
      %v2667 = vadd.f32 %v2665, %v2666
      %v2668 = vsel %vm894, %v2570, 0.0
      %v2669 = vrot.slane %v2668, 4
      %v2670 = vadd.f32 %v2668, %v2669
      %v2671 = vrot.slane %v2670, 2
      %v2672 = vadd.f32 %v2670, %v2671
      %v2673 = vrot.slane %v2672, 1
      %v2674 = vadd.f32 %v2672, %v2673
      %v2675 = vsel %vm894, %v2571, 0.0
      %v2676 = vrot.slane %v2675, 4
      %v2677 = vadd.f32 %v2675, %v2676
      %v2678 = vrot.slane %v2677, 2
      %v2679 = vadd.f32 %v2677, %v2678
      %v2680 = vrot.slane %v2679, 1
      %v2681 = vadd.f32 %v2679, %v2680
      %v2682 = vsel %vm894, %v2572, 0.0
      %v2683 = vrot.slane %v2682, 4
      %v2684 = vadd.f32 %v2682, %v2683
      %v2685 = vrot.slane %v2684, 2
      %v2686 = vadd.f32 %v2684, %v2685
      %v2687 = vrot.slane %v2686, 1
      %v2688 = vadd.f32 %v2686, %v2687
      %v2689 = vsel %vm894, %v2573, 0.0
      %v2690 = vrot.slane %v2689, 4
      %v2691 = vadd.f32 %v2689, %v2690
      %v2692 = vrot.slane %v2691, 2
      %v2693 = vadd.f32 %v2691, %v2692
      %v2694 = vrot.slane %v2693, 1
      %v2695 = vadd.f32 %v2693, %v2694
      %v2696 = vsel %vm894, %v2574, 0.0
      %v2697 = vrot.slane %v2696, 4
      %v2698 = vadd.f32 %v2696, %v2697
      %v2699 = vrot.slane %v2698, 2
      %v2700 = vadd.f32 %v2698, %v2699
      %v2701 = vrot.slane %v2700, 1
      %v2702 = vadd.f32 %v2700, %v2701
      %v2703 = vsel %vm894, %v2575, 0.0
      %v2704 = vrot.slane %v2703, 4
      %v2705 = vadd.f32 %v2703, %v2704
      %v2706 = vrot.slane %v2705, 2
      %v2707 = vadd.f32 %v2705, %v2706
      %v2708 = vrot.slane %v2707, 1
      %v2709 = vadd.f32 %v2707, %v2708
      %v2710 = vsel %vm894, %v2576, 0.0
      %v2711 = vrot.slane %v2710, 4
      %v2712 = vadd.f32 %v2710, %v2711
      %v2713 = vrot.slane %v2712, 2
      %v2714 = vadd.f32 %v2712, %v2713
      %v2715 = vrot.slane %v2714, 1
      %v2716 = vadd.f32 %v2714, %v2715
      %v2717 = vsel %vm894, %v2577, 0.0
      %v2718 = vrot.slane %v2717, 4
      %v2719 = vadd.f32 %v2717, %v2718
      %v2720 = vrot.slane %v2719, 2
      %v2721 = vadd.f32 %v2719, %v2720
      %v2722 = vrot.slane %v2721, 1
      %v2723 = vadd.f32 %v2721, %v2722
      %v2724 = vsel %vm894, %v2578, 0.0
      %v2725 = vrot.slane %v2724, 4
      %v2726 = vadd.f32 %v2724, %v2725
      %v2727 = vrot.slane %v2726, 2
      %v2728 = vadd.f32 %v2726, %v2727
      %v2729 = vrot.slane %v2728, 1
      %v2730 = vadd.f32 %v2728, %v2729
      %v2731 = vsel %vm894, %v2579, 0.0
      %v2732 = vrot.slane %v2731, 4
      %v2733 = vadd.f32 %v2731, %v2732
      %v2734 = vrot.slane %v2733, 2
      %v2735 = vadd.f32 %v2733, %v2734
      %v2736 = vrot.slane %v2735, 1
      %v2737 = vadd.f32 %v2735, %v2736
      %v2738 = vsel %vm894, %v2580, 0.0
      %v2739 = vrot.slane %v2738, 4
      %v2740 = vadd.f32 %v2738, %v2739
      %v2741 = vrot.slane %v2740, 2
      %v2742 = vadd.f32 %v2740, %v2741
      %v2743 = vrot.slane %v2742, 1
      %v2744 = vadd.f32 %v2742, %v2743
      %v2745 = vsel %vm894, %v2581, 0.0
      %v2746 = vrot.slane %v2745, 4
      %v2747 = vadd.f32 %v2745, %v2746
      %v2748 = vrot.slane %v2747, 2
      %v2749 = vadd.f32 %v2747, %v2748
      %v2750 = vrot.slane %v2749, 1
      %v2751 = vadd.f32 %v2749, %v2750
      %v2752 = vsel %vm894, %v2582, 0.0
      %v2753 = vrot.slane %v2752, 4
      %v2754 = vadd.f32 %v2752, %v2753
      %v2755 = vrot.slane %v2754, 2
      %v2756 = vadd.f32 %v2754, %v2755
      %v2757 = vrot.slane %v2756, 1
      %v2758 = vadd.f32 %v2756, %v2757
      %v2759 = vsel %vm894, %v2583, 0.0
      %v2760 = vrot.slane %v2759, 4
      %v2761 = vadd.f32 %v2759, %v2760
      %v2762 = vrot.slane %v2761, 2
      %v2763 = vadd.f32 %v2761, %v2762
      %v2764 = vrot.slane %v2763, 1
      %v2765 = vadd.f32 %v2763, %v2764
      %v2766 = vsel %vm894, %v2584, 0.0
      %v2767 = vrot.slane %v2766, 4
      %v2768 = vadd.f32 %v2766, %v2767
      %v2769 = vrot.slane %v2768, 2
      %v2770 = vadd.f32 %v2768, %v2769
      %v2771 = vrot.slane %v2770, 1
      %v2772 = vadd.f32 %v2770, %v2771
      %v2773 = vsel %vm894, %v2585, 0.0
      %v2774 = vrot.slane %v2773, 4
      %v2775 = vadd.f32 %v2773, %v2774
      %v2776 = vrot.slane %v2775, 2
      %v2777 = vadd.f32 %v2775, %v2776
      %v2778 = vrot.slane %v2777, 1
      %v2779 = vadd.f32 %v2777, %v2778
      %v2780 = vsel %vm894, %v2586, 0.0
      %v2781 = vrot.slane %v2780, 4
      %v2782 = vadd.f32 %v2780, %v2781
      %v2783 = vrot.slane %v2782, 2
      %v2784 = vadd.f32 %v2782, %v2783
      %v2785 = vrot.slane %v2784, 1
      %v2786 = vadd.f32 %v2784, %v2785
      %v2787 = vsel %vm894, %v2587, 0.0
      %v2788 = vrot.slane %v2787, 4
      %v2789 = vadd.f32 %v2787, %v2788
      %v2790 = vrot.slane %v2789, 2
      %v2791 = vadd.f32 %v2789, %v2790
      %v2792 = vrot.slane %v2791, 1
      %v2793 = vadd.f32 %v2791, %v2792
      %v2794 = vsel %vm894, %v2588, 0.0
      %v2795 = vrot.slane %v2794, 4
      %v2796 = vadd.f32 %v2794, %v2795
      %v2797 = vrot.slane %v2796, 2
      %v2798 = vadd.f32 %v2796, %v2797
      %v2799 = vrot.slane %v2798, 1
      %v2800 = vadd.f32 %v2798, %v2799
      %v2801 = vsel %vm894, %v2589, 0.0
      %v2802 = vrot.slane %v2801, 4
      %v2803 = vadd.f32 %v2801, %v2802
      %v2804 = vrot.slane %v2803, 2
      %v2805 = vadd.f32 %v2803, %v2804
      %v2806 = vrot.slane %v2805, 1
      %v2807 = vadd.f32 %v2805, %v2806
      %v2808 = vsel %vm894, %v2590, 0.0
      %v2809 = vrot.slane %v2808, 4
      %v2810 = vadd.f32 %v2808, %v2809
      %v2811 = vrot.slane %v2810, 2
      %v2812 = vadd.f32 %v2810, %v2811
      %v2813 = vrot.slane %v2812, 1
      %v2814 = vadd.f32 %v2812, %v2813
      %v2815 = vsel %vm894, %v2591, 0.0
      %v2816 = vrot.slane %v2815, 4
      %v2817 = vadd.f32 %v2815, %v2816
      %v2818 = vrot.slane %v2817, 2
      %v2819 = vadd.f32 %v2817, %v2818
      %v2820 = vrot.slane %v2819, 1
      %v2821 = vadd.f32 %v2819, %v2820
      %v2822 = vsel %vm894, %v2592, 0.0
      %v2823 = vrot.slane %v2822, 4
      %v2824 = vadd.f32 %v2822, %v2823
      %v2825 = vrot.slane %v2824, 2
      %v2826 = vadd.f32 %v2824, %v2825
      %v2827 = vrot.slane %v2826, 1
      %v2828 = vadd.f32 %v2826, %v2827
      %v2829 = vsel %vm894, %v2593, 0.0
      %v2830 = vrot.slane %v2829, 4
      %v2831 = vadd.f32 %v2829, %v2830
      %v2832 = vrot.slane %v2831, 2
      %v2833 = vadd.f32 %v2831, %v2832
      %v2834 = vrot.slane %v2833, 1
      %v2835 = vadd.f32 %v2833, %v2834
      %v2836 = vsel %vm894, %v2594, 0.0
      %v2837 = vrot.slane %v2836, 4
      %v2838 = vadd.f32 %v2836, %v2837
      %v2839 = vrot.slane %v2838, 2
      %v2840 = vadd.f32 %v2838, %v2839
      %v2841 = vrot.slane %v2840, 1
      %v2842 = vadd.f32 %v2840, %v2841
      %v2843 = vsel %vm894, %v2595, 0.0
      %v2844 = vrot.slane %v2843, 4
      %v2845 = vadd.f32 %v2843, %v2844
      %v2846 = vrot.slane %v2845, 2
      %v2847 = vadd.f32 %v2845, %v2846
      %v2848 = vrot.slane %v2847, 1
      %v2849 = vadd.f32 %v2847, %v2848
      %v2850 = vsel %vm894, %v2596, 0.0
      %v2851 = vrot.slane %v2850, 4
      %v2852 = vadd.f32 %v2850, %v2851
      %v2853 = vrot.slane %v2852, 2
      %v2854 = vadd.f32 %v2852, %v2853
      %v2855 = vrot.slane %v2854, 1
      %v2856 = vadd.f32 %v2854, %v2855
      %v2857 = vsel %vm894, %v2597, 0.0
      %v2858 = vrot.slane %v2857, 4
      %v2859 = vadd.f32 %v2857, %v2858
      %v2860 = vrot.slane %v2859, 2
      %v2861 = vadd.f32 %v2859, %v2860
      %v2862 = vrot.slane %v2861, 1
      %v2863 = vadd.f32 %v2861, %v2862
      %v2864 = vsel %vm894, %v2598, 0.0
      %v2865 = vrot.slane %v2864, 4
      %v2866 = vadd.f32 %v2864, %v2865
      %v2867 = vrot.slane %v2866, 2
      %v2868 = vadd.f32 %v2866, %v2867
      %v2869 = vrot.slane %v2868, 1
      %v2870 = vadd.f32 %v2868, %v2869
      %v2871 = vsel %vm894, %v2599, 0.0
      %v2872 = vrot.slane %v2871, 4
      %v2873 = vadd.f32 %v2871, %v2872
      %v2874 = vrot.slane %v2873, 2
      %v2875 = vadd.f32 %v2873, %v2874
      %v2876 = vrot.slane %v2875, 1
      %v2877 = vadd.f32 %v2875, %v2876
      %v2878 = vsel %vm894, %v2600, 0.0
      %v2879 = vrot.slane %v2878, 4
      %v2880 = vadd.f32 %v2878, %v2879
      %v2881 = vrot.slane %v2880, 2
      %v2882 = vadd.f32 %v2880, %v2881
      %v2883 = vrot.slane %v2882, 1
      %v2884 = vadd.f32 %v2882, %v2883
      %v2885 = vsel %vm894, %v2601, 0.0
      %v2886 = vrot.slane %v2885, 4
      %v2887 = vadd.f32 %v2885, %v2886
      %v2888 = vrot.slane %v2887, 2
      %v2889 = vadd.f32 %v2887, %v2888
      %v2890 = vrot.slane %v2889, 1
      %v2891 = vadd.f32 %v2889, %v2890
      %v2892 = vsel %vm894, %v2602, 0.0
      %v2893 = vrot.slane %v2892, 4
      %v2894 = vadd.f32 %v2892, %v2893
      %v2895 = vrot.slane %v2894, 2
      %v2896 = vadd.f32 %v2894, %v2895
      %v2897 = vrot.slane %v2896, 1
      %v2898 = vadd.f32 %v2896, %v2897
      %v2899 = vsel %vm894, %v2603, 0.0
      %v2900 = vrot.slane %v2899, 4
      %v2901 = vadd.f32 %v2899, %v2900
      %v2902 = vrot.slane %v2901, 2
      %v2903 = vadd.f32 %v2901, %v2902
      %v2904 = vrot.slane %v2903, 1
      %v2905 = vadd.f32 %v2903, %v2904
      %v2906 = vsel %vm894, %v2604, 0.0
      %v2907 = vrot.slane %v2906, 4
      %v2908 = vadd.f32 %v2906, %v2907
      %v2909 = vrot.slane %v2908, 2
      %v2910 = vadd.f32 %v2908, %v2909
      %v2911 = vrot.slane %v2910, 1
      %v2912 = vadd.f32 %v2910, %v2911
      %v2913 = vsel %vm894, %v2605, 0.0
      %v2914 = vrot.slane %v2913, 4
      %v2915 = vadd.f32 %v2913, %v2914
      %v2916 = vrot.slane %v2915, 2
      %v2917 = vadd.f32 %v2915, %v2916
      %v2918 = vrot.slane %v2917, 1
      %v2919 = vadd.f32 %v2917, %v2918
      %v2920 = vsel %vm894, %v2606, 0.0
      %v2921 = vrot.slane %v2920, 4
      %v2922 = vadd.f32 %v2920, %v2921
      %v2923 = vrot.slane %v2922, 2
      %v2924 = vadd.f32 %v2922, %v2923
      %v2925 = vrot.slane %v2924, 1
      %v2926 = vadd.f32 %v2924, %v2925
      %v2927 = vsel %vm894, %v2607, 0.0
      %v2928 = vrot.slane %v2927, 4
      %v2929 = vadd.f32 %v2927, %v2928
      %v2930 = vrot.slane %v2929, 2
      %v2931 = vadd.f32 %v2929, %v2930
      %v2932 = vrot.slane %v2931, 1
      %v2933 = vadd.f32 %v2931, %v2932
      %v2934 = vsel %vm894, %v2608, 0.0
      %v2935 = vrot.slane %v2934, 4
      %v2936 = vadd.f32 %v2934, %v2935
      %v2937 = vrot.slane %v2936, 2
      %v2938 = vadd.f32 %v2936, %v2937
      %v2939 = vrot.slane %v2938, 1
      %v2940 = vadd.f32 %v2938, %v2939
      %v2941 = vsel %vm894, %v2609, 0.0
      %v2942 = vrot.slane %v2941, 4
      %v2943 = vadd.f32 %v2941, %v2942
      %v2944 = vrot.slane %v2943, 2
      %v2945 = vadd.f32 %v2943, %v2944
      %v2946 = vrot.slane %v2945, 1
      %v2947 = vadd.f32 %v2945, %v2946
      %v2948 = vsel %vm894, %v2610, 0.0
      %v2949 = vrot.slane %v2948, 4
      %v2950 = vadd.f32 %v2948, %v2949
      %v2951 = vrot.slane %v2950, 2
      %v2952 = vadd.f32 %v2950, %v2951
      %v2953 = vrot.slane %v2952, 1
      %v2954 = vadd.f32 %v2952, %v2953
      %v2955 = vsel %vm894, %v2611, 0.0
      %v2956 = vrot.slane %v2955, 4
      %v2957 = vadd.f32 %v2955, %v2956
      %v2958 = vrot.slane %v2957, 2
      %v2959 = vadd.f32 %v2957, %v2958
      %v2960 = vrot.slane %v2959, 1
      %v2961 = vadd.f32 %v2959, %v2960
      %v2962 = vsel %vm894, %v2612, 0.0
      %v2963 = vrot.slane %v2962, 4
      %v2964 = vadd.f32 %v2962, %v2963
      %v2965 = vrot.slane %v2964, 2
      %v2966 = vadd.f32 %v2964, %v2965
      %v2967 = vrot.slane %v2966, 1
      %v2968 = vadd.f32 %v2966, %v2967
      %v2969 = vsel %vm894, %v2613, 0.0
      %v2970 = vrot.slane %v2969, 4
      %v2971 = vadd.f32 %v2969, %v2970
      %v2972 = vrot.slane %v2971, 2
      %v2973 = vadd.f32 %v2971, %v2972
      %v2974 = vrot.slane %v2973, 1
      %v2975 = vadd.f32 %v2973, %v2974
      %v2976 = vsel %vm894, %v2614, 0.0
      %v2977 = vrot.slane %v2976, 4
      %v2978 = vadd.f32 %v2976, %v2977
      %v2979 = vrot.slane %v2978, 2
      %v2980 = vadd.f32 %v2978, %v2979
      %v2981 = vrot.slane %v2980, 1
      %v2982 = vadd.f32 %v2980, %v2981
      %v2983 = vsel %vm894, %v2615, 0.0
      %v2984 = vrot.slane %v2983, 4
      %v2985 = vadd.f32 %v2983, %v2984
      %v2986 = vrot.slane %v2985, 2
      %v2987 = vadd.f32 %v2985, %v2986
      %v2988 = vrot.slane %v2987, 1
      %v2989 = vadd.f32 %v2987, %v2988
      %v2990 = vsel %vm894, %v2616, 0.0
      %v2991 = vrot.slane %v2990, 4
      %v2992 = vadd.f32 %v2990, %v2991
      %v2993 = vrot.slane %v2992, 2
      %v2994 = vadd.f32 %v2992, %v2993
      %v2995 = vrot.slane %v2994, 1
      %v2996 = vadd.f32 %v2994, %v2995
      %v2997 = vsel %vm894, %v2617, 0.0
      %v2998 = vrot.slane %v2997, 4
      %v2999 = vadd.f32 %v2997, %v2998
      %v3000 = vrot.slane %v2999, 2
      %v3001 = vadd.f32 %v2999, %v3000
      %v3002 = vrot.slane %v3001, 1
      %v3003 = vadd.f32 %v3001, %v3002
      %v3004 = vsel %vm894, %v2618, 0.0
      %v3005 = vrot.slane %v3004, 4
      %v3006 = vadd.f32 %v3004, %v3005
      %v3007 = vrot.slane %v3006, 2
      %v3008 = vadd.f32 %v3006, %v3007
      %v3009 = vrot.slane %v3008, 1
      %v3010 = vadd.f32 %v3008, %v3009
      %v3011 = vld [vmem:[%s7] sm:$0xff]
      %v3012 = vld [vmem:[%s7 + $0x8] sm:$0xff]
      %v3013 = vld [vmem:[%s7 + $0x10] sm:$0xff]
      %v3014 = vld [vmem:[%s7 + $0x18] sm:$0xff]
      %v3015 = vld [vmem:[%s8] sm:$0x1]
      %v3017 = vlaneseq
      %v3018 = vshrl.u32 %v3017, 7
      %v3019 = vsub.s32 0, %v3018
      %v3020 = vrot.slane %v3015, %v3019
      %v3078 = vsel %vm2012, %v2632, %v2625
      %v3079 = vsel %vm2014, %v2639, %v3078
      %v3080 = vsel %vm2016, %v2646, %v3079
      %v3081 = vsel %vm2018, %v2653, %v3080
      %v3082 = vsel %vm2020, %v2660, %v3081
      %v3083 = vsel %vm2022, %v2667, %v3082
      %vm3084 = vcmask 1047559
      %v3085 = vsel %vm3084, %v2674, %v3083
      %v3086 = vsel %vm2012, %v2688, %v2681
      %v3087 = vsel %vm2014, %v2695, %v3086
      %v3088 = vsel %vm2016, %v2702, %v3087
      %v3089 = vsel %vm2018, %v2709, %v3088
      %v3090 = vsel %vm2020, %v2716, %v3089
      %v3091 = vsel %vm2022, %v2723, %v3090
      %v3092 = vsel %vm3084, %v2730, %v3091
      %v3093 = vsel %vm2012, %v2744, %v2737
      %v3094 = vsel %vm2014, %v2751, %v3093
      %v3095 = vsel %vm2016, %v2758, %v3094
      %v3096 = vsel %vm2018, %v2765, %v3095
      %v3097 = vsel %vm2020, %v2772, %v3096
      %v3098 = vsel %vm2022, %v2779, %v3097
      %v3099 = vsel %vm3084, %v2786, %v3098
      %v3100 = vsel %vm2012, %v2800, %v2793
      %v3101 = vsel %vm2014, %v2807, %v3100
      %v3102 = vsel %vm2016, %v2814, %v3101
      %v3103 = vsel %vm2018, %v2821, %v3102
      %v3104 = vsel %vm2020, %v2828, %v3103
      %v3105 = vsel %vm2022, %v2835, %v3104
      %v3106 = vsel %vm3084, %v2842, %v3105
      %v3107 = vsel %vm2012, %v2856, %v2849
      %v3108 = vsel %vm2014, %v2863, %v3107
      %v3109 = vsel %vm2016, %v2870, %v3108
      %v3110 = vsel %vm2018, %v2877, %v3109
      %v3111 = vsel %vm2020, %v2884, %v3110
      %v3112 = vsel %vm2022, %v2891, %v3111
      %v3113 = vsel %vm3084, %v2898, %v3112
      %v3114 = vsel %vm2012, %v2912, %v2905
      %v3115 = vsel %vm2014, %v2919, %v3114
      %v3116 = vsel %vm2016, %v2926, %v3115
      %v3117 = vsel %vm2018, %v2933, %v3116
      %v3118 = vsel %vm2020, %v2940, %v3117
      %v3119 = vsel %vm2022, %v2947, %v3118
      %v3120 = vsel %vm3084, %v2954, %v3119
      %v3121 = vsel %vm2012, %v2968, %v2961
      %v3122 = vsel %vm2014, %v2975, %v3121
      %v3123 = vsel %vm2016, %v2982, %v3122
      %v3124 = vsel %vm2018, %v2989, %v3123
      %v3125 = vsel %vm2020, %v2996, %v3124
      %v3126 = vsel %vm2022, %v3003, %v3125
      %v3127 = vsel %vm3084, %v3010, %v3126
      %v3128 = vsel %vm894, %v3085, 0
      %v3130 = vsel %vm894, %v3092, 0
      %v3132 = vsel %vm894, %v3099, 0
      %v3134 = vsel %vm894, %v3106, 0
      %v3136 = vsel %vm894, %v3113, 0
      %v3138 = vsel %vm894, %v3120, 0
      %v3140 = vsel %vm894, %v3127, 0
      %3142 = vmatprep.subr.mxu0 0.0
      %3143 = vmatpush1.msra.mxu0 0.0
      %3144 = vmatprep.subr.mxu0 0.0
      %3145 = vmatpush1.msra.mxu0 0.0
      %3146 = vmatprep.subr.mxu0 0.0
      %3147 = vmatpush1.msra.mxu0 0.0
      %3148 = vmatprep.subr.mxu0 0.0
      %3149 = vmatpush1.msra.mxu0 0.0
      %3150 = vmatprep.subr.mxu0 0.0
      %3151 = vmatpush1.msra.mxu0 0.0
      %3152 = vmatprep.subr.mxu0 0.0
      %3153 = vmatpush1.msra.mxu0 0.0
      %3154 = vmatprep.subr.mxu0 0.0
      %3155 = vmatpush1.msra.mxu0 0.0
      %3156 = vmatprep.subr.mxu0 0.0
      %3157 = vmatpush1.msra.mxu0 0.0
      %3158 = vmatprep.subr.mxu0 0.0
      %3159 = vmatpush1.msra.mxu0 0.0
      %3160 = vmatprep.subr.mxu0 0.0
      %3161 = vmatpush1.msra.mxu0 0.0
      %3162 = vmatprep.subr.mxu0 0.0
      %3163 = vmatpush1.msra.mxu0 0.0
      %3164 = vmatprep.subr.mxu0 0.0
      %3165 = vmatpush1.msra.mxu0 0.0
      %3166 = vmatprep.subr.mxu0 0.0
      %3167 = vmatpush1.msra.mxu0 %v3014
      %3168 = vmatprep.subr.mxu0 0.0
      %3169 = vmatpush1.msra.mxu0 %v3013
      %3170 = vmatprep.subr.mxu0 0.0
      %3171 = vmatpush1.msra.mxu0 %v3012
      %3172 = vmatprep.subr.mxu0 0.0
      %3173 = vmatpush1.msra.mxu0 %v3011
      %3174 = vmatprep.subr.mxu0 0.0
      %3175 = vmatpush2.msra.mxu0 0.0
      %3176 = vmatprep.subr.mxu0 0.0
      %3177 = vmatpush2.msra.mxu0 0.0
      %3178 = vmatprep.subr.mxu0 0.0
      %3179 = vmatpush2.msra.mxu0 0.0
      %3180 = vmatprep.subr.mxu0 0.0
      %3181 = vmatpush2.msra.mxu0 0.0
      %3182 = vmatprep.subr.mxu0 0.0
      %3183 = vmatpush2.msra.mxu0 0.0
      %3184 = vmatprep.subr.mxu0 0.0
      %3185 = vmatpush2.msra.mxu0 0.0
      %3186 = vmatprep.subr.mxu0 0.0
      %3187 = vmatpush2.msra.mxu0 0.0
      %3188 = vmatprep.subr.mxu0 0.0
      %3189 = vmatpush2.msra.mxu0 0.0
      %3190 = vmatprep.subr.mxu0 0.0
      %3191 = vmatpush2.msra.mxu0 0.0
      %3192 = vmatprep.subr.mxu0 0.0
      %3193 = vmatpush2.msra.mxu0 0.0
      %3194 = vmatprep.subr.mxu0 0.0
      %3195 = vmatpush2.msra.mxu0 0.0
      %3196 = vmatprep.subr.mxu0 0.0
      %3197 = vmatpush2.msra.mxu0 0.0
      %3198 = vmatprep.subr.mxu0 0.0
      %3199 = vmatpush2.msra.mxu0 0.0
      %3200 = vmatprep.subr.mxu0 0.0
      %3201 = vmatpush2.msra.mxu0 0.0
      %3202 = vmatprep.subr.mxu0 0.0
      %3203 = vmatpush2.msra.mxu0 0.0
      %3204 = vmatprep.subr.mxu0 0.0
      %3205 = vmatpush2.msra.mxu0 0.0
      %3206 = vmatprep.mubr.f32.mxu0 0.0
      %3207 = vmatmul.mubr.f32.gmra.mxu0 %v3128
      %v3208 = vpop.f32.mrf.mxu0
      %v3209 = vadd.f32 %v3020, %v3208
      %v3210 = vpop.f32.mrf.mxu0
      %3211 = vmatprep.mubr.f32.mxu0 0.0
      %3212 = vmatmul.mubr.f32.gmra.mxu0 %v3130
      %v3213 = vpop.f32.mrf.mxu0
      %v3214 = vadd.f32 %v3020, %v3213
      %v3215 = vpop.f32.mrf.mxu0
      %3216 = vmatprep.mubr.f32.mxu0 0.0
      %3217 = vmatmul.mubr.f32.gmra.mxu0 %v3132
      %v3218 = vpop.f32.mrf.mxu0
      %v3219 = vadd.f32 %v3020, %v3218
      %v3220 = vpop.f32.mrf.mxu0
      %3221 = vmatprep.mubr.f32.mxu0 0.0
      %3222 = vmatmul.mubr.f32.gmra.mxu0 %v3134
      %v3223 = vpop.f32.mrf.mxu0
      %v3224 = vadd.f32 %v3020, %v3223
      %v3225 = vpop.f32.mrf.mxu0
      %3226 = vmatprep.mubr.f32.mxu0 0.0
      %3227 = vmatmul.mubr.f32.gmra.mxu0 %v3136
      %v3228 = vpop.f32.mrf.mxu0
      %v3229 = vadd.f32 %v3020, %v3228
      %v3230 = vpop.f32.mrf.mxu0
      %3231 = vmatprep.mubr.f32.mxu0 0.0
      %3232 = vmatmul.mubr.f32.gmra.mxu0 %v3138
      %v3233 = vpop.f32.mrf.mxu0
      %v3234 = vadd.f32 %v3020, %v3233
      %v3235 = vpop.f32.mrf.mxu0
      %3236 = vmatprep.mubr.f32.mxu0 0.0
      %3237 = vmatmul.mubr.f32.gmra.mxu0 %v3140
      %v3238 = vpop.f32.mrf.mxu0
      %v3239 = vadd.f32 %v3020, %v3238
      %v3240 = vpop.f32.mrf.mxu0
      %3241 = vdwg.mxu0
      %v3242 = vmax.f32 %v3209, 0.0
      %v3243 = vmax.f32 %v3214, 0.0
      %v3244 = vmax.f32 %v3219, 0.0
      %v3245 = vmax.f32 %v3224, 0.0
      %v3246 = vmax.f32 %v3229, 0.0
      %v3247 = vmax.f32 %v3234, 0.0
      %v3248 = vmax.f32 %v3239, 0.0
      %v3249 = vld [vmem:[%s9] sm:$0xff]
      %v3250 = vld [vmem:[%s9 + $0x8] sm:$0xff]
      %v3251 = vld [vmem:[%s9 + $0x10] sm:$0xff]
      %v3252 = vld [vmem:[%s9 + $0x18] sm:$0xff]
      %v3253 = vld [vmem:[%s10] sm:$0x1]
      %v3255 = vlaneseq
      %v3256 = vshrl.u32 %v3255, 7
      %v3257 = vsub.s32 0, %v3256
      %v3258 = vrot.slane %v3253, %v3257
      %v3261 = vsel %vm894, %v3242, 0
      %v3264 = vsel %vm894, %v3243, 0
      %v3267 = vsel %vm894, %v3244, 0
      %v3270 = vsel %vm894, %v3245, 0
      %v3273 = vsel %vm894, %v3246, 0
      %v3276 = vsel %vm894, %v3247, 0
      %v3279 = vsel %vm894, %v3248, 0
      %3281 = vmatprep.subr.mxu0 0.0
      %3282 = vmatpush1.msra.mxu0 0.0
      %3283 = vmatprep.subr.mxu0 0.0
      %3284 = vmatpush1.msra.mxu0 0.0
      %3285 = vmatprep.subr.mxu0 0.0
      %3286 = vmatpush1.msra.mxu0 0.0
      %3287 = vmatprep.subr.mxu0 0.0
      %3288 = vmatpush1.msra.mxu0 0.0
      %3289 = vmatprep.subr.mxu0 0.0
      %3290 = vmatpush1.msra.mxu0 0.0
      %3291 = vmatprep.subr.mxu0 0.0
      %3292 = vmatpush1.msra.mxu0 0.0
      %3293 = vmatprep.subr.mxu0 0.0
      %3294 = vmatpush1.msra.mxu0 0.0
      %3295 = vmatprep.subr.mxu0 0.0
      %3296 = vmatpush1.msra.mxu0 0.0
      %3297 = vmatprep.subr.mxu0 0.0
      %3298 = vmatpush1.msra.mxu0 0.0
      %3299 = vmatprep.subr.mxu0 0.0
      %3300 = vmatpush1.msra.mxu0 0.0
      %3301 = vmatprep.subr.mxu0 0.0
      %3302 = vmatpush1.msra.mxu0 0.0
      %3303 = vmatprep.subr.mxu0 0.0
      %3304 = vmatpush1.msra.mxu0 0.0
      %3305 = vmatprep.subr.mxu0 0.0
      %3306 = vmatpush1.msra.mxu0 %v3252
      %3307 = vmatprep.subr.mxu0 0.0
      %3308 = vmatpush1.msra.mxu0 %v3251
      %3309 = vmatprep.subr.mxu0 0.0
      %3310 = vmatpush1.msra.mxu0 %v3250
      %3311 = vmatprep.subr.mxu0 0.0
      %3312 = vmatpush1.msra.mxu0 %v3249
      %3313 = vmatprep.subr.mxu0 0.0
      %3314 = vmatpush2.msra.mxu0 0.0
      %3315 = vmatprep.subr.mxu0 0.0
      %3316 = vmatpush2.msra.mxu0 0.0
      %3317 = vmatprep.subr.mxu0 0.0
      %3318 = vmatpush2.msra.mxu0 0.0
      %3319 = vmatprep.subr.mxu0 0.0
      %3320 = vmatpush2.msra.mxu0 0.0
      %3321 = vmatprep.subr.mxu0 0.0
      %3322 = vmatpush2.msra.mxu0 0.0
      %3323 = vmatprep.subr.mxu0 0.0
      %3324 = vmatpush2.msra.mxu0 0.0
      %3325 = vmatprep.subr.mxu0 0.0
      %3326 = vmatpush2.msra.mxu0 0.0
      %3327 = vmatprep.subr.mxu0 0.0
      %3328 = vmatpush2.msra.mxu0 0.0
      %3329 = vmatprep.subr.mxu0 0.0
      %3330 = vmatpush2.msra.mxu0 0.0
      %3331 = vmatprep.subr.mxu0 0.0
      %3332 = vmatpush2.msra.mxu0 0.0
      %3333 = vmatprep.subr.mxu0 0.0
      %3334 = vmatpush2.msra.mxu0 0.0
      %3335 = vmatprep.subr.mxu0 0.0
      %3336 = vmatpush2.msra.mxu0 0.0
      %3337 = vmatprep.subr.mxu0 0.0
      %3338 = vmatpush2.msra.mxu0 0.0
      %3339 = vmatprep.subr.mxu0 0.0
      %3340 = vmatpush2.msra.mxu0 0.0
      %3341 = vmatprep.subr.mxu0 0.0
      %3342 = vmatpush2.msra.mxu0 0.0
      %3343 = vmatprep.subr.mxu0 0.0
      %3344 = vmatpush2.msra.mxu0 0.0
      %3345 = vmatprep.mubr.f32.mxu0 0.0
      %3346 = vmatmul.mubr.f32.gmra.mxu0 %v3261
      %v3347 = vpop.f32.mrf.mxu0
      %v3348 = vadd.f32 %v3258, %v3347
      %v3349 = vpop.f32.mrf.mxu0
      %3350 = vmatprep.mubr.f32.mxu0 0.0
      %3351 = vmatmul.mubr.f32.gmra.mxu0 %v3264
      %v3352 = vpop.f32.mrf.mxu0
      %v3353 = vadd.f32 %v3258, %v3352
      %v3354 = vpop.f32.mrf.mxu0
      %3355 = vmatprep.mubr.f32.mxu0 0.0
      %3356 = vmatmul.mubr.f32.gmra.mxu0 %v3267
      %v3357 = vpop.f32.mrf.mxu0
      %v3358 = vadd.f32 %v3258, %v3357
      %v3359 = vpop.f32.mrf.mxu0
      %3360 = vmatprep.mubr.f32.mxu0 0.0
      %3361 = vmatmul.mubr.f32.gmra.mxu0 %v3270
      %v3362 = vpop.f32.mrf.mxu0
      %v3363 = vadd.f32 %v3258, %v3362
      %v3364 = vpop.f32.mrf.mxu0
      %3365 = vmatprep.mubr.f32.mxu0 0.0
      %3366 = vmatmul.mubr.f32.gmra.mxu0 %v3273
      %v3367 = vpop.f32.mrf.mxu0
      %v3368 = vadd.f32 %v3258, %v3367
      %v3369 = vpop.f32.mrf.mxu0
      %3370 = vmatprep.mubr.f32.mxu0 0.0
      %3371 = vmatmul.mubr.f32.gmra.mxu0 %v3276
      %v3372 = vpop.f32.mrf.mxu0
      %v3373 = vadd.f32 %v3258, %v3372
      %v3374 = vpop.f32.mrf.mxu0
      %3375 = vmatprep.mubr.f32.mxu0 0.0
      %3376 = vmatmul.mubr.f32.gmra.mxu0 %v3279
      %v3377 = vpop.f32.mrf.mxu0
      %v3378 = vadd.f32 %v3258, %v3377
      %v3379 = vpop.f32.mrf.mxu0
      %3380 = vdwg.mxu0
      %v3388 = vcombine.high %v3348, %v3348
      %v3390 = vunpack.c.l.s4 1966171168
      %v3391 = vunpack.c.0.s8 %v3390
      %v3392 = vlaneseq
      %v3393 = vshrl.u32 %v3392, 7
      %v3394 = vsub.s32 %v3391, %v3393
      %v3395 = vrot.slane %v3348, %v3394
      %v3397 = vunpack.c.l.s4 1966171168
      %v3398 = vunpack.c.0.s8 %v3397
      %v3399 = vlaneseq
      %v3400 = vshrl.u32 %v3399, 7
      %v3401 = vsub.s32 %v3398, %v3400
      %v3402 = vrot.slane %v3388, %v3401
      %v3403 = vcombine.high %v3395, %v3395
      %v3404 = vcombine.high %v3402, %v3402
      %v3406 = vunpack.c.l.s4 1966171168
      %v3407 = vunpack.c.0.s8 %v3406
      %v3408 = vlaneseq
      %v3409 = vshrl.u32 %v3408, 7
      %v3410 = vsub.s32 %v3407, %v3409
      %v3411 = vrot.slane %v3395, %v3410
      %v3413 = vunpack.c.l.s4 1966171168
      %v3414 = vunpack.c.0.s8 %v3413
      %v3415 = vlaneseq
      %v3416 = vshrl.u32 %v3415, 7
      %v3417 = vsub.s32 %v3414, %v3416
      %v3418 = vrot.slane %v3402, %v3417
      %v3420 = vunpack.c.l.s4 1966171168
      %v3421 = vunpack.c.0.s8 %v3420
      %v3422 = vlaneseq
      %v3423 = vshrl.u32 %v3422, 7
      %v3424 = vsub.s32 %v3421, %v3423
      %v3425 = vrot.slane %v3403, %v3424
      %v3427 = vunpack.c.l.s4 1966171168
      %v3428 = vunpack.c.0.s8 %v3427
      %v3429 = vlaneseq
      %v3430 = vshrl.u32 %v3429, 7
      %v3431 = vsub.s32 %v3428, %v3430
      %v3432 = vrot.slane %v3404, %v3431
      %v3433 = vcombine.high %v3411, %v3411
      %v3434 = vcombine.high %v3418, %v3418
      %v3435 = vcombine.high %v3425, %v3425
      %v3436 = vcombine.high %v3432, %v3432
      %v3437 = vcombine.high %v3353, %v3353
      %v3439 = vunpack.c.l.s4 1966171168
      %v3440 = vunpack.c.0.s8 %v3439
      %v3441 = vlaneseq
      %v3442 = vshrl.u32 %v3441, 7
      %v3443 = vsub.s32 %v3440, %v3442
      %v3444 = vrot.slane %v3353, %v3443
      %v3446 = vunpack.c.l.s4 1966171168
      %v3447 = vunpack.c.0.s8 %v3446
      %v3448 = vlaneseq
      %v3449 = vshrl.u32 %v3448, 7
      %v3450 = vsub.s32 %v3447, %v3449
      %v3451 = vrot.slane %v3437, %v3450
      %v3452 = vcombine.high %v3444, %v3444
      %v3453 = vcombine.high %v3451, %v3451
      %v3455 = vunpack.c.l.s4 1966171168
      %v3456 = vunpack.c.0.s8 %v3455
      %v3457 = vlaneseq
      %v3458 = vshrl.u32 %v3457, 7
      %v3459 = vsub.s32 %v3456, %v3458
      %v3460 = vrot.slane %v3444, %v3459
      %v3462 = vunpack.c.l.s4 1966171168
      %v3463 = vunpack.c.0.s8 %v3462
      %v3464 = vlaneseq
      %v3465 = vshrl.u32 %v3464, 7
      %v3466 = vsub.s32 %v3463, %v3465
      %v3467 = vrot.slane %v3451, %v3466
      %v3469 = vunpack.c.l.s4 1966171168
      %v3470 = vunpack.c.0.s8 %v3469
      %v3471 = vlaneseq
      %v3472 = vshrl.u32 %v3471, 7
      %v3473 = vsub.s32 %v3470, %v3472
      %v3474 = vrot.slane %v3452, %v3473
      %v3476 = vunpack.c.l.s4 1966171168
      %v3477 = vunpack.c.0.s8 %v3476
      %v3478 = vlaneseq
      %v3479 = vshrl.u32 %v3478, 7
      %v3480 = vsub.s32 %v3477, %v3479
      %v3481 = vrot.slane %v3453, %v3480
      %v3482 = vcombine.high %v3460, %v3460
      %v3483 = vcombine.high %v3467, %v3467
      %v3484 = vcombine.high %v3474, %v3474
      %v3485 = vcombine.high %v3481, %v3481
      %v3486 = vcombine.high %v3358, %v3358
      %v3488 = vunpack.c.l.s4 1966171168
      %v3489 = vunpack.c.0.s8 %v3488
      %v3490 = vlaneseq
      %v3491 = vshrl.u32 %v3490, 7
      %v3492 = vsub.s32 %v3489, %v3491
      %v3493 = vrot.slane %v3358, %v3492
      %v3495 = vunpack.c.l.s4 1966171168
      %v3496 = vunpack.c.0.s8 %v3495
      %v3497 = vlaneseq
      %v3498 = vshrl.u32 %v3497, 7
      %v3499 = vsub.s32 %v3496, %v3498
      %v3500 = vrot.slane %v3486, %v3499
      %v3501 = vcombine.high %v3493, %v3493
      %v3502 = vcombine.high %v3500, %v3500
      %v3504 = vunpack.c.l.s4 1966171168
      %v3505 = vunpack.c.0.s8 %v3504
      %v3506 = vlaneseq
      %v3507 = vshrl.u32 %v3506, 7
      %v3508 = vsub.s32 %v3505, %v3507
      %v3509 = vrot.slane %v3493, %v3508
      %v3511 = vunpack.c.l.s4 1966171168
      %v3512 = vunpack.c.0.s8 %v3511
      %v3513 = vlaneseq
      %v3514 = vshrl.u32 %v3513, 7
      %v3515 = vsub.s32 %v3512, %v3514
      %v3516 = vrot.slane %v3500, %v3515
      %v3518 = vunpack.c.l.s4 1966171168
      %v3519 = vunpack.c.0.s8 %v3518
      %v3520 = vlaneseq
      %v3521 = vshrl.u32 %v3520, 7
      %v3522 = vsub.s32 %v3519, %v3521
      %v3523 = vrot.slane %v3501, %v3522
      %v3525 = vunpack.c.l.s4 1966171168
      %v3526 = vunpack.c.0.s8 %v3525
      %v3527 = vlaneseq
      %v3528 = vshrl.u32 %v3527, 7
      %v3529 = vsub.s32 %v3526, %v3528
      %v3530 = vrot.slane %v3502, %v3529
      %v3531 = vcombine.high %v3509, %v3509
      %v3532 = vcombine.high %v3516, %v3516
      %v3533 = vcombine.high %v3523, %v3523
      %v3534 = vcombine.high %v3530, %v3530
      %v3535 = vcombine.high %v3363, %v3363
      %v3537 = vunpack.c.l.s4 1966171168
      %v3538 = vunpack.c.0.s8 %v3537
      %v3539 = vlaneseq
      %v3540 = vshrl.u32 %v3539, 7
      %v3541 = vsub.s32 %v3538, %v3540
      %v3542 = vrot.slane %v3363, %v3541
      %v3544 = vunpack.c.l.s4 1966171168
      %v3545 = vunpack.c.0.s8 %v3544
      %v3546 = vlaneseq
      %v3547 = vshrl.u32 %v3546, 7
      %v3548 = vsub.s32 %v3545, %v3547
      %v3549 = vrot.slane %v3535, %v3548
      %v3550 = vcombine.high %v3542, %v3542
      %v3551 = vcombine.high %v3549, %v3549
      %v3553 = vunpack.c.l.s4 1966171168
      %v3554 = vunpack.c.0.s8 %v3553
      %v3555 = vlaneseq
      %v3556 = vshrl.u32 %v3555, 7
      %v3557 = vsub.s32 %v3554, %v3556
      %v3558 = vrot.slane %v3542, %v3557
      %v3560 = vunpack.c.l.s4 1966171168
      %v3561 = vunpack.c.0.s8 %v3560
      %v3562 = vlaneseq
      %v3563 = vshrl.u32 %v3562, 7
      %v3564 = vsub.s32 %v3561, %v3563
      %v3565 = vrot.slane %v3549, %v3564
      %v3567 = vunpack.c.l.s4 1966171168
      %v3568 = vunpack.c.0.s8 %v3567
      %v3569 = vlaneseq
      %v3570 = vshrl.u32 %v3569, 7
      %v3571 = vsub.s32 %v3568, %v3570
      %v3572 = vrot.slane %v3550, %v3571
      %v3574 = vunpack.c.l.s4 1966171168
      %v3575 = vunpack.c.0.s8 %v3574
      %v3576 = vlaneseq
      %v3577 = vshrl.u32 %v3576, 7
      %v3578 = vsub.s32 %v3575, %v3577
      %v3579 = vrot.slane %v3551, %v3578
      %v3580 = vcombine.high %v3558, %v3558
      %v3581 = vcombine.high %v3565, %v3565
      %v3582 = vcombine.high %v3572, %v3572
      %v3583 = vcombine.high %v3579, %v3579
      %v3584 = vcombine.high %v3368, %v3368
      %v3586 = vunpack.c.l.s4 1966171168
      %v3587 = vunpack.c.0.s8 %v3586
      %v3588 = vlaneseq
      %v3589 = vshrl.u32 %v3588, 7
      %v3590 = vsub.s32 %v3587, %v3589
      %v3591 = vrot.slane %v3368, %v3590
      %v3593 = vunpack.c.l.s4 1966171168
      %v3594 = vunpack.c.0.s8 %v3593
      %v3595 = vlaneseq
      %v3596 = vshrl.u32 %v3595, 7
      %v3597 = vsub.s32 %v3594, %v3596
      %v3598 = vrot.slane %v3584, %v3597
      %v3599 = vcombine.high %v3591, %v3591
      %v3600 = vcombine.high %v3598, %v3598
      %v3602 = vunpack.c.l.s4 1966171168
      %v3603 = vunpack.c.0.s8 %v3602
      %v3604 = vlaneseq
      %v3605 = vshrl.u32 %v3604, 7
      %v3606 = vsub.s32 %v3603, %v3605
      %v3607 = vrot.slane %v3591, %v3606
      %v3609 = vunpack.c.l.s4 1966171168
      %v3610 = vunpack.c.0.s8 %v3609
      %v3611 = vlaneseq
      %v3612 = vshrl.u32 %v3611, 7
      %v3613 = vsub.s32 %v3610, %v3612
      %v3614 = vrot.slane %v3598, %v3613
      %v3616 = vunpack.c.l.s4 1966171168
      %v3617 = vunpack.c.0.s8 %v3616
      %v3618 = vlaneseq
      %v3619 = vshrl.u32 %v3618, 7
      %v3620 = vsub.s32 %v3617, %v3619
      %v3621 = vrot.slane %v3599, %v3620
      %v3623 = vunpack.c.l.s4 1966171168
      %v3624 = vunpack.c.0.s8 %v3623
      %v3625 = vlaneseq
      %v3626 = vshrl.u32 %v3625, 7
      %v3627 = vsub.s32 %v3624, %v3626
      %v3628 = vrot.slane %v3600, %v3627
      %v3629 = vcombine.high %v3607, %v3607
      %v3630 = vcombine.high %v3614, %v3614
      %v3631 = vcombine.high %v3621, %v3621
      %v3632 = vcombine.high %v3628, %v3628
      %v3633 = vcombine.high %v3373, %v3373
      %v3635 = vunpack.c.l.s4 1966171168
      %v3636 = vunpack.c.0.s8 %v3635
      %v3637 = vlaneseq
      %v3638 = vshrl.u32 %v3637, 7
      %v3639 = vsub.s32 %v3636, %v3638
      %v3640 = vrot.slane %v3373, %v3639
      %v3642 = vunpack.c.l.s4 1966171168
      %v3643 = vunpack.c.0.s8 %v3642
      %v3644 = vlaneseq
      %v3645 = vshrl.u32 %v3644, 7
      %v3646 = vsub.s32 %v3643, %v3645
      %v3647 = vrot.slane %v3633, %v3646
      %v3648 = vcombine.high %v3640, %v3640
      %v3649 = vcombine.high %v3647, %v3647
      %v3651 = vunpack.c.l.s4 1966171168
      %v3652 = vunpack.c.0.s8 %v3651
      %v3653 = vlaneseq
      %v3654 = vshrl.u32 %v3653, 7
      %v3655 = vsub.s32 %v3652, %v3654
      %v3656 = vrot.slane %v3640, %v3655
      %v3658 = vunpack.c.l.s4 1966171168
      %v3659 = vunpack.c.0.s8 %v3658
      %v3660 = vlaneseq
      %v3661 = vshrl.u32 %v3660, 7
      %v3662 = vsub.s32 %v3659, %v3661
      %v3663 = vrot.slane %v3647, %v3662
      %v3665 = vunpack.c.l.s4 1966171168
      %v3666 = vunpack.c.0.s8 %v3665
      %v3667 = vlaneseq
      %v3668 = vshrl.u32 %v3667, 7
      %v3669 = vsub.s32 %v3666, %v3668
      %v3670 = vrot.slane %v3648, %v3669
      %v3672 = vunpack.c.l.s4 1966171168
      %v3673 = vunpack.c.0.s8 %v3672
      %v3674 = vlaneseq
      %v3675 = vshrl.u32 %v3674, 7
      %v3676 = vsub.s32 %v3673, %v3675
      %v3677 = vrot.slane %v3649, %v3676
      %v3678 = vcombine.high %v3656, %v3656
      %v3679 = vcombine.high %v3663, %v3663
      %v3680 = vcombine.high %v3670, %v3670
      %v3681 = vcombine.high %v3677, %v3677
      %v3682 = vcombine.high %v3378, %v3378
      %v3684 = vunpack.c.l.s4 1966171168
      %v3685 = vunpack.c.0.s8 %v3684
      %v3686 = vlaneseq
      %v3687 = vshrl.u32 %v3686, 7
      %v3688 = vsub.s32 %v3685, %v3687
      %v3689 = vrot.slane %v3378, %v3688
      %v3691 = vunpack.c.l.s4 1966171168
      %v3692 = vunpack.c.0.s8 %v3691
      %v3693 = vlaneseq
      %v3694 = vshrl.u32 %v3693, 7
      %v3695 = vsub.s32 %v3692, %v3694
      %v3696 = vrot.slane %v3682, %v3695
      %v3697 = vcombine.high %v3689, %v3689
      %v3698 = vcombine.high %v3696, %v3696
      %v3700 = vunpack.c.l.s4 1966171168
      %v3701 = vunpack.c.0.s8 %v3700
      %v3702 = vlaneseq
      %v3703 = vshrl.u32 %v3702, 7
      %v3704 = vsub.s32 %v3701, %v3703
      %v3705 = vrot.slane %v3689, %v3704
      %v3707 = vunpack.c.l.s4 1966171168
      %v3708 = vunpack.c.0.s8 %v3707
      %v3709 = vlaneseq
      %v3710 = vshrl.u32 %v3709, 7
      %v3711 = vsub.s32 %v3708, %v3710
      %v3712 = vrot.slane %v3696, %v3711
      %v3714 = vunpack.c.l.s4 1966171168
      %v3715 = vunpack.c.0.s8 %v3714
      %v3716 = vlaneseq
      %v3717 = vshrl.u32 %v3716, 7
      %v3718 = vsub.s32 %v3715, %v3717
      %v3719 = vrot.slane %v3697, %v3718
      %v3721 = vunpack.c.l.s4 1966171168
      %v3722 = vunpack.c.0.s8 %v3721
      %v3723 = vlaneseq
      %v3724 = vshrl.u32 %v3723, 7
      %v3725 = vsub.s32 %v3722, %v3724
      %v3726 = vrot.slane %v3698, %v3725
      %v3727 = vcombine.high %v3705, %v3705
      %v3728 = vcombine.high %v3712, %v3712
      %v3729 = vcombine.high %v3719, %v3719
      %v3730 = vcombine.high %v3726, %v3726
      %vm3787 = vcmask 60416
      %v3788 = vsel %vm3787, %v791, 0.0
      %3789 = vadd.xlane.f32.xlu0 %v3788
      %v3790 = vpop.xlane.xlu0 %3789
      %v3791 = vsel %vm3787, %v792, 0.0
      %3792 = vadd.xlane.f32.xlu0 %v3791
      %v3793 = vpop.xlane.xlu0 %3792
      %v3794 = vsel %vm3787, %v793, 0.0
      %3795 = vadd.xlane.f32.xlu0 %v3794
      %v3796 = vpop.xlane.xlu0 %3795
      %v3797 = vsel %vm3787, %v794, 0.0
      %3798 = vadd.xlane.f32.xlu0 %v3797
      %v3799 = vpop.xlane.xlu0 %3798
      %v3800 = vsel %vm3787, %v795, 0.0
      %3801 = vadd.xlane.f32.xlu0 %v3800
      %v3802 = vpop.xlane.xlu0 %3801
      %v3803 = vsel %vm3787, %v796, 0.0
      %3804 = vadd.xlane.f32.xlu0 %v3803
      %v3805 = vpop.xlane.xlu0 %3804
      %v3806 = vsel %vm3787, %v797, 0.0
      %3807 = vadd.xlane.f32.xlu0 %v3806
      %v3808 = vpop.xlane.xlu0 %3807
      %v3809 = vsel %vm3787, %v798, 0.0
      %3810 = vadd.xlane.f32.xlu0 %v3809
      %v3811 = vpop.xlane.xlu0 %3810
      %vm3812 = vcmp.gt.f32.partialorder %v3790, 0.0
      %vm3813 = vcmp.gt.f32.partialorder %v3793, 0.0
      %vm3814 = vcmp.gt.f32.partialorder %v3796, 0.0
      %vm3815 = vcmp.gt.f32.partialorder %v3799, 0.0
      %vm3816 = vcmp.gt.f32.partialorder %v3802, 0.0
      %vm3817 = vcmp.gt.f32.partialorder %v3805, 0.0
      %vm3818 = vcmp.gt.f32.partialorder %v3808, 0.0
      %vm3819 = vcmp.gt.f32.partialorder %v3811, 0.0
      %v3820 = vld [vmem:[%s11] sm:$0xff]
      %v3821 = vld [vmem:[%s11 + $0x8] sm:$0xff]
      %v3822 = vld [vmem:[%s12] sm:$0x1]
      %v3824 = vlaneseq
      %v3825 = vshrl.u32 %v3824, 7
      %v3826 = vsub.s32 0, %v3825
      %v3827 = vrot.slane %v3822, %v3826
      %3829 = vmatprep.subr.mxu0 0.0
      %3830 = vmatpush1.msra.mxu0 0.0
      %3831 = vmatprep.subr.mxu0 0.0
      %3832 = vmatpush1.msra.mxu0 0.0
      %3833 = vmatprep.subr.mxu0 0.0
      %3834 = vmatpush1.msra.mxu0 0.0
      %3835 = vmatprep.subr.mxu0 0.0
      %3836 = vmatpush1.msra.mxu0 0.0
      %3837 = vmatprep.subr.mxu0 0.0
      %3838 = vmatpush1.msra.mxu0 0.0
      %3839 = vmatprep.subr.mxu0 0.0
      %3840 = vmatpush1.msra.mxu0 0.0
      %3841 = vmatprep.subr.mxu0 0.0
      %3842 = vmatpush1.msra.mxu0 0.0
      %3843 = vmatprep.subr.mxu0 0.0
      %3844 = vmatpush1.msra.mxu0 0.0
      %3845 = vmatprep.subr.mxu0 0.0
      %3846 = vmatpush1.msra.mxu0 0.0
      %3847 = vmatprep.subr.mxu0 0.0
      %3848 = vmatpush1.msra.mxu0 0.0
      %3849 = vmatprep.subr.mxu0 0.0
      %3850 = vmatpush1.msra.mxu0 0.0
      %3851 = vmatprep.subr.mxu0 0.0
      %3852 = vmatpush1.msra.mxu0 0.0
      %3853 = vmatprep.subr.mxu0 0.0
      %3854 = vmatpush1.msra.mxu0 0.0
      %3855 = vmatprep.subr.mxu0 0.0
      %3856 = vmatpush1.msra.mxu0 0.0
      %3857 = vmatprep.subr.mxu0 0.0
      %3858 = vmatpush1.msra.mxu0 %v3821
      %3859 = vmatprep.subr.mxu0 0.0
      %3860 = vmatpush1.msra.mxu0 %v3820
      %3861 = vmatprep.subr.mxu0 0.0
      %3862 = vmatpush2.msra.mxu0 0.0
      %3863 = vmatprep.subr.mxu0 0.0
      %3864 = vmatpush2.msra.mxu0 0.0
      %3865 = vmatprep.subr.mxu0 0.0
      %3866 = vmatpush2.msra.mxu0 0.0
      %3867 = vmatprep.subr.mxu0 0.0
      %3868 = vmatpush2.msra.mxu0 0.0
      %3869 = vmatprep.subr.mxu0 0.0
      %3870 = vmatpush2.msra.mxu0 0.0
      %3871 = vmatprep.subr.mxu0 0.0
      %3872 = vmatpush2.msra.mxu0 0.0
      %3873 = vmatprep.subr.mxu0 0.0
      %3874 = vmatpush2.msra.mxu0 0.0
      %3875 = vmatprep.subr.mxu0 0.0
      %3876 = vmatpush2.msra.mxu0 0.0
      %3877 = vmatprep.subr.mxu0 0.0
      %3878 = vmatpush2.msra.mxu0 0.0
      %3879 = vmatprep.subr.mxu0 0.0
      %3880 = vmatpush2.msra.mxu0 0.0
      %3881 = vmatprep.subr.mxu0 0.0
      %3882 = vmatpush2.msra.mxu0 0.0
      %3883 = vmatprep.subr.mxu0 0.0
      %3884 = vmatpush2.msra.mxu0 0.0
      %3885 = vmatprep.subr.mxu0 0.0
      %3886 = vmatpush2.msra.mxu0 0.0
      %3887 = vmatprep.subr.mxu0 0.0
      %3888 = vmatpush2.msra.mxu0 0.0
      %3889 = vmatprep.subr.mxu0 0.0
      %3890 = vmatpush2.msra.mxu0 0.0
      %3891 = vmatprep.subr.mxu0 0.0
      %3892 = vmatpush2.msra.mxu0 0.0
      %3893 = vmatprep.mubr.f32.mxu0 0.0
      %3894 = vmatmul.mubr.f32.gmra.mxu0 %v811
      %v3895 = vpop.f32.mrf.mxu0
      %v3896 = vadd.f32 %v3827, %v3895
      %v3897 = vpop.f32.mrf.mxu0
      %3898 = vdwg.mxu0
      %v3899 = vld [vmem:[%s13] sm:$0xff]
      %v3900 = vld [vmem:[%s13 + $0x8] sm:$0xff]
      %v3901 = vld [vmem:[%s13 + $0x10] sm:$0xff]
      %v3902 = vld [vmem:[%s13 + $0x18] sm:$0xff]
      %v3903 = vld [vmem:[%s14] sm:$0x1]
      %v3905 = vlaneseq
      %v3906 = vshrl.u32 %v3905, 7
      %v3907 = vsub.s32 0, %v3906
      %v3908 = vrot.slane %v3903, %v3907
      %v3910 = vcombine.low %v3411, %v3425
      %v3911 = vcombine.low %v3433, %v3435
      %v3912 = vcombine.low %v3436, %v3460
      %v3913 = vcombine.low %v3474, %v3482
      %v3915 = vunpack.c.l.s4 1966171168
      %v3916 = vunpack.c.0.s8 %v3915
      %v3917 = vlaneseq
      %v3918 = vshrl.u32 %v3917, 7
      %v3919 = vsub.s32 %v3916, %v3918
      %v3920 = vrot.slane %v3910, %v3919
      %v3922 = vunpack.c.l.s4 1966171168
      %v3923 = vunpack.c.0.s8 %v3922
      %v3924 = vlaneseq
      %v3925 = vshrl.u32 %v3924, 7
      %v3926 = vsub.s32 %v3923, %v3925
      %v3927 = vrot.slane %v3911, %v3926
      %v3929 = vunpack.c.l.s4 1966171168
      %v3930 = vunpack.c.0.s8 %v3929
      %v3931 = vlaneseq
      %v3932 = vshrl.u32 %v3931, 7
      %v3933 = vsub.s32 %v3930, %v3932
      %v3934 = vrot.slane %v3912, %v3933
      %v3936 = vunpack.c.l.s4 1966171168
      %v3937 = vunpack.c.0.s8 %v3936
      %v3938 = vlaneseq
      %v3939 = vshrl.u32 %v3938, 7
      %v3940 = vsub.s32 %v3937, %v3939
      %v3941 = vrot.slane %v3913, %v3940
      %v3942 = vcombine.low %v3920, %v3927
      %v3943 = vcombine.low %v3934, %v3941
      %v3945 = vunpack.c.l.s4 1966171168
      %v3946 = vunpack.c.0.s8 %v3945
      %v3947 = vlaneseq
      %v3948 = vshrl.u32 %v3947, 7
      %v3949 = vsub.s32 %v3946, %v3948
      %v3950 = vrot.slane %v3942, %v3949
      %v3952 = vunpack.c.l.s4 1966171168
      %v3953 = vunpack.c.0.s8 %v3952
      %v3954 = vlaneseq
      %v3955 = vshrl.u32 %v3954, 7
      %v3956 = vsub.s32 %v3953, %v3955
      %v3957 = vrot.slane %v3943, %v3956
      %v3958 = vcombine.low %v3950, %v3957
      %v3959 = vcombine.low %v3483, %v3485
      %v3960 = vcombine.low %v3509, %v3523
      %v3961 = vcombine.low %v3530, %v3532
      %v3962 = vcombine.low %v3534, %v3558
      %v3964 = vunpack.c.l.s4 1966171168
      %v3965 = vunpack.c.0.s8 %v3964
      %v3966 = vlaneseq
      %v3967 = vshrl.u32 %v3966, 7
      %v3968 = vsub.s32 %v3965, %v3967
      %v3969 = vrot.slane %v3959, %v3968
      %v3971 = vunpack.c.l.s4 1966171168
      %v3972 = vunpack.c.0.s8 %v3971
      %v3973 = vlaneseq
      %v3974 = vshrl.u32 %v3973, 7
      %v3975 = vsub.s32 %v3972, %v3974
      %v3976 = vrot.slane %v3960, %v3975
      %v3978 = vunpack.c.l.s4 1966171168
      %v3979 = vunpack.c.0.s8 %v3978
      %v3980 = vlaneseq
      %v3981 = vshrl.u32 %v3980, 7
      %v3982 = vsub.s32 %v3979, %v3981
      %v3983 = vrot.slane %v3961, %v3982
      %v3985 = vunpack.c.l.s4 1966171168
      %v3986 = vunpack.c.0.s8 %v3985
      %v3987 = vlaneseq
      %v3988 = vshrl.u32 %v3987, 7
      %v3989 = vsub.s32 %v3986, %v3988
      %v3990 = vrot.slane %v3962, %v3989
      %v3991 = vcombine.low %v3969, %v3976
      %v3992 = vcombine.low %v3983, %v3990
      %v3994 = vunpack.c.l.s4 1966171168
      %v3995 = vunpack.c.0.s8 %v3994
      %v3996 = vlaneseq
      %v3997 = vshrl.u32 %v3996, 7
      %v3998 = vsub.s32 %v3995, %v3997
      %v3999 = vrot.slane %v3991, %v3998
      %v4001 = vunpack.c.l.s4 1966171168
      %v4002 = vunpack.c.0.s8 %v4001
      %v4003 = vlaneseq
      %v4004 = vshrl.u32 %v4003, 7
      %v4005 = vsub.s32 %v4002, %v4004
      %v4006 = vrot.slane %v3992, %v4005
      %v4007 = vcombine.low %v3999, %v4006
      %v4008 = vcombine.low %v3565, %v3579
      %v4009 = vcombine.low %v3581, %v3583
      %v4010 = vcombine.low %v3631, %v3614
      %v4011 = vcombine.low %v3628, %v3630
      %v4013 = vunpack.c.l.s4 1966171168
      %v4014 = vunpack.c.0.s8 %v4013
      %v4015 = vlaneseq
      %v4016 = vshrl.u32 %v4015, 7
      %v4017 = vsub.s32 %v4014, %v4016
      %v4018 = vrot.slane %v4008, %v4017
      %v4020 = vunpack.c.l.s4 1966171168
      %v4021 = vunpack.c.0.s8 %v4020
      %v4022 = vlaneseq
      %v4023 = vshrl.u32 %v4022, 7
      %v4024 = vsub.s32 %v4021, %v4023
      %v4025 = vrot.slane %v4009, %v4024
      %v4027 = vunpack.c.l.s4 1966171168
      %v4028 = vunpack.c.0.s8 %v4027
      %v4029 = vlaneseq
      %v4030 = vshrl.u32 %v4029, 7
      %v4031 = vsub.s32 %v4028, %v4030
      %v4032 = vrot.slane %v4010, %v4031
      %v4034 = vunpack.c.l.s4 1966171168
      %v4035 = vunpack.c.0.s8 %v4034
      %v4036 = vlaneseq
      %v4037 = vshrl.u32 %v4036, 7
      %v4038 = vsub.s32 %v4035, %v4037
      %v4039 = vrot.slane %v4011, %v4038
      %v4040 = vcombine.low %v4018, %v4025
      %v4041 = vcombine.low %v4032, %v4039
      %v4043 = vunpack.c.l.s4 1966171168
      %v4044 = vunpack.c.0.s8 %v4043
      %v4045 = vlaneseq
      %v4046 = vshrl.u32 %v4045, 7
      %v4047 = vsub.s32 %v4044, %v4046
      %v4048 = vrot.slane %v4040, %v4047
      %v4050 = vunpack.c.l.s4 1966171168
      %v4051 = vunpack.c.0.s8 %v4050
      %v4052 = vlaneseq
      %v4053 = vshrl.u32 %v4052, 7
      %v4054 = vsub.s32 %v4051, %v4053
      %v4055 = vrot.slane %v4041, %v4054
      %v4056 = vcombine.low %v4048, %v4055
      %v4057 = vcombine.low %v3678, %v3680
      %v4058 = vcombine.low %v3663, %v3677
      %v4059 = vcombine.low %v3719, %v3727
      %v4060 = vcombine.low %v3729, %v3712
      %v4062 = vunpack.c.l.s4 1966171168
      %v4063 = vunpack.c.0.s8 %v4062
      %v4064 = vlaneseq
      %v4065 = vshrl.u32 %v4064, 7
      %v4066 = vsub.s32 %v4063, %v4065
      %v4067 = vrot.slane %v4057, %v4066
      %v4069 = vunpack.c.l.s4 1966171168
      %v4070 = vunpack.c.0.s8 %v4069
      %v4071 = vlaneseq
      %v4072 = vshrl.u32 %v4071, 7
      %v4073 = vsub.s32 %v4070, %v4072
      %v4074 = vrot.slane %v4058, %v4073
      %v4076 = vunpack.c.l.s4 1966171168
      %v4077 = vunpack.c.0.s8 %v4076
      %v4078 = vlaneseq
      %v4079 = vshrl.u32 %v4078, 7
      %v4080 = vsub.s32 %v4077, %v4079
      %v4081 = vrot.slane %v4059, %v4080
      %v4083 = vunpack.c.l.s4 1966171168
      %v4084 = vunpack.c.0.s8 %v4083
      %v4085 = vlaneseq
      %v4086 = vshrl.u32 %v4085, 7
      %v4087 = vsub.s32 %v4084, %v4086
      %v4088 = vrot.slane %v4060, %v4087
      %v4089 = vcombine.low %v4067, %v4074
      %v4090 = vcombine.low %v4081, %v4088
      %v4092 = vunpack.c.l.s4 1966171168
      %v4093 = vunpack.c.0.s8 %v4092
      %v4094 = vlaneseq
      %v4095 = vshrl.u32 %v4094, 7
      %v4096 = vsub.s32 %v4093, %v4095
      %v4097 = vrot.slane %v4089, %v4096
      %v4099 = vunpack.c.l.s4 1966171168
      %v4100 = vunpack.c.0.s8 %v4099
      %v4101 = vlaneseq
      %v4102 = vshrl.u32 %v4101, 7
      %v4103 = vsub.s32 %v4100, %v4102
      %v4104 = vrot.slane %v4090, %v4103
      %v4105 = vcombine.low %v4097, %v4104
      %v4106 = vsel %vm894, %v3958, 0
      %v4108 = vsel %vm894, %v4007, 0
      %v4110 = vsel %vm894, %v4056, 0
      %v4112 = vsel %vm894, %v4105, 0
      %4114 = vmatprep.subr.mxu0 0.0
      %4115 = vmatpush1.msra.mxu0 0.0
      %4116 = vmatprep.subr.mxu0 0.0
      %4117 = vmatpush1.msra.mxu0 0.0
      %4118 = vmatprep.subr.mxu0 0.0
      %4119 = vmatpush1.msra.mxu0 0.0
      %4120 = vmatprep.subr.mxu0 0.0
      %4121 = vmatpush1.msra.mxu0 0.0
      %4122 = vmatprep.subr.mxu0 0.0
      %4123 = vmatpush1.msra.mxu0 0.0
      %4124 = vmatprep.subr.mxu0 0.0
      %4125 = vmatpush1.msra.mxu0 0.0
      %4126 = vmatprep.subr.mxu0 0.0
      %4127 = vmatpush1.msra.mxu0 0.0
      %4128 = vmatprep.subr.mxu0 0.0
      %4129 = vmatpush1.msra.mxu0 0.0
      %4130 = vmatprep.subr.mxu0 0.0
      %4131 = vmatpush1.msra.mxu0 0.0
      %4132 = vmatprep.subr.mxu0 0.0
      %4133 = vmatpush1.msra.mxu0 0.0
      %4134 = vmatprep.subr.mxu0 0.0
      %4135 = vmatpush1.msra.mxu0 0.0
      %4136 = vmatprep.subr.mxu0 0.0
      %4137 = vmatpush1.msra.mxu0 0.0
      %4138 = vmatprep.subr.mxu0 0.0
      %4139 = vmatpush1.msra.mxu0 %v3902
      %4140 = vmatprep.subr.mxu0 0.0
      %4141 = vmatpush1.msra.mxu0 %v3901
      %4142 = vmatprep.subr.mxu0 0.0
      %4143 = vmatpush1.msra.mxu0 %v3900
      %4144 = vmatprep.subr.mxu0 0.0
      %4145 = vmatpush1.msra.mxu0 %v3899
      %4146 = vmatprep.subr.mxu0 0.0
      %4147 = vmatpush2.msra.mxu0 0.0
      %4148 = vmatprep.subr.mxu0 0.0
      %4149 = vmatpush2.msra.mxu0 0.0
      %4150 = vmatprep.subr.mxu0 0.0
      %4151 = vmatpush2.msra.mxu0 0.0
      %4152 = vmatprep.subr.mxu0 0.0
      %4153 = vmatpush2.msra.mxu0 0.0
      %4154 = vmatprep.subr.mxu0 0.0
      %4155 = vmatpush2.msra.mxu0 0.0
      %4156 = vmatprep.subr.mxu0 0.0
      %4157 = vmatpush2.msra.mxu0 0.0
      %4158 = vmatprep.subr.mxu0 0.0
      %4159 = vmatpush2.msra.mxu0 0.0
      %4160 = vmatprep.subr.mxu0 0.0
      %4161 = vmatpush2.msra.mxu0 0.0
      %4162 = vmatprep.subr.mxu0 0.0
      %4163 = vmatpush2.msra.mxu0 0.0
      %4164 = vmatprep.subr.mxu0 0.0
      %4165 = vmatpush2.msra.mxu0 0.0
      %4166 = vmatprep.subr.mxu0 0.0
      %4167 = vmatpush2.msra.mxu0 0.0
      %4168 = vmatprep.subr.mxu0 0.0
      %4169 = vmatpush2.msra.mxu0 0.0
      %4170 = vmatprep.subr.mxu0 0.0
      %4171 = vmatpush2.msra.mxu0 0.0
      %4172 = vmatprep.subr.mxu0 0.0
      %4173 = vmatpush2.msra.mxu0 0.0
      %4174 = vmatprep.subr.mxu0 0.0
      %4175 = vmatpush2.msra.mxu0 0.0
      %4176 = vmatprep.subr.mxu0 0.0
      %4177 = vmatpush2.msra.mxu0 0.0
      %4178 = vmatprep.mubr.f32.mxu0 0.0
      %4179 = vmatmul.mubr.f32.gmra.mxu0 %v4106
      %v4180 = vpop.f32.mrf.mxu0
      %v4181 = vadd.f32 %v3908, %v4180
      %v4182 = vpop.f32.mrf.mxu0
      %4183 = vmatprep.mubr.f32.mxu0 0.0
      %4184 = vmatmul.mubr.f32.gmra.mxu0 %v4108
      %v4185 = vpop.f32.mrf.mxu0
      %v4186 = vadd.f32 %v3908, %v4185
      %v4187 = vpop.f32.mrf.mxu0
      %4188 = vmatprep.mubr.f32.mxu0 0.0
      %4189 = vmatmul.mubr.f32.gmra.mxu0 %v4110
      %v4190 = vpop.f32.mrf.mxu0
      %v4191 = vadd.f32 %v3908, %v4190
      %v4192 = vpop.f32.mrf.mxu0
      %4193 = vmatprep.mubr.f32.mxu0 0.0
      %4194 = vmatmul.mubr.f32.gmra.mxu0 %v4112
      %v4195 = vpop.f32.mrf.mxu0
      %v4196 = vadd.f32 %v3908, %v4195
      %v4197 = vpop.f32.mrf.mxu0
      %4198 = vdwg.mxu0
      %v4199 = vtanh.pop %v4181
      %v4200 = vtanh.pop %v4186
      %v4201 = vtanh.pop %v4191
      %v4202 = vtanh.pop %v4196
      %v4207 = vcombine.high %v4199, %v4199
      %v4208 = vcombine.high %v4200, %v4200
      %v4209 = vcombine.high %v4201, %v4201
      %v4210 = vcombine.high %v4202, %v4202
      %v4216 = vcombine.high %v3896, %v3896
      %v4218 = vunpack.c.l.s4 1966171168
      %v4219 = vunpack.c.0.s8 %v4218
      %v4220 = vlaneseq
      %v4221 = vshrl.u32 %v4220, 7
      %v4222 = vsub.s32 %v4219, %v4221
      %v4223 = vrot.slane %v3896, %v4222
      %v4225 = vunpack.c.l.s4 1966171168
      %v4226 = vunpack.c.0.s8 %v4225
      %v4227 = vlaneseq
      %v4228 = vshrl.u32 %v4227, 7
      %v4229 = vsub.s32 %v4226, %v4228
      %v4230 = vrot.slane %v4216, %v4229
      %v4231 = vcombine.high %v4223, %v4223
      %v4232 = vcombine.high %v4230, %v4230
      %v4234 = vunpack.c.l.s4 1966171168
      %v4235 = vunpack.c.0.s8 %v4234
      %v4236 = vlaneseq
      %v4237 = vshrl.u32 %v4236, 7
      %v4238 = vsub.s32 %v4235, %v4237
      %v4239 = vrot.slane %v4223, %v4238
      %v4241 = vunpack.c.l.s4 1966171168
      %v4242 = vunpack.c.0.s8 %v4241
      %v4243 = vlaneseq
      %v4244 = vshrl.u32 %v4243, 7
      %v4245 = vsub.s32 %v4242, %v4244
      %v4246 = vrot.slane %v4230, %v4245
      %v4248 = vunpack.c.l.s4 1966171168
      %v4249 = vunpack.c.0.s8 %v4248
      %v4250 = vlaneseq
      %v4251 = vshrl.u32 %v4250, 7
      %v4252 = vsub.s32 %v4249, %v4251
      %v4253 = vrot.slane %v4231, %v4252
      %v4255 = vunpack.c.l.s4 1966171168
      %v4256 = vunpack.c.0.s8 %v4255
      %v4257 = vlaneseq
      %v4258 = vshrl.u32 %v4257, 7
      %v4259 = vsub.s32 %v4256, %v4258
      %v4260 = vrot.slane %v4232, %v4259
      %v4261 = vcombine.high %v4239, %v4239
      %v4262 = vcombine.high %v4246, %v4246
      %v4263 = vcombine.high %v4253, %v4253
      %v4264 = vcombine.high %v4260, %v4260
      %v4265 = vlaneseq
      %v4266 = vshrl.u32 %v4265, 7
      %v4267 = vsub.s32 0, %v4266
      %v4268 = vrot.slane %v4239, %v4267
      %v4269 = vlaneseq
      %v4270 = vshrl.u32 %v4269, 7
      %v4271 = vsub.s32 0, %v4270
      %v4272 = vrot.slane %v4253, %v4271
      %v4273 = vlaneseq
      %v4274 = vshrl.u32 %v4273, 7
      %v4275 = vsub.s32 0, %v4274
      %v4276 = vrot.slane %v4261, %v4275
      %v4277 = vlaneseq
      %v4278 = vshrl.u32 %v4277, 7
      %v4279 = vsub.s32 0, %v4278
      %v4280 = vrot.slane %v4263, %v4279
      %v4281 = vlaneseq
      %v4282 = vshrl.u32 %v4281, 7
      %v4283 = vsub.s32 0, %v4282
      %v4284 = vrot.slane %v4246, %v4283
      %v4285 = vlaneseq
      %v4286 = vshrl.u32 %v4285, 7
      %v4287 = vsub.s32 0, %v4286
      %v4288 = vrot.slane %v4260, %v4287
      %v4289 = vlaneseq
      %v4290 = vshrl.u32 %v4289, 7
      %v4291 = vsub.s32 0, %v4290
      %v4292 = vrot.slane %v4262, %v4291
      %v4293 = vlaneseq
      %v4294 = vshrl.u32 %v4293, 7
      %v4295 = vsub.s32 0, %v4294
      %v4296 = vrot.slane %v4264, %v4295
      %v4305 = vmul.f32 %v4199, %v4268
      %v4306 = vmul.f32 %v4207, %v4272
      %v4307 = vmul.f32 %v4200, %v4276
      %v4308 = vmul.f32 %v4208, %v4280
      %v4309 = vmul.f32 %v4201, %v4284
      %v4310 = vmul.f32 %v4209, %v4288
      %v4311 = vmul.f32 %v4202, %v4292
      %v4312 = vmul.f32 %v4210, %v4296
      %vm4313 = vcmask 1043456
      %v4314 = vsel %vm4313, %v4305, 0.0
      %4315 = vadd.xlane.f32.xlu0 %v4314
      %v4316 = vpop.xlane.xlu0 %4315
      %v4317 = vsel %vm4313, %v4306, 0.0
      %4318 = vadd.xlane.f32.xlu0 %v4317
      %v4319 = vpop.xlane.xlu0 %4318
      %v4320 = vsel %vm4313, %v4307, 0.0
      %4321 = vadd.xlane.f32.xlu0 %v4320
      %v4322 = vpop.xlane.xlu0 %4321
      %v4323 = vsel %vm4313, %v4308, 0.0
      %4324 = vadd.xlane.f32.xlu0 %v4323
      %v4325 = vpop.xlane.xlu0 %4324
      %v4326 = vsel %vm4313, %v4309, 0.0
      %4327 = vadd.xlane.f32.xlu0 %v4326
      %v4328 = vpop.xlane.xlu0 %4327
      %v4329 = vsel %vm4313, %v4310, 0.0
      %4330 = vadd.xlane.f32.xlu0 %v4329
      %v4331 = vpop.xlane.xlu0 %4330
      %v4332 = vsel %vm4313, %v4311, 0.0
      %4333 = vadd.xlane.f32.xlu0 %v4332
      %v4334 = vpop.xlane.xlu0 %4333
      %v4335 = vsel %vm4313, %v4312, 0.0
      %4336 = vadd.xlane.f32.xlu0 %v4335
      %v4337 = vpop.xlane.xlu0 %4336
      %v4338 = vsel %vm3812, %v4316, -1e+30
      %v4339 = vsel %vm3813, %v4319, -1e+30
      %v4340 = vsel %vm3814, %v4322, -1e+30
      %v4341 = vsel %vm3815, %v4325, -1e+30
      %v4342 = vsel %vm3816, %v4328, -1e+30
      %v4343 = vsel %vm3817, %v4331, -1e+30
      %v4344 = vsel %vm3818, %v4334, -1e+30
      %v4345 = vsel %vm3819, %v4337, -1e+30
      %v4354 = vlaneseq
      %v4355 = vshrl.u32 %v4354, 7
      %v4356 = vsub.s32 %v1787, %v4355
      %v4357 = vrot.slane %v4338, %v4356
      %v4358 = vlaneseq
      %v4359 = vshrl.u32 %v4358, 7
      %v4360 = vsub.s32 %v1787, %v4359
      %v4361 = vrot.slane %v4339, %v4360
      %v4362 = vlaneseq
      %v4363 = vshrl.u32 %v4362, 7
      %v4364 = vsub.s32 %v1787, %v4363
      %v4365 = vrot.slane %v4340, %v4364
      %v4366 = vlaneseq
      %v4367 = vshrl.u32 %v4366, 7
      %v4368 = vsub.s32 %v1787, %v4367
      %v4369 = vrot.slane %v4341, %v4368
      %v4370 = vlaneseq
      %v4371 = vshrl.u32 %v4370, 7
      %v4372 = vsub.s32 %v1787, %v4371
      %v4373 = vrot.slane %v4342, %v4372
      %v4374 = vlaneseq
      %v4375 = vshrl.u32 %v4374, 7
      %v4376 = vsub.s32 %v1787, %v4375
      %v4377 = vrot.slane %v4343, %v4376
      %v4378 = vlaneseq
      %v4379 = vshrl.u32 %v4378, 7
      %v4380 = vsub.s32 %v1787, %v4379
      %v4381 = vrot.slane %v4344, %v4380
      %v4382 = vlaneseq
      %v4383 = vshrl.u32 %v4382, 7
      %v4384 = vsub.s32 %v1787, %v4383
      %v4385 = vrot.slane %v4345, %v4384
      %v4386 = vsel %vm2012, %v4361, %v4357
      %v4387 = vsel %vm2014, %v4365, %v4386
      %v4388 = vsel %vm2016, %v4369, %v4387
      %v4389 = vsel %vm2018, %v4373, %v4388
      %v4390 = vsel %vm2020, %v4377, %v4389
      %v4391 = vsel %vm2022, %v4381, %v4390
      %v4392 = vsel %vm3084, %v4385, %v4391
      %vm4394 = vcmask 31744
      %v4395 = vsel %vm4394, %v4392, -inf
      %4396 = vmax.xlane.f32.xlu0 %v4395
      %v4397 = vpop.xlane.xlu0 %4396
      %v4399 = vlaneseq
      %v4400 = vshrl.u32 %v4399, 7
      %v4401 = vsub.s32 0, %v4400
      %v4402 = vrot.slane %v4397, %v4401
      %v4403 = vlaneseq
      %v4404 = vshrl.u32 %v4403, 7
      %v4405 = vsub.s32 1, %v4404
      %v4406 = vrot.slane %v4397, %v4405
      %v4407 = vlaneseq
      %v4408 = vshrl.u32 %v4407, 7
      %v4409 = vsub.s32 2, %v4408
      %v4410 = vrot.slane %v4397, %v4409
      %v4411 = vlaneseq
      %v4412 = vshrl.u32 %v4411, 7
      %v4413 = vsub.s32 3, %v4412
      %v4414 = vrot.slane %v4397, %v4413
      %v4415 = vlaneseq
      %v4416 = vshrl.u32 %v4415, 7
      %v4417 = vsub.s32 4, %v4416
      %v4418 = vrot.slane %v4397, %v4417
      %v4419 = vlaneseq
      %v4420 = vshrl.u32 %v4419, 7
      %v4421 = vsub.s32 5, %v4420
      %v4422 = vrot.slane %v4397, %v4421
      %v4423 = vlaneseq
      %v4424 = vshrl.u32 %v4423, 7
      %v4425 = vsub.s32 6, %v4424
      %v4426 = vrot.slane %v4397, %v4425
      %v4427 = vlaneseq
      %v4428 = vshrl.u32 %v4427, 7
      %v4429 = vsub.s32 7, %v4428
      %v4430 = vrot.slane %v4397, %v4429
      %v4439 = vsub.f32 %v4338, %v4402
      %v4440 = vsub.f32 %v4339, %v4406
      %v4441 = vsub.f32 %v4340, %v4410
      %v4442 = vsub.f32 %v4341, %v4414
      %v4443 = vsub.f32 %v4342, %v4418
      %v4444 = vsub.f32 %v4343, %v4422
      %v4445 = vsub.f32 %v4344, %v4426
      %v4446 = vsub.f32 %v4345, %v4430
      %v4447 = vmul.f32 %v4439, 1.442695
      %v4448 = vpow.pop %v4447
      %v4449 = vmul.f32 %v4440, 1.442695
      %v4450 = vpow.pop %v4449
      %v4451 = vmul.f32 %v4441, 1.442695
      %v4452 = vpow.pop %v4451
      %v4453 = vmul.f32 %v4442, 1.442695
      %v4454 = vpow.pop %v4453
      %v4455 = vmul.f32 %v4443, 1.442695
      %v4456 = vpow.pop %v4455
      %v4457 = vmul.f32 %v4444, 1.442695
      %v4458 = vpow.pop %v4457
      %v4459 = vmul.f32 %v4445, 1.442695
      %v4460 = vpow.pop %v4459
      %v4461 = vmul.f32 %v4446, 1.442695
      %v4462 = vpow.pop %v4461
      %4471 = vset.pattern.permute.xlu0 0
      %4472 = vperm.xlu0 %4471, %v4448
      %v4473 = vpop.permute.xlu0 %4472
      %4474 = vset.pattern.permute.xlu0 0
      %4475 = vperm.xlu0 %4474, %v4450
      %v4476 = vpop.permute.xlu0 %4475
      %4477 = vset.pattern.permute.xlu0 0
      %4478 = vperm.xlu0 %4477, %v4452
      %v4479 = vpop.permute.xlu0 %4478
      %4480 = vset.pattern.permute.xlu0 0
      %4481 = vperm.xlu0 %4480, %v4454
      %v4482 = vpop.permute.xlu0 %4481
      %4483 = vset.pattern.permute.xlu0 0
      %4484 = vperm.xlu0 %4483, %v4456
      %v4485 = vpop.permute.xlu0 %4484
      %4486 = vset.pattern.permute.xlu0 0
      %4487 = vperm.xlu0 %4486, %v4458
      %v4488 = vpop.permute.xlu0 %4487
      %4489 = vset.pattern.permute.xlu0 0
      %4490 = vperm.xlu0 %4489, %v4460
      %v4491 = vpop.permute.xlu0 %4490
      %4492 = vset.pattern.permute.xlu0 0
      %4493 = vperm.xlu0 %4492, %v4462
      %v4494 = vpop.permute.xlu0 %4493
      %v4495 = vlaneseq
      %v4496 = vshrl.u32 %v4495, 7
      %v4497 = vsub.s32 %v1787, %v4496
      %v4498 = vrot.slane %v4473, %v4497
      %v4499 = vlaneseq
      %v4500 = vshrl.u32 %v4499, 7
      %v4501 = vsub.s32 %v1787, %v4500
      %v4502 = vrot.slane %v4476, %v4501
      %v4503 = vlaneseq
      %v4504 = vshrl.u32 %v4503, 7
      %v4505 = vsub.s32 %v1787, %v4504
      %v4506 = vrot.slane %v4479, %v4505
      %v4507 = vlaneseq
      %v4508 = vshrl.u32 %v4507, 7
      %v4509 = vsub.s32 %v1787, %v4508
      %v4510 = vrot.slane %v4482, %v4509
      %v4511 = vlaneseq
      %v4512 = vshrl.u32 %v4511, 7
      %v4513 = vsub.s32 %v1787, %v4512
      %v4514 = vrot.slane %v4485, %v4513
      %v4515 = vlaneseq
      %v4516 = vshrl.u32 %v4515, 7
      %v4517 = vsub.s32 %v1787, %v4516
      %v4518 = vrot.slane %v4488, %v4517
      %v4519 = vlaneseq
      %v4520 = vshrl.u32 %v4519, 7
      %v4521 = vsub.s32 %v1787, %v4520
      %v4522 = vrot.slane %v4491, %v4521
      %v4523 = vlaneseq
      %v4524 = vshrl.u32 %v4523, 7
      %v4525 = vsub.s32 %v1787, %v4524
      %v4526 = vrot.slane %v4494, %v4525
      %v4527 = vsel %vm2012, %v4502, %v4498
      %v4528 = vsel %vm2014, %v4506, %v4527
      %v4529 = vsel %vm2016, %v4510, %v4528
      %v4530 = vsel %vm2018, %v4514, %v4529
      %v4531 = vsel %vm2020, %v4518, %v4530
      %v4532 = vsel %vm2022, %v4522, %v4531
      %v4533 = vsel %vm3084, %v4526, %v4532
      %v4535 = vsel %vm4394, %v4533, 0.0
      %4536 = vadd.xlane.f32.xlu0 %v4535
      %v4537 = vpop.xlane.xlu0 %4536
      %v4539 = vlaneseq
      %v4540 = vshrl.u32 %v4539, 7
      %v4541 = vsub.s32 0, %v4540
      %v4542 = vrot.slane %v4537, %v4541
      %v4543 = vlaneseq
      %v4544 = vshrl.u32 %v4543, 7
      %v4545 = vsub.s32 1, %v4544
      %v4546 = vrot.slane %v4537, %v4545
      %v4547 = vlaneseq
      %v4548 = vshrl.u32 %v4547, 7
      %v4549 = vsub.s32 2, %v4548
      %v4550 = vrot.slane %v4537, %v4549
      %v4551 = vlaneseq
      %v4552 = vshrl.u32 %v4551, 7
      %v4553 = vsub.s32 3, %v4552
      %v4554 = vrot.slane %v4537, %v4553
      %v4555 = vlaneseq
      %v4556 = vshrl.u32 %v4555, 7
      %v4557 = vsub.s32 4, %v4556
      %v4558 = vrot.slane %v4537, %v4557
      %v4559 = vlaneseq
      %v4560 = vshrl.u32 %v4559, 7
      %v4561 = vsub.s32 5, %v4560
      %v4562 = vrot.slane %v4537, %v4561
      %v4563 = vlaneseq
      %v4564 = vshrl.u32 %v4563, 7
      %v4565 = vsub.s32 6, %v4564
      %v4566 = vrot.slane %v4537, %v4565
      %v4567 = vlaneseq
      %v4568 = vshrl.u32 %v4567, 7
      %v4569 = vsub.s32 7, %v4568
      %v4570 = vrot.slane %v4537, %v4569
      %v4579 = vrcp.pop %v4542
      %v4580 = vmul.f32 %v4448, %v4579
      %v4581 = vrcp.pop %v4546
      %v4582 = vmul.f32 %v4450, %v4581
      %v4583 = vrcp.pop %v4550
      %v4584 = vmul.f32 %v4452, %v4583
      %v4585 = vrcp.pop %v4554
      %v4586 = vmul.f32 %v4454, %v4585
      %v4587 = vrcp.pop %v4558
      %v4588 = vmul.f32 %v4456, %v4587
      %v4589 = vrcp.pop %v4562
      %v4590 = vmul.f32 %v4458, %v4589
      %v4591 = vrcp.pop %v4566
      %v4592 = vmul.f32 %v4460, %v4591
      %v4593 = vrcp.pop %v4570
      %v4594 = vmul.f32 %v4462, %v4593
      %4596 = vset.pattern.permute.xlu0 0
      %4597 = vperm.xlu0 %4596, %v4580
      %v4598 = vpop.permute.xlu0 %4597
      %4600 = vset.pattern.permute.xlu0 0
      %4601 = vperm.xlu0 %4600, %v4582
      %v4602 = vpop.permute.xlu0 %4601
      %4604 = vset.pattern.permute.xlu0 0
      %4605 = vperm.xlu0 %4604, %v4584
      %v4606 = vpop.permute.xlu0 %4605
      %4608 = vset.pattern.permute.xlu0 0
      %4609 = vperm.xlu0 %4608, %v4586
      %v4610 = vpop.permute.xlu0 %4609
      %4612 = vset.pattern.permute.xlu0 0
      %4613 = vperm.xlu0 %4612, %v4588
      %v4614 = vpop.permute.xlu0 %4613
      %4616 = vset.pattern.permute.xlu0 0
      %4617 = vperm.xlu0 %4616, %v4590
      %v4618 = vpop.permute.xlu0 %4617
      %4620 = vset.pattern.permute.xlu0 0
      %4621 = vperm.xlu0 %4620, %v4592
      %v4622 = vpop.permute.xlu0 %4621
      %4624 = vset.pattern.permute.xlu0 0
      %4625 = vperm.xlu0 %4624, %v4594
      %v4626 = vpop.permute.xlu0 %4625
      %v4627 = vlaneseq
      %v4628 = vshrl.u32 %v4627, 7
      %v4629 = vsub.s32 0, %v4628
      %v4630 = vrot.slane %v4598, %v4629
      %v4631 = vlaneseq
      %v4632 = vshrl.u32 %v4631, 7
      %v4633 = vsub.s32 1, %v4632
      %v4634 = vrot.slane %v4598, %v4633
      %v4635 = vlaneseq
      %v4636 = vshrl.u32 %v4635, 7
      %v4637 = vsub.s32 2, %v4636
      %v4638 = vrot.slane %v4598, %v4637
      %v4639 = vlaneseq
      %v4640 = vshrl.u32 %v4639, 7
      %v4641 = vsub.s32 3, %v4640
      %v4642 = vrot.slane %v4598, %v4641
      %v4643 = vlaneseq
      %v4644 = vshrl.u32 %v4643, 7
      %v4645 = vsub.s32 0, %v4644
      %v4646 = vrot.slane %v4602, %v4645
      %v4647 = vlaneseq
      %v4648 = vshrl.u32 %v4647, 7
      %v4649 = vsub.s32 1, %v4648
      %v4650 = vrot.slane %v4602, %v4649
      %v4651 = vlaneseq
      %v4652 = vshrl.u32 %v4651, 7
      %v4653 = vsub.s32 2, %v4652
      %v4654 = vrot.slane %v4602, %v4653
      %v4655 = vlaneseq
      %v4656 = vshrl.u32 %v4655, 7
      %v4657 = vsub.s32 3, %v4656
      %v4658 = vrot.slane %v4602, %v4657
      %v4659 = vlaneseq
      %v4660 = vshrl.u32 %v4659, 7
      %v4661 = vsub.s32 0, %v4660
      %v4662 = vrot.slane %v4606, %v4661
      %v4663 = vlaneseq
      %v4664 = vshrl.u32 %v4663, 7
      %v4665 = vsub.s32 1, %v4664
      %v4666 = vrot.slane %v4606, %v4665
      %v4667 = vlaneseq
      %v4668 = vshrl.u32 %v4667, 7
      %v4669 = vsub.s32 2, %v4668
      %v4670 = vrot.slane %v4606, %v4669
      %v4671 = vlaneseq
      %v4672 = vshrl.u32 %v4671, 7
      %v4673 = vsub.s32 3, %v4672
      %v4674 = vrot.slane %v4606, %v4673
      %v4675 = vlaneseq
      %v4676 = vshrl.u32 %v4675, 7
      %v4677 = vsub.s32 0, %v4676
      %v4678 = vrot.slane %v4610, %v4677
      %v4679 = vlaneseq
      %v4680 = vshrl.u32 %v4679, 7
      %v4681 = vsub.s32 1, %v4680
      %v4682 = vrot.slane %v4610, %v4681
      %v4683 = vlaneseq
      %v4684 = vshrl.u32 %v4683, 7
      %v4685 = vsub.s32 2, %v4684
      %v4686 = vrot.slane %v4610, %v4685
      %v4687 = vlaneseq
      %v4688 = vshrl.u32 %v4687, 7
      %v4689 = vsub.s32 3, %v4688
      %v4690 = vrot.slane %v4610, %v4689
      %v4691 = vlaneseq
      %v4692 = vshrl.u32 %v4691, 7
      %v4693 = vsub.s32 0, %v4692
      %v4694 = vrot.slane %v4614, %v4693
      %v4695 = vlaneseq
      %v4696 = vshrl.u32 %v4695, 7
      %v4697 = vsub.s32 1, %v4696
      %v4698 = vrot.slane %v4614, %v4697
      %v4699 = vlaneseq
      %v4700 = vshrl.u32 %v4699, 7
      %v4701 = vsub.s32 2, %v4700
      %v4702 = vrot.slane %v4614, %v4701
      %v4703 = vlaneseq
      %v4704 = vshrl.u32 %v4703, 7
      %v4705 = vsub.s32 3, %v4704
      %v4706 = vrot.slane %v4614, %v4705
      %v4707 = vlaneseq
      %v4708 = vshrl.u32 %v4707, 7
      %v4709 = vsub.s32 0, %v4708
      %v4710 = vrot.slane %v4618, %v4709
      %v4711 = vlaneseq
      %v4712 = vshrl.u32 %v4711, 7
      %v4713 = vsub.s32 1, %v4712
      %v4714 = vrot.slane %v4618, %v4713
      %v4715 = vlaneseq
      %v4716 = vshrl.u32 %v4715, 7
      %v4717 = vsub.s32 2, %v4716
      %v4718 = vrot.slane %v4618, %v4717
      %v4719 = vlaneseq
      %v4720 = vshrl.u32 %v4719, 7
      %v4721 = vsub.s32 3, %v4720
      %v4722 = vrot.slane %v4618, %v4721
      %v4723 = vlaneseq
      %v4724 = vshrl.u32 %v4723, 7
      %v4725 = vsub.s32 0, %v4724
      %v4726 = vrot.slane %v4622, %v4725
      %v4727 = vlaneseq
      %v4728 = vshrl.u32 %v4727, 7
      %v4729 = vsub.s32 1, %v4728
      %v4730 = vrot.slane %v4622, %v4729
      %v4731 = vlaneseq
      %v4732 = vshrl.u32 %v4731, 7
      %v4733 = vsub.s32 2, %v4732
      %v4734 = vrot.slane %v4622, %v4733
      %v4735 = vlaneseq
      %v4736 = vshrl.u32 %v4735, 7
      %v4737 = vsub.s32 3, %v4736
      %v4738 = vrot.slane %v4622, %v4737
      %v4739 = vlaneseq
      %v4740 = vshrl.u32 %v4739, 7
      %v4741 = vsub.s32 0, %v4740
      %v4742 = vrot.slane %v4626, %v4741
      %v4743 = vlaneseq
      %v4744 = vshrl.u32 %v4743, 7
      %v4745 = vsub.s32 1, %v4744
      %v4746 = vrot.slane %v4626, %v4745
      %v4747 = vlaneseq
      %v4748 = vshrl.u32 %v4747, 7
      %v4749 = vsub.s32 2, %v4748
      %v4750 = vrot.slane %v4626, %v4749
      %v4751 = vlaneseq
      %v4752 = vshrl.u32 %v4751, 7
      %v4753 = vsub.s32 3, %v4752
      %v4754 = vrot.slane %v4626, %v4753
      %v4787 = vmul.f32 %v3411, %v4630
      %v4788 = vmul.f32 %v3425, %v4634
      %v4789 = vmul.f32 %v3433, %v4638
      %v4790 = vmul.f32 %v3435, %v4642
      %v4791 = vmul.f32 %v3436, %v4646
      %v4792 = vmul.f32 %v3460, %v4650
      %v4793 = vmul.f32 %v3474, %v4654
      %v4794 = vmul.f32 %v3482, %v4658
      %v4795 = vmul.f32 %v3483, %v4662
      %v4796 = vmul.f32 %v3485, %v4666
      %v4797 = vmul.f32 %v3509, %v4670
      %v4798 = vmul.f32 %v3523, %v4674
      %v4799 = vmul.f32 %v3530, %v4678
      %v4800 = vmul.f32 %v3532, %v4682
      %v4801 = vmul.f32 %v3534, %v4686
      %v4802 = vmul.f32 %v3558, %v4690
      %v4803 = vmul.f32 %v3565, %v4694
      %v4804 = vmul.f32 %v3579, %v4698
      %v4805 = vmul.f32 %v3581, %v4702
      %v4806 = vmul.f32 %v3583, %v4706
      %v4807 = vmul.f32 %v3631, %v4710
      %v4808 = vmul.f32 %v3614, %v4714
      %v4809 = vmul.f32 %v3628, %v4718
      %v4810 = vmul.f32 %v3630, %v4722
      %v4811 = vmul.f32 %v3678, %v4726
      %v4812 = vmul.f32 %v3680, %v4730
      %v4813 = vmul.f32 %v3663, %v4734
      %v4814 = vmul.f32 %v3677, %v4738
      %v4815 = vmul.f32 %v3719, %v4742
      %v4816 = vmul.f32 %v3727, %v4746
      %v4817 = vmul.f32 %v3729, %v4750
      %v4818 = vmul.f32 %v3712, %v4754
      %v4851 = vcombine.low %v4787, %v4788
      %v4852 = vcombine.low %v4789, %v4790
      %v4854 = vunpack.c.l.s4 1966171168
      %v4855 = vunpack.c.0.s8 %v4854
      %v4856 = vlaneseq
      %v4857 = vshrl.u32 %v4856, 7
      %v4858 = vsub.s32 %v4855, %v4857
      %v4859 = vrot.slane %v4851, %v4858
      %v4861 = vunpack.c.l.s4 1966171168
      %v4862 = vunpack.c.0.s8 %v4861
      %v4863 = vlaneseq
      %v4864 = vshrl.u32 %v4863, 7
      %v4865 = vsub.s32 %v4862, %v4864
      %v4866 = vrot.slane %v4852, %v4865
      %v4867 = vcombine.low %v4859, %v4866
      %v4869 = vunpack.c.l.s4 1966171168
      %v4870 = vunpack.c.0.s8 %v4869
      %v4871 = vlaneseq
      %v4872 = vshrl.u32 %v4871, 7
      %v4873 = vsub.s32 %v4870, %v4872
      %v4874 = vrot.slane %v4867, %v4873
      %v4875 = vcombine.low %v4791, %v4792
      %v4876 = vcombine.low %v4793, %v4794
      %v4878 = vunpack.c.l.s4 1966171168
      %v4879 = vunpack.c.0.s8 %v4878
      %v4880 = vlaneseq
      %v4881 = vshrl.u32 %v4880, 7
      %v4882 = vsub.s32 %v4879, %v4881
      %v4883 = vrot.slane %v4875, %v4882
      %v4885 = vunpack.c.l.s4 1966171168
      %v4886 = vunpack.c.0.s8 %v4885
      %v4887 = vlaneseq
      %v4888 = vshrl.u32 %v4887, 7
      %v4889 = vsub.s32 %v4886, %v4888
      %v4890 = vrot.slane %v4876, %v4889
      %v4891 = vcombine.low %v4883, %v4890
      %v4893 = vunpack.c.l.s4 1966171168
      %v4894 = vunpack.c.0.s8 %v4893
      %v4895 = vlaneseq
      %v4896 = vshrl.u32 %v4895, 7
      %v4897 = vsub.s32 %v4894, %v4896
      %v4898 = vrot.slane %v4891, %v4897
      %v4899 = vcombine.low %v4795, %v4796
      %v4900 = vcombine.low %v4797, %v4798
      %v4902 = vunpack.c.l.s4 1966171168
      %v4903 = vunpack.c.0.s8 %v4902
      %v4904 = vlaneseq
      %v4905 = vshrl.u32 %v4904, 7
      %v4906 = vsub.s32 %v4903, %v4905
      %v4907 = vrot.slane %v4899, %v4906
      %v4909 = vunpack.c.l.s4 1966171168
      %v4910 = vunpack.c.0.s8 %v4909
      %v4911 = vlaneseq
      %v4912 = vshrl.u32 %v4911, 7
      %v4913 = vsub.s32 %v4910, %v4912
      %v4914 = vrot.slane %v4900, %v4913
      %v4915 = vcombine.low %v4907, %v4914
      %v4917 = vunpack.c.l.s4 1966171168
      %v4918 = vunpack.c.0.s8 %v4917
      %v4919 = vlaneseq
      %v4920 = vshrl.u32 %v4919, 7
      %v4921 = vsub.s32 %v4918, %v4920
      %v4922 = vrot.slane %v4915, %v4921
      %v4923 = vcombine.low %v4799, %v4800
      %v4924 = vcombine.low %v4801, %v4802
      %v4926 = vunpack.c.l.s4 1966171168
      %v4927 = vunpack.c.0.s8 %v4926
      %v4928 = vlaneseq
      %v4929 = vshrl.u32 %v4928, 7
      %v4930 = vsub.s32 %v4927, %v4929
      %v4931 = vrot.slane %v4923, %v4930
      %v4933 = vunpack.c.l.s4 1966171168
      %v4934 = vunpack.c.0.s8 %v4933
      %v4935 = vlaneseq
      %v4936 = vshrl.u32 %v4935, 7
      %v4937 = vsub.s32 %v4934, %v4936
      %v4938 = vrot.slane %v4924, %v4937
      %v4939 = vcombine.low %v4931, %v4938
      %v4941 = vunpack.c.l.s4 1966171168
      %v4942 = vunpack.c.0.s8 %v4941
      %v4943 = vlaneseq
      %v4944 = vshrl.u32 %v4943, 7
      %v4945 = vsub.s32 %v4942, %v4944
      %v4946 = vrot.slane %v4939, %v4945
      %v4947 = vcombine.low %v4803, %v4804
      %v4948 = vcombine.low %v4805, %v4806
      %v4950 = vunpack.c.l.s4 1966171168
      %v4951 = vunpack.c.0.s8 %v4950
      %v4952 = vlaneseq
      %v4953 = vshrl.u32 %v4952, 7
      %v4954 = vsub.s32 %v4951, %v4953
      %v4955 = vrot.slane %v4947, %v4954
      %v4957 = vunpack.c.l.s4 1966171168
      %v4958 = vunpack.c.0.s8 %v4957
      %v4959 = vlaneseq
      %v4960 = vshrl.u32 %v4959, 7
      %v4961 = vsub.s32 %v4958, %v4960
      %v4962 = vrot.slane %v4948, %v4961
      %v4963 = vcombine.low %v4955, %v4962
      %v4965 = vunpack.c.l.s4 1966171168
      %v4966 = vunpack.c.0.s8 %v4965
      %v4967 = vlaneseq
      %v4968 = vshrl.u32 %v4967, 7
      %v4969 = vsub.s32 %v4966, %v4968
      %v4970 = vrot.slane %v4963, %v4969
      %v4971 = vcombine.low %v4807, %v4808
      %v4972 = vcombine.low %v4809, %v4810
      %v4974 = vunpack.c.l.s4 1966171168
      %v4975 = vunpack.c.0.s8 %v4974
      %v4976 = vlaneseq
      %v4977 = vshrl.u32 %v4976, 7
      %v4978 = vsub.s32 %v4975, %v4977
      %v4979 = vrot.slane %v4971, %v4978
      %v4981 = vunpack.c.l.s4 1966171168
      %v4982 = vunpack.c.0.s8 %v4981
      %v4983 = vlaneseq
      %v4984 = vshrl.u32 %v4983, 7
      %v4985 = vsub.s32 %v4982, %v4984
      %v4986 = vrot.slane %v4972, %v4985
      %v4987 = vcombine.low %v4979, %v4986
      %v4989 = vunpack.c.l.s4 1966171168
      %v4990 = vunpack.c.0.s8 %v4989
      %v4991 = vlaneseq
      %v4992 = vshrl.u32 %v4991, 7
      %v4993 = vsub.s32 %v4990, %v4992
      %v4994 = vrot.slane %v4987, %v4993
      %v4995 = vcombine.low %v4811, %v4812
      %v4996 = vcombine.low %v4813, %v4814
      %v4998 = vunpack.c.l.s4 1966171168
      %v4999 = vunpack.c.0.s8 %v4998
      %v5000 = vlaneseq
      %v5001 = vshrl.u32 %v5000, 7
      %v5002 = vsub.s32 %v4999, %v5001
      %v5003 = vrot.slane %v4995, %v5002
      %v5005 = vunpack.c.l.s4 1966171168
      %v5006 = vunpack.c.0.s8 %v5005
      %v5007 = vlaneseq
      %v5008 = vshrl.u32 %v5007, 7
      %v5009 = vsub.s32 %v5006, %v5008
      %v5010 = vrot.slane %v4996, %v5009
      %v5011 = vcombine.low %v5003, %v5010
      %v5013 = vunpack.c.l.s4 1966171168
      %v5014 = vunpack.c.0.s8 %v5013
      %v5015 = vlaneseq
      %v5016 = vshrl.u32 %v5015, 7
      %v5017 = vsub.s32 %v5014, %v5016
      %v5018 = vrot.slane %v5011, %v5017
      %v5019 = vcombine.low %v4815, %v4816
      %v5020 = vcombine.low %v4817, %v4818
      %v5022 = vunpack.c.l.s4 1966171168
      %v5023 = vunpack.c.0.s8 %v5022
      %v5024 = vlaneseq
      %v5025 = vshrl.u32 %v5024, 7
      %v5026 = vsub.s32 %v5023, %v5025
      %v5027 = vrot.slane %v5019, %v5026
      %v5029 = vunpack.c.l.s4 1966171168
      %v5030 = vunpack.c.0.s8 %v5029
      %v5031 = vlaneseq
      %v5032 = vshrl.u32 %v5031, 7
      %v5033 = vsub.s32 %v5030, %v5032
      %v5034 = vrot.slane %v5020, %v5033
      %v5035 = vcombine.low %v5027, %v5034
      %v5037 = vunpack.c.l.s4 1966171168
      %v5038 = vunpack.c.0.s8 %v5037
      %v5039 = vlaneseq
      %v5040 = vshrl.u32 %v5039, 7
      %v5041 = vsub.s32 %v5038, %v5040
      %v5042 = vrot.slane %v5035, %v5041
      %vm5051 = vcmask 257024
      %v5052 = vsel %vm5051, %v4874, 0.0
      %v5053 = vrot.slane %v5052, 4
      %v5054 = vadd.f32 %v5052, %v5053
      %v5055 = vrot.slane %v5054, 2
      %v5056 = vadd.f32 %v5054, %v5055
      %v5057 = vrot.slane %v5056, 1
      %v5058 = vadd.f32 %v5056, %v5057
      %v5059 = vsel %vm5051, %v4898, 0.0
      %v5060 = vrot.slane %v5059, 4
      %v5061 = vadd.f32 %v5059, %v5060
      %v5062 = vrot.slane %v5061, 2
      %v5063 = vadd.f32 %v5061, %v5062
      %v5064 = vrot.slane %v5063, 1
      %v5065 = vadd.f32 %v5063, %v5064
      %v5066 = vsel %vm5051, %v4922, 0.0
      %v5067 = vrot.slane %v5066, 4
      %v5068 = vadd.f32 %v5066, %v5067
      %v5069 = vrot.slane %v5068, 2
      %v5070 = vadd.f32 %v5068, %v5069
      %v5071 = vrot.slane %v5070, 1
      %v5072 = vadd.f32 %v5070, %v5071
      %v5073 = vsel %vm5051, %v4946, 0.0
      %v5074 = vrot.slane %v5073, 4
      %v5075 = vadd.f32 %v5073, %v5074
      %v5076 = vrot.slane %v5075, 2
      %v5077 = vadd.f32 %v5075, %v5076
      %v5078 = vrot.slane %v5077, 1
      %v5079 = vadd.f32 %v5077, %v5078
      %v5080 = vsel %vm5051, %v4970, 0.0
      %v5081 = vrot.slane %v5080, 4
      %v5082 = vadd.f32 %v5080, %v5081
      %v5083 = vrot.slane %v5082, 2
      %v5084 = vadd.f32 %v5082, %v5083
      %v5085 = vrot.slane %v5084, 1
      %v5086 = vadd.f32 %v5084, %v5085
      %v5087 = vsel %vm5051, %v4994, 0.0
      %v5088 = vrot.slane %v5087, 4
      %v5089 = vadd.f32 %v5087, %v5088
      %v5090 = vrot.slane %v5089, 2
      %v5091 = vadd.f32 %v5089, %v5090
      %v5092 = vrot.slane %v5091, 1
      %v5093 = vadd.f32 %v5091, %v5092
      %v5094 = vsel %vm5051, %v5018, 0.0
      %v5095 = vrot.slane %v5094, 4
      %v5096 = vadd.f32 %v5094, %v5095
      %v5097 = vrot.slane %v5096, 2
      %v5098 = vadd.f32 %v5096, %v5097
      %v5099 = vrot.slane %v5098, 1
      %v5100 = vadd.f32 %v5098, %v5099
      %v5101 = vsel %vm5051, %v5042, 0.0
      %v5102 = vrot.slane %v5101, 4
      %v5103 = vadd.f32 %v5101, %v5102
      %v5104 = vrot.slane %v5103, 2
      %v5105 = vadd.f32 %v5103, %v5104
      %v5106 = vrot.slane %v5105, 1
      %v5107 = vadd.f32 %v5105, %v5106
      %v5117 = vunpack.c.l.s4 1966171168
      %v5118 = vunpack.c.0.s8 %v5117
      %v5119 = vlaneseq
      %v5120 = vshrl.u32 %v5119, 7
      %v5121 = vsub.s32 %v5118, %v5120
      %v5122 = vrot.slane %v5058, %v5121
      %v5123 = vcombine.high %v5122, %v5122
      %v5125 = vunpack.c.l.s4 1966171168
      %v5126 = vunpack.c.0.s8 %v5125
      %v5127 = vlaneseq
      %v5128 = vshrl.u32 %v5127, 7
      %v5129 = vsub.s32 %v5126, %v5128
      %v5130 = vrot.slane %v5122, %v5129
      %v5132 = vunpack.c.l.s4 1966171168
      %v5133 = vunpack.c.0.s8 %v5132
      %v5134 = vlaneseq
      %v5135 = vshrl.u32 %v5134, 7
      %v5136 = vsub.s32 %v5133, %v5135
      %v5137 = vrot.slane %v5123, %v5136
      %v5138 = vcombine.high %v5130, %v5130
      %v5140 = vunpack.c.l.s4 1966171168
      %v5141 = vunpack.c.0.s8 %v5140
      %v5142 = vlaneseq
      %v5143 = vshrl.u32 %v5142, 7
      %v5144 = vsub.s32 %v5141, %v5143
      %v5145 = vrot.slane %v5065, %v5144
      %v5146 = vcombine.high %v5145, %v5145
      %v5148 = vunpack.c.l.s4 1966171168
      %v5149 = vunpack.c.0.s8 %v5148
      %v5150 = vlaneseq
      %v5151 = vshrl.u32 %v5150, 7
      %v5152 = vsub.s32 %v5149, %v5151
      %v5153 = vrot.slane %v5145, %v5152
      %v5155 = vunpack.c.l.s4 1966171168
      %v5156 = vunpack.c.0.s8 %v5155
      %v5157 = vlaneseq
      %v5158 = vshrl.u32 %v5157, 7
      %v5159 = vsub.s32 %v5156, %v5158
      %v5160 = vrot.slane %v5146, %v5159
      %v5161 = vcombine.high %v5153, %v5153
      %v5163 = vunpack.c.l.s4 1966171168
      %v5164 = vunpack.c.0.s8 %v5163
      %v5165 = vlaneseq
      %v5166 = vshrl.u32 %v5165, 7
      %v5167 = vsub.s32 %v5164, %v5166
      %v5168 = vrot.slane %v5072, %v5167
      %v5169 = vcombine.high %v5168, %v5168
      %v5171 = vunpack.c.l.s4 1966171168
      %v5172 = vunpack.c.0.s8 %v5171
      %v5173 = vlaneseq
      %v5174 = vshrl.u32 %v5173, 7
      %v5175 = vsub.s32 %v5172, %v5174
      %v5176 = vrot.slane %v5168, %v5175
      %v5178 = vunpack.c.l.s4 1966171168
      %v5179 = vunpack.c.0.s8 %v5178
      %v5180 = vlaneseq
      %v5181 = vshrl.u32 %v5180, 7
      %v5182 = vsub.s32 %v5179, %v5181
      %v5183 = vrot.slane %v5169, %v5182
      %v5184 = vcombine.high %v5176, %v5176
      %v5186 = vunpack.c.l.s4 1966171168
      %v5187 = vunpack.c.0.s8 %v5186
      %v5188 = vlaneseq
      %v5189 = vshrl.u32 %v5188, 7
      %v5190 = vsub.s32 %v5187, %v5189
      %v5191 = vrot.slane %v5079, %v5190
      %v5192 = vcombine.high %v5191, %v5191
      %v5194 = vunpack.c.l.s4 1966171168
      %v5195 = vunpack.c.0.s8 %v5194
      %v5196 = vlaneseq
      %v5197 = vshrl.u32 %v5196, 7
      %v5198 = vsub.s32 %v5195, %v5197
      %v5199 = vrot.slane %v5191, %v5198
      %v5201 = vunpack.c.l.s4 1966171168
      %v5202 = vunpack.c.0.s8 %v5201
      %v5203 = vlaneseq
      %v5204 = vshrl.u32 %v5203, 7
      %v5205 = vsub.s32 %v5202, %v5204
      %v5206 = vrot.slane %v5192, %v5205
      %v5207 = vcombine.high %v5199, %v5199
      %v5209 = vunpack.c.l.s4 1966171168
      %v5210 = vunpack.c.0.s8 %v5209
      %v5211 = vlaneseq
      %v5212 = vshrl.u32 %v5211, 7
      %v5213 = vsub.s32 %v5210, %v5212
      %v5214 = vrot.slane %v5086, %v5213
      %v5215 = vcombine.high %v5214, %v5214
      %v5217 = vunpack.c.l.s4 1966171168
      %v5218 = vunpack.c.0.s8 %v5217
      %v5219 = vlaneseq
      %v5220 = vshrl.u32 %v5219, 7
      %v5221 = vsub.s32 %v5218, %v5220
      %v5222 = vrot.slane %v5214, %v5221
      %v5224 = vunpack.c.l.s4 1966171168
      %v5225 = vunpack.c.0.s8 %v5224
      %v5226 = vlaneseq
      %v5227 = vshrl.u32 %v5226, 7
      %v5228 = vsub.s32 %v5225, %v5227
      %v5229 = vrot.slane %v5215, %v5228
      %v5230 = vcombine.high %v5222, %v5222
      %v5232 = vunpack.c.l.s4 1966171168
      %v5233 = vunpack.c.0.s8 %v5232
      %v5234 = vlaneseq
      %v5235 = vshrl.u32 %v5234, 7
      %v5236 = vsub.s32 %v5233, %v5235
      %v5237 = vrot.slane %v5093, %v5236
      %v5238 = vcombine.high %v5237, %v5237
      %v5240 = vunpack.c.l.s4 1966171168
      %v5241 = vunpack.c.0.s8 %v5240
      %v5242 = vlaneseq
      %v5243 = vshrl.u32 %v5242, 7
      %v5244 = vsub.s32 %v5241, %v5243
      %v5245 = vrot.slane %v5237, %v5244
      %v5247 = vunpack.c.l.s4 1966171168
      %v5248 = vunpack.c.0.s8 %v5247
      %v5249 = vlaneseq
      %v5250 = vshrl.u32 %v5249, 7
      %v5251 = vsub.s32 %v5248, %v5250
      %v5252 = vrot.slane %v5238, %v5251
      %v5253 = vcombine.high %v5245, %v5245
      %v5255 = vunpack.c.l.s4 1966171168
      %v5256 = vunpack.c.0.s8 %v5255
      %v5257 = vlaneseq
      %v5258 = vshrl.u32 %v5257, 7
      %v5259 = vsub.s32 %v5256, %v5258
      %v5260 = vrot.slane %v5100, %v5259
      %v5261 = vcombine.high %v5260, %v5260
      %v5263 = vunpack.c.l.s4 1966171168
      %v5264 = vunpack.c.0.s8 %v5263
      %v5265 = vlaneseq
      %v5266 = vshrl.u32 %v5265, 7
      %v5267 = vsub.s32 %v5264, %v5266
      %v5268 = vrot.slane %v5260, %v5267
      %v5270 = vunpack.c.l.s4 1966171168
      %v5271 = vunpack.c.0.s8 %v5270
      %v5272 = vlaneseq
      %v5273 = vshrl.u32 %v5272, 7
      %v5274 = vsub.s32 %v5271, %v5273
      %v5275 = vrot.slane %v5261, %v5274
      %v5276 = vcombine.high %v5268, %v5268
      %v5278 = vunpack.c.l.s4 1966171168
      %v5279 = vunpack.c.0.s8 %v5278
      %v5280 = vlaneseq
      %v5281 = vshrl.u32 %v5280, 7
      %v5282 = vsub.s32 %v5279, %v5281
      %v5283 = vrot.slane %v5107, %v5282
      %v5284 = vcombine.high %v5283, %v5283
      %v5286 = vunpack.c.l.s4 1966171168
      %v5287 = vunpack.c.0.s8 %v5286
      %v5288 = vlaneseq
      %v5289 = vshrl.u32 %v5288, 7
      %v5290 = vsub.s32 %v5287, %v5289
      %v5291 = vrot.slane %v5283, %v5290
      %v5293 = vunpack.c.l.s4 1966171168
      %v5294 = vunpack.c.0.s8 %v5293
      %v5295 = vlaneseq
      %v5296 = vshrl.u32 %v5295, 7
      %v5297 = vsub.s32 %v5294, %v5296
      %v5298 = vrot.slane %v5284, %v5297
      %v5299 = vcombine.high %v5291, %v5291
      %v5324 = vmul.f32 %v3418, %v5130
      %v5325 = vmul.f32 %v3432, %v5137
      %v5326 = vmul.f32 %v3434, %v5138
      %v5327 = vmul.f32 %v3484, %v5153
      %v5328 = vmul.f32 %v3467, %v5160
      %v5329 = vmul.f32 %v3481, %v5161
      %v5330 = vmul.f32 %v3531, %v5176
      %v5331 = vmul.f32 %v3533, %v5183
      %v5332 = vmul.f32 %v3516, %v5184
      %v5333 = vmul.f32 %v3572, %v5199
      %v5334 = vmul.f32 %v3580, %v5206
      %v5335 = vmul.f32 %v3582, %v5207
      %v5336 = vmul.f32 %v3607, %v5222
      %v5337 = vmul.f32 %v3621, %v5229
      %v5338 = vmul.f32 %v3629, %v5230
      %v5339 = vmul.f32 %v3632, %v5245
      %v5340 = vmul.f32 %v3656, %v5252
      %v5341 = vmul.f32 %v3670, %v5253
      %v5342 = vmul.f32 %v3679, %v5268
      %v5343 = vmul.f32 %v3681, %v5275
      %v5344 = vmul.f32 %v3705, %v5276
      %v5345 = vmul.f32 %v3726, %v5291
      %v5346 = vmul.f32 %v3728, %v5298
      %v5347 = vmul.f32 %v3730, %v5299
      %v5372 = vcombine.low %v5324, %v5325
      %v5374 = vunpack.c.l.s4 1966171168
      %v5375 = vunpack.c.0.s8 %v5374
      %v5376 = vlaneseq
      %v5377 = vshrl.u32 %v5376, 7
      %v5378 = vsub.s32 %v5375, %v5377
      %v5379 = vrot.slane %v5372, %v5378
      %v5381 = vunpack.c.l.s4 1966171168
      %v5382 = vunpack.c.0.s8 %v5381
      %v5383 = vlaneseq
      %v5384 = vshrl.u32 %v5383, 7
      %v5385 = vsub.s32 %v5382, %v5384
      %v5386 = vrot.slane %v5326, %v5385
      %v5387 = vcombine.low %v5379, %v5386
      %v5389 = vunpack.c.l.s4 1966171168
      %v5390 = vunpack.c.0.s8 %v5389
      %v5391 = vlaneseq
      %v5392 = vshrl.u32 %v5391, 7
      %v5393 = vsub.s32 %v5390, %v5392
      %v5394 = vrot.slane %v5387, %v5393
      %v5395 = vcombine.low %v5327, %v5328
      %v5397 = vunpack.c.l.s4 1966171168
      %v5398 = vunpack.c.0.s8 %v5397
      %v5399 = vlaneseq
      %v5400 = vshrl.u32 %v5399, 7
      %v5401 = vsub.s32 %v5398, %v5400
      %v5402 = vrot.slane %v5395, %v5401
      %v5404 = vunpack.c.l.s4 1966171168
      %v5405 = vunpack.c.0.s8 %v5404
      %v5406 = vlaneseq
      %v5407 = vshrl.u32 %v5406, 7
      %v5408 = vsub.s32 %v5405, %v5407
      %v5409 = vrot.slane %v5329, %v5408
      %v5410 = vcombine.low %v5402, %v5409
      %v5412 = vunpack.c.l.s4 1966171168
      %v5413 = vunpack.c.0.s8 %v5412
      %v5414 = vlaneseq
      %v5415 = vshrl.u32 %v5414, 7
      %v5416 = vsub.s32 %v5413, %v5415
      %v5417 = vrot.slane %v5410, %v5416
      %v5418 = vcombine.low %v5330, %v5331
      %v5420 = vunpack.c.l.s4 1966171168
      %v5421 = vunpack.c.0.s8 %v5420
      %v5422 = vlaneseq
      %v5423 = vshrl.u32 %v5422, 7
      %v5424 = vsub.s32 %v5421, %v5423
      %v5425 = vrot.slane %v5418, %v5424
      %v5427 = vunpack.c.l.s4 1966171168
      %v5428 = vunpack.c.0.s8 %v5427
      %v5429 = vlaneseq
      %v5430 = vshrl.u32 %v5429, 7
      %v5431 = vsub.s32 %v5428, %v5430
      %v5432 = vrot.slane %v5332, %v5431
      %v5433 = vcombine.low %v5425, %v5432
      %v5435 = vunpack.c.l.s4 1966171168
      %v5436 = vunpack.c.0.s8 %v5435
      %v5437 = vlaneseq
      %v5438 = vshrl.u32 %v5437, 7
      %v5439 = vsub.s32 %v5436, %v5438
      %v5440 = vrot.slane %v5433, %v5439
      %v5441 = vcombine.low %v5333, %v5334
      %v5443 = vunpack.c.l.s4 1966171168
      %v5444 = vunpack.c.0.s8 %v5443
      %v5445 = vlaneseq
      %v5446 = vshrl.u32 %v5445, 7
      %v5447 = vsub.s32 %v5444, %v5446
      %v5448 = vrot.slane %v5441, %v5447
      %v5450 = vunpack.c.l.s4 1966171168
      %v5451 = vunpack.c.0.s8 %v5450
      %v5452 = vlaneseq
      %v5453 = vshrl.u32 %v5452, 7
      %v5454 = vsub.s32 %v5451, %v5453
      %v5455 = vrot.slane %v5335, %v5454
      %v5456 = vcombine.low %v5448, %v5455
      %v5458 = vunpack.c.l.s4 1966171168
      %v5459 = vunpack.c.0.s8 %v5458
      %v5460 = vlaneseq
      %v5461 = vshrl.u32 %v5460, 7
      %v5462 = vsub.s32 %v5459, %v5461
      %v5463 = vrot.slane %v5456, %v5462
      %v5464 = vcombine.low %v5336, %v5337
      %v5466 = vunpack.c.l.s4 1966171168
      %v5467 = vunpack.c.0.s8 %v5466
      %v5468 = vlaneseq
      %v5469 = vshrl.u32 %v5468, 7
      %v5470 = vsub.s32 %v5467, %v5469
      %v5471 = vrot.slane %v5464, %v5470
      %v5473 = vunpack.c.l.s4 1966171168
      %v5474 = vunpack.c.0.s8 %v5473
      %v5475 = vlaneseq
      %v5476 = vshrl.u32 %v5475, 7
      %v5477 = vsub.s32 %v5474, %v5476
      %v5478 = vrot.slane %v5338, %v5477
      %v5479 = vcombine.low %v5471, %v5478
      %v5481 = vunpack.c.l.s4 1966171168
      %v5482 = vunpack.c.0.s8 %v5481
      %v5483 = vlaneseq
      %v5484 = vshrl.u32 %v5483, 7
      %v5485 = vsub.s32 %v5482, %v5484
      %v5486 = vrot.slane %v5479, %v5485
      %v5487 = vcombine.low %v5339, %v5340
      %v5489 = vunpack.c.l.s4 1966171168
      %v5490 = vunpack.c.0.s8 %v5489
      %v5491 = vlaneseq
      %v5492 = vshrl.u32 %v5491, 7
      %v5493 = vsub.s32 %v5490, %v5492
      %v5494 = vrot.slane %v5487, %v5493
      %v5496 = vunpack.c.l.s4 1966171168
      %v5497 = vunpack.c.0.s8 %v5496
      %v5498 = vlaneseq
      %v5499 = vshrl.u32 %v5498, 7
      %v5500 = vsub.s32 %v5497, %v5499
      %v5501 = vrot.slane %v5341, %v5500
      %v5502 = vcombine.low %v5494, %v5501
      %v5504 = vunpack.c.l.s4 1966171168
      %v5505 = vunpack.c.0.s8 %v5504
      %v5506 = vlaneseq
      %v5507 = vshrl.u32 %v5506, 7
      %v5508 = vsub.s32 %v5505, %v5507
      %v5509 = vrot.slane %v5502, %v5508
      %v5510 = vcombine.low %v5342, %v5343
      %v5512 = vunpack.c.l.s4 1966171168
      %v5513 = vunpack.c.0.s8 %v5512
      %v5514 = vlaneseq
      %v5515 = vshrl.u32 %v5514, 7
      %v5516 = vsub.s32 %v5513, %v5515
      %v5517 = vrot.slane %v5510, %v5516
      %v5519 = vunpack.c.l.s4 1966171168
      %v5520 = vunpack.c.0.s8 %v5519
      %v5521 = vlaneseq
      %v5522 = vshrl.u32 %v5521, 7
      %v5523 = vsub.s32 %v5520, %v5522
      %v5524 = vrot.slane %v5344, %v5523
      %v5525 = vcombine.low %v5517, %v5524
      %v5527 = vunpack.c.l.s4 1966171168
      %v5528 = vunpack.c.0.s8 %v5527
      %v5529 = vlaneseq
      %v5530 = vshrl.u32 %v5529, 7
      %v5531 = vsub.s32 %v5528, %v5530
      %v5532 = vrot.slane %v5525, %v5531
      %v5533 = vcombine.low %v5345, %v5346
      %v5535 = vunpack.c.l.s4 1966171168
      %v5536 = vunpack.c.0.s8 %v5535
      %v5537 = vlaneseq
      %v5538 = vshrl.u32 %v5537, 7
      %v5539 = vsub.s32 %v5536, %v5538
      %v5540 = vrot.slane %v5533, %v5539
      %v5542 = vunpack.c.l.s4 1966171168
      %v5543 = vunpack.c.0.s8 %v5542
      %v5544 = vlaneseq
      %v5545 = vshrl.u32 %v5544, 7
      %v5546 = vsub.s32 %v5543, %v5545
      %v5547 = vrot.slane %v5347, %v5546
      %v5548 = vcombine.low %v5540, %v5547
      %v5550 = vunpack.c.l.s4 1966171168
      %v5551 = vunpack.c.0.s8 %v5550
      %v5552 = vlaneseq
      %v5553 = vshrl.u32 %v5552, 7
      %v5554 = vsub.s32 %v5551, %v5553
      %v5555 = vrot.slane %v5548, %v5554
      %vm5564 = vcmask 256000
      %v5565 = vsel %vm5564, %v5394, 0.0
      %5566 = vadd.xlane.f32.xlu0 %v5565
      %v5567 = vpop.xlane.xlu0 %5566
      %v5568 = vsel %vm5564, %v5417, 0.0
      %5569 = vadd.xlane.f32.xlu0 %v5568
      %v5570 = vpop.xlane.xlu0 %5569
      %v5571 = vsel %vm5564, %v5440, 0.0
      %5572 = vadd.xlane.f32.xlu0 %v5571
      %v5573 = vpop.xlane.xlu0 %5572
      %v5574 = vsel %vm5564, %v5463, 0.0
      %5575 = vadd.xlane.f32.xlu0 %v5574
      %v5576 = vpop.xlane.xlu0 %5575
      %v5577 = vsel %vm5564, %v5486, 0.0
      %5578 = vadd.xlane.f32.xlu0 %v5577
      %v5579 = vpop.xlane.xlu0 %5578
      %v5580 = vsel %vm5564, %v5509, 0.0
      %5581 = vadd.xlane.f32.xlu0 %v5580
      %v5582 = vpop.xlane.xlu0 %5581
      %v5583 = vsel %vm5564, %v5532, 0.0
      %5584 = vadd.xlane.f32.xlu0 %v5583
      %v5585 = vpop.xlane.xlu0 %5584
      %v5586 = vsel %vm5564, %v5555, 0.0
      %5587 = vadd.xlane.f32.xlu0 %v5586
      %v5588 = vpop.xlane.xlu0 %5587
      %v5597 = vlaneseq
      %v5598 = vshrl.u32 %v5597, 7
      %v5599 = vsub.s32 %v1787, %v5598
      %v5600 = vrot.slane %v5567, %v5599
      %v5601 = vlaneseq
      %v5602 = vshrl.u32 %v5601, 7
      %v5603 = vsub.s32 %v1787, %v5602
      %v5604 = vrot.slane %v5570, %v5603
      %v5605 = vlaneseq
      %v5606 = vshrl.u32 %v5605, 7
      %v5607 = vsub.s32 %v1787, %v5606
      %v5608 = vrot.slane %v5573, %v5607
      %v5609 = vlaneseq
      %v5610 = vshrl.u32 %v5609, 7
      %v5611 = vsub.s32 %v1787, %v5610
      %v5612 = vrot.slane %v5576, %v5611
      %v5613 = vlaneseq
      %v5614 = vshrl.u32 %v5613, 7
      %v5615 = vsub.s32 %v1787, %v5614
      %v5616 = vrot.slane %v5579, %v5615
      %v5617 = vlaneseq
      %v5618 = vshrl.u32 %v5617, 7
      %v5619 = vsub.s32 %v1787, %v5618
      %v5620 = vrot.slane %v5582, %v5619
      %v5621 = vlaneseq
      %v5622 = vshrl.u32 %v5621, 7
      %v5623 = vsub.s32 %v1787, %v5622
      %v5624 = vrot.slane %v5585, %v5623
      %v5625 = vlaneseq
      %v5626 = vshrl.u32 %v5625, 7
      %v5627 = vsub.s32 %v1787, %v5626
      %v5628 = vrot.slane %v5588, %v5627
      %v5629 = vsel %vm2012, %v5604, %v5600
      %v5630 = vsel %vm2014, %v5608, %v5629
      %v5631 = vsel %vm2016, %v5612, %v5630
      %v5632 = vsel %vm2018, %v5616, %v5631
      %v5633 = vsel %vm2020, %v5620, %v5632
      %v5634 = vsel %vm2022, %v5624, %v5633
      %v5635 = vsel %vm3084, %v5628, %v5634
      %vm5637 = vcmask 23552
      %5638 = vst.msk [vmem:[%s531] sm:$0xff] %vm5637, %v5635
      %p5639 = scmp.lt.s32.totalorder %s26, 2
      %s5640 = scalar_select %p5639, %s26, 2
      %s5641 = smul.addr %s5640, 8
      %s5642 = scalar_lea.vmem %s15, %s5641
      // Predicated region
      $region81: #{tpu_custom_call.1} parent=79 // pred_check
        %p5643 = pneg %p374
      $region82: #{tpu_custom_call.1} parent=79 // pred_check_branch
        %5645 = sbr.rel (%p5643) target = $region84
      $region83: #{tpu_custom_call.1} parent=79 // pred_region
        _
      $region84: #{tpu_custom_call.1} parent=79 // pred_fallthru
        _
    $region80: #{tpu_custom_call.1} parent=5 // pred_fallthru
      _
    %p5646 = scmp.le.s32.totalorder 2, %s21
    // Predicated region
    $region85: #{tpu_custom_call.1} parent=5 // pred_check
      %p5647 = pneg %p5646
    $region86: #{tpu_custom_call.1} parent=5 // pred_check_branch
      %5649 = sbr.rel (%p5647) target = $region88
    $region87: #{tpu_custom_call.1} parent=5 // pred_region
      %s5650 = ssub.s32 %s21, 2
      // Predicated region
      $region89: #{tpu_custom_call.1} parent=87 // pred_check
        %p5651 = pneg %p380
      $region90: #{tpu_custom_call.1} parent=87 // pred_check_branch
        %5653 = sbr.rel (%p5651) target = $region92
      $region91: #{tpu_custom_call.1} parent=87 // pred_region
        %p5654 = scmp.lt.s32.totalorder %s27, 2
        %s5655 = scalar_select %p5654, %s27, 2
        %s5656 = smul.addr %s5655, 8
        %s5657 = scalar_lea.vmem %s15, %s5656
      $region92: #{tpu_custom_call.1} parent=87 // pred_fallthru
        _
    $region88: #{tpu_custom_call.1} parent=5 // pred_fallthru
      _
  $region6: #{tpu_custom_call.1} parent=0 // loop_footer
    %s25 = sadd.s32 1, %s21
  $region7: #{tpu_custom_call.1} parent=0 // loop_footer_branch
    %20 = sbr.rel target = $region3
  $region8: #{tpu_custom_call.1} parent=0 // loop_exit
    _

</llo_original>
